<compile_context>
chip_gen: v6e
topology: v6e:2x2x1
jax: 0.10.0
libtpu: 0.0.40
codegen_flags: <defaults>
</compile_context>

<pallas_src>
import functools

import jax
import jax.numpy as jnp
from jax.experimental import pallas as pl
from jax.experimental.pallas import tpu as pltpu


# ------------------------------ fused kernel -------------------------------- #

def make_fused_kernel(*, B, S, V_pad, D, H, C, filter_sizes, num_layers):
    nF = len(filter_sizes)
    T, Nb = B, S          # GRU time axis = original batch axis (batch_first=False)
    f32 = jnp.float32

    def kernel(*refs):
        it = iter(refs)
        ids_ref = next(it)                                  # (B*S, 1) int32
        emb_ref = next(it)                                  # (V_pad, D)
        conv_refs = [(next(it), next(it)) for _ in range(nF)]          # (fs,D,H),(1,H)
        gru_refs = [[(next(it), next(it), next(it), next(it))          # wih,bih,whh,bhh
                     for _ in range(2)] for _ in range(num_layers)]
        w1_ref, b1_ref, w2_ref, b2_ref = next(it), next(it), next(it), next(it)
        o_ref = next(it)                                    # (B, C)

        # ---- embedding lookup fused in-kernel as one-hot @ table (exact) ----
        ids = ids_ref[...]                                               # (B*S, 1)
        iota_v = jax.lax.broadcasted_iota(jnp.int32, (B * S, V_pad), 1)
        onehot = jnp.where(ids == iota_v, f32(1.0), f32(0.0))           # (B*S, V_pad)
        embed_all = jnp.dot(onehot, emb_ref[...],
                            preferred_element_type=f32)                 # (B*S, D)

        # ---- CNN branch: conv as per-tap matmuls batched over B*S ----
        cnn_feats = []                                   # per filter: list over b of (1,H)
        for (w_ref, b_ref), fs in zip(conv_refs, filter_sizes):
            T_out = S - fs + 1
            taps = [jnp.dot(embed_all, w_ref[i], preferred_element_type=f32)
                    for i in range(fs)]                                  # each (B*S, H)
            feats_b = []
            for b in range(B):
                acc = None
                for i in range(fs):
                    c = taps[i][b * S + i: b * S + i + T_out, :]         # (T_out, H)
                    acc = c if acc is None else acc + c
                acc = acc + b_ref[...]                                   # (1,H) bcast
                feats_b.append(jnp.tanh(jnp.max(acc, axis=0, keepdims=True)))  # (1,H)
            cnn_feats.append(feats_b)

        # ---- BiGRU (time axis = B, "batch" axis = S, faithful to the source) ----
        x_fwd_all = embed_all        # layer-0 input slab (T*Nb, D)
        x_bwd_all = None             # layer-0 has a single input slab
        fwd_outs = bwd_outs = None
        for layer in range(num_layers):
            dir_outs = []
            for direction in range(2):
                wih_ref, bih_ref, whh_ref, bhh_ref = gru_refs[layer][direction]

                # hoisted input projection per gate (b_ih folded in once)
                gx_all = []
                for g in range(3):                                   # gate order r,z,n
                    if layer == 0:
                        gx = jnp.dot(x_fwd_all, wih_ref[g],
                                     preferred_element_type=f32)
                    else:
                        w = wih_ref[g]                                # (2H, H)
                        gx = (jnp.dot(x_fwd_all, w[0:H, :],
                                      preferred_element_type=f32)
                              + jnp.dot(x_bwd_all, w[H:2 * H, :],
                                        preferred_element_type=f32))
                    gx_all.append(gx + bih_ref[g])                    # (T*Nb, H)

                whh = [whh_ref[g] for g in range(3)]
                bhh = [bhh_ref[g] for g in range(3)]

                h = jnp.zeros((Nb, H), f32)
                outs = [None] * T
                t_order = range(T) if direction == 0 else range(T - 1, -1, -1)
                for t in t_order:                                     # fully unrolled
                    sl = slice(t * Nb, (t + 1) * Nb)                  # sublane-aligned
                    gh_r = jnp.dot(h, whh[0], preferred_element_type=f32) + bhh[0]
                    gh_z = jnp.dot(h, whh[1], preferred_element_type=f32) + bhh[1]
                    gh_n = jnp.dot(h, whh[2], preferred_element_type=f32) + bhh[2]
                    r = jax.nn.sigmoid(gx_all[0][sl, :] + gh_r)
                    z = jax.nn.sigmoid(gx_all[1][sl, :] + gh_z)
                    n = jnp.tanh(gx_all[2][sl, :] + r * gh_n)
                    h = (1.0 - z) * n + z * h
                    outs[t] = h
                dir_outs.append(outs)
            fwd_outs, bwd_outs = dir_outs
            # next layer's input slabs, stacked over t (sublane-aligned concat);
            # fwd / bwd halves kept separate to avoid lane-axis concatenation.
            x_fwd_all = jnp.concatenate(fwd_outs, axis=0)             # (T*Nb, H)
            x_bwd_all = jnp.concatenate(bwd_outs, axis=0)             # (T*Nb, H)

        # ---- head: pooled tanh features -> Linear(tanh) -> Linear(tanh) ----
        w1 = w1_ref[...]            # (L, L//2), rows ordered [convs..., fwd, bwd]
        b1 = b1_ref[...]
        w2 = w2_ref[...]
        b2 = b2_ref[...]
        rows = []
        for b in range(B):
            segs = [cnn_feats[f][b] for f in range(nF)]
            segs.append(jnp.tanh(jnp.max(fwd_outs[b], axis=0, keepdims=True)))
            segs.append(jnp.tanh(jnp.max(bwd_outs[b], axis=0, keepdims=True)))
            z1 = b1
            for k, seg in enumerate(segs):                            # no lane concat:
                z1 = z1 + jnp.dot(jnp.tanh(seg),                      # w1 split row-wise
                                  w1[k * H:(k + 1) * H, :],
                                  preferred_element_type=f32)
            logits_b = jnp.dot(jnp.tanh(z1), w2, preferred_element_type=f32) + b2
            rows.append(logits_b)                                     # (1, C)
        o_ref[...] = jnp.concatenate(rows, axis=0)                    # (B, C)

    return kernel


# ------------------------------- model glue --------------------------------- #

def init_params(key, V, D, H, C, filter_sizes, num_layers):
    keys = iter(jax.random.split(key, 64))
    params = {}
    params["embedding"] = jax.random.normal(next(keys), (V, D), jnp.float32)

    convs = []
    for fs in filter_sizes:
        bound = float((fs * D) ** -0.5)
        w = jax.random.uniform(next(keys), (fs, D, H), jnp.float32, -bound, bound)
        b = jax.random.uniform(next(keys), (1, H), jnp.float32, -bound, bound)
        convs.append((w, b))
    params["convs"] = convs

    gru = []
    bound = float(H ** -0.5)
    for layer in range(num_layers):
        din = D if layer == 0 else 2 * H
        dirs = []
        for _ in range(2):
            wih = jax.random.uniform(next(keys), (3, din, H), jnp.float32, -bound, bound)
            bih = jax.random.uniform(next(keys), (3, 1, H), jnp.float32, -bound, bound)
            whh = jax.random.uniform(next(keys), (3, H, H), jnp.float32, -bound, bound)
            bhh = jax.random.uniform(next(keys), (3, 1, H), jnp.float32, -bound, bound)
            dirs.append((wih, bih, whh, bhh))
        gru.append(dirs)
    params["gru"] = gru

    L = len(filter_sizes) * H + 2 * H
    L2 = L // 2
    b1d = float(L ** -0.5)
    params["w1"] = jax.random.uniform(next(keys), (L, L2), jnp.float32, -b1d, b1d)
    params["b1"] = jax.random.uniform(next(keys), (1, L2), jnp.float32, -b1d, b1d)
    b2d = float(L2 ** -0.5)
    params["w2"] = jax.random.uniform(next(keys), (L2, C), jnp.float32, -b2d, b2d)
    params["b2"] = jax.random.uniform(next(keys), (1, C), jnp.float32, -b2d, b2d)
    return params


def forward(params, x_ids, *, filter_sizes, H, num_layers):
    B, S = x_ids.shape
    V, D = params["embedding"].shape
    C = params["w2"].shape[1]

    # Lane-dense / K-aligned one-hot gather: pad the vocab axis up to 128.
    V_pad = max(128, ((V + 7) // 8) * 8)
    emb_pad = jnp.pad(params["embedding"], ((0, V_pad - V), (0, 0)))
    ids2d = x_ids.reshape(B * S, 1).astype(jnp.int32)

    inputs = [ids2d, emb_pad]
    for (w, b) in params["convs"]:
        inputs += [w, b]
    for layer in range(num_layers):
        for d in range(2):
            inputs += list(params["gru"][layer][d])
    inputs += [params["w1"], params["b1"], params["w2"], params["b2"]]

    kernel = make_fused_kernel(B=B, S=S, V_pad=V_pad, D=D, H=H, C=C,
                               filter_sizes=filter_sizes, num_layers=num_layers)
    return pl.pallas_call(
        kernel,
        out_shape=jax.ShapeDtypeStruct((B, C), jnp.float32),
        in_specs=[pl.BlockSpec(memory_space=pltpu.MemorySpace.VMEM) for _ in inputs],
        out_specs=pl.BlockSpec(memory_space=pltpu.MemorySpace.VMEM),
    )(*inputs)


# --------------------------- pure-JAX reference ------------------------------ #

def forward_ref(params, x_ids, *, filter_sizes, H, num_layers):
    B, S = x_ids.shape
    emb = params["embedding"][x_ids]                         # (B, S, D)

    feats = []
    for (w, b), fs in zip(params["convs"], filter_sizes):
        T_out = S - fs + 1
        s = jnp.zeros((B, T_out, H), jnp.float32)
        for i in range(fs):
            s = s + jnp.einsum("btd,dh->bth", emb[:, i:i + T_out, :], w[i])
        s = s + b
        feats.append(jnp.tanh(jnp.max(s, axis=1)))           # (B, H)
    cnn_feat = jnp.concatenate(feats, axis=1)

    xs = emb                                                 # (T=B, Nb=S, D)
    for layer in range(num_layers):
        outs_dir = []
        for d in range(2):
            wih, bih, whh, bhh = params["gru"][layer][d]

            def step(h, x_t, wih=wih, bih=bih, whh=whh, bhh=bhh):
                gx = [x_t @ wih[g] + bih[g] for g in range(3)]
                gh = [h @ whh[g] + bhh[g] for g in range(3)]
                r = jax.nn.sigmoid(gx[0] + gh[0])
                z = jax.nn.sigmoid(gx[1] + gh[1])
                n = jnp.tanh(gx[2] + r * gh[2])
                h_new = (1.0 - z) * n + z * h
                return h_new, h_new

            seq = xs if d == 0 else xs[::-1]
            _, hs = jax.lax.scan(step, jnp.zeros((S, H), jnp.float32), seq)
            if d == 1:
                hs = hs[::-1]
            outs_dir.append(hs)
        xs = jnp.concatenate(outs_dir, axis=-1)              # (B, S, 2H)
    pooled = jnp.tanh(jnp.max(xs, axis=1))                   # (B, 2H)

    feat = jnp.concatenate([cnn_feat, pooled], axis=1)
    z1 = jnp.tanh(feat) @ params["w1"] + params["b1"]
    return jnp.tanh(z1) @ params["w2"] + params["b2"]


# ----------------------------------- main ------------------------------------ #

if __name__ == "__main__":
    V, D, C = 50, 16, 3
    filter_sizes = (2, 3)
    H = 8                 # filter_num / hidden_dim
    num_layers = 2
    B, S = 2, 8

    key = jax.random.PRNGKey(0)
    pkey, xkey = jax.random.split(key)
    params = init_params(pkey, V, D, H, C, filter_sizes, num_layers)
    x_ids = jax.random.randint(xkey, (B, S), 0, V, dtype=jnp.int32)

    fwd = jax.jit(functools.partial(forward, filter_sizes=filter_sizes,
                                    H=H, num_layers=num_layers))
    logits = jax.block_until_ready(fwd(params, x_ids))

    ref = jax.jit(functools.partial(forward_ref, filter_sizes=filter_sizes,
                                    H=H, num_layers=num_layers))(params, x_ids)
    ref = jax.block_until_ready(ref)

    assert logits.shape == (B, C), logits.shape
    assert bool(jnp.all(jnp.isfinite(logits)))
    err = float(jnp.max(jnp.abs(logits - ref)))
    assert err < 5e-3, f"mismatch vs pure-JAX reference: {err}"
    print("KERNEL_OK")
</pallas_src>

<mosaic_0001>
module attributes {stable_mosaic.version = 11 : i64} {
  func.func @kernel(%arg0: memref<16x1xi32, #tpu.memory_space<vmem>>, %arg1: memref<128x16xf32, #tpu.memory_space<vmem>>, %arg2: memref<2x16x8xf32, #tpu.memory_space<vmem>>, %arg3: memref<1x8xf32, #tpu.memory_space<vmem>>, %arg4: memref<3x16x8xf32, #tpu.memory_space<vmem>>, %arg5: memref<1x8xf32, #tpu.memory_space<vmem>>, %arg6: memref<3x16x8xf32, #tpu.memory_space<vmem>>, %arg7: memref<3x1x8xf32, #tpu.memory_space<vmem>>, %arg8: memref<3x8x8xf32, #tpu.memory_space<vmem>>, %arg9: memref<3x1x8xf32, #tpu.memory_space<vmem>>, %arg10: memref<3x16x8xf32, #tpu.memory_space<vmem>>, %arg11: memref<3x1x8xf32, #tpu.memory_space<vmem>>, %arg12: memref<3x8x8xf32, #tpu.memory_space<vmem>>, %arg13: memref<3x1x8xf32, #tpu.memory_space<vmem>>, %arg14: memref<3x16x8xf32, #tpu.memory_space<vmem>>, %arg15: memref<3x1x8xf32, #tpu.memory_space<vmem>>, %arg16: memref<3x8x8xf32, #tpu.memory_space<vmem>>, %arg17: memref<3x1x8xf32, #tpu.memory_space<vmem>>, %arg18: memref<3x16x8xf32, #tpu.memory_space<vmem>>, %arg19: memref<3x1x8xf32, #tpu.memory_space<vmem>>, %arg20: memref<3x8x8xf32, #tpu.memory_space<vmem>>, %arg21: memref<3x1x8xf32, #tpu.memory_space<vmem>>, %arg22: memref<32x16xf32, #tpu.memory_space<vmem>>, %arg23: memref<1x16xf32, #tpu.memory_space<vmem>>, %arg24: memref<16x3xf32, #tpu.memory_space<vmem>>, %arg25: memref<1x3xf32, #tpu.memory_space<vmem>>, %arg26: memref<2x3xf32, #tpu.memory_space<vmem>>) attributes {dimension_semantics = [], scalar_prefetch = 0 : i64, scratch_operands = 0 : i64, tpu.core_type = #tpu.core_type<tc>} {
    %c0 = arith.constant 0 : index
    %c0_0 = arith.constant 0 : index
    %0 = vector.load %arg0[%c0, %c0_0] : memref<16x1xi32, #tpu.memory_space<vmem>>, vector<16x1xi32>
    %1 = tpu.iota {dimensions = array<i32: 1>} : vector<16x128xi32>
    %2 = vector.broadcast %0 : vector<16x1xi32> to vector<16x128xi32>
    %3 = arith.cmpi eq, %2, %1 : vector<16x128xi32>
    %cst = arith.constant 1.000000e+00 : f32
    %cst_1 = arith.constant 0.000000e+00 : f32
    %4 = vector.broadcast %cst : f32 to vector<16x128xf32>
    %5 = vector.broadcast %cst_1 : f32 to vector<16x128xf32>
    %6 = arith.select %3, %4, %5 : vector<16x128xi1>, vector<16x128xf32>
    %c0_2 = arith.constant 0 : index
    %c0_3 = arith.constant 0 : index
    %7 = vector.load %arg1[%c0_2, %c0_3] : memref<128x16xf32, #tpu.memory_space<vmem>>, vector<128x16xf32>
    %cst_4 = arith.constant dense<0.000000e+00> : vector<16x16xf32>
    %8 = tpu.matmul %6, %7, %cst_4 {dimension_numbers = #tpu.dot_dimension_numbers<[1], [0], [0], [1], [0, 0, 1, 1], [], []>} : vector<16x128xf32>, vector<128x16xf32>, vector<16x16xf32> -> vector<16x16xf32>
    %c0_5 = arith.constant 0 : index
    %c0_6 = arith.constant 0 : index
    %c0_7 = arith.constant 0 : index
    %9 = vector.load %arg2[%c0_5, %c0_6, %c0_7] : memref<2x16x8xf32, #tpu.memory_space<vmem>>, vector<1x16x8xf32>
    %10 = vector.shape_cast %9 : vector<1x16x8xf32> to vector<16x8xf32>
    %cst_8 = arith.constant dense<0.000000e+00> : vector<16x8xf32>
    %11 = tpu.matmul %8, %10, %cst_8 {dimension_numbers = #tpu.dot_dimension_numbers<[1], [0], [0], [1], [0, 0, 1, 1], [], []>} : vector<16x16xf32>, vector<16x8xf32>, vector<16x8xf32> -> vector<16x8xf32>
    %c1 = arith.constant 1 : index
    %c0_9 = arith.constant 0 : index
    %c0_10 = arith.constant 0 : index
    %12 = vector.load %arg2[%c1, %c0_9, %c0_10] : memref<2x16x8xf32, #tpu.memory_space<vmem>>, vector<1x16x8xf32>
    %13 = vector.shape_cast %12 : vector<1x16x8xf32> to vector<16x8xf32>
    %cst_11 = arith.constant dense<0.000000e+00> : vector<16x8xf32>
    %14 = tpu.matmul %8, %13, %cst_11 {dimension_numbers = #tpu.dot_dimension_numbers<[1], [0], [0], [1], [0, 0, 1, 1], [], []>} : vector<16x16xf32>, vector<16x8xf32>, vector<16x8xf32> -> vector<16x8xf32>
    %15 = vector.extract_strided_slice %11 {offsets = [0, 0], sizes = [7, 8], strides = [1, 1]} : vector<16x8xf32> to vector<7x8xf32>
    %16 = vector.extract_strided_slice %14 {offsets = [1, 0], sizes = [7, 8], strides = [1, 1]} : vector<16x8xf32> to vector<7x8xf32>
    %17 = arith.addf %15, %16 : vector<7x8xf32>
    %c0_12 = arith.constant 0 : index
    %c0_13 = arith.constant 0 : index
    %18 = vector.load %arg3[%c0_12, %c0_13] : memref<1x8xf32, #tpu.memory_space<vmem>>, vector<1x8xf32>
    %19 = vector.broadcast %18 : vector<1x8xf32> to vector<7x8xf32>
    %20 = arith.addf %17, %19 : vector<7x8xf32>
    %cst_14 = arith.constant dense<0xFF800000> : vector<8xf32>
    %21 = vector.multi_reduction <maximumf>, %20, %cst_14 [0] : vector<7x8xf32> to vector<8xf32>
    %22 = vector.shape_cast %21 : vector<8xf32> to vector<1x8xf32>
    %23 = math.tanh %22 : vector<1x8xf32>
    %24 = vector.extract_strided_slice %11 {offsets = [8, 0], sizes = [7, 8], strides = [1, 1]} : vector<16x8xf32> to vector<7x8xf32>
    %25 = vector.extract_strided_slice %14 {offsets = [9, 0], sizes = [7, 8], strides = [1, 1]} : vector<16x8xf32> to vector<7x8xf32>
    %26 = arith.addf %24, %25 : vector<7x8xf32>
    %c0_15 = arith.constant 0 : index
    %c0_16 = arith.constant 0 : index
    %27 = vector.load %arg3[%c0_15, %c0_16] : memref<1x8xf32, #tpu.memory_space<vmem>>, vector<1x8xf32>
    %28 = vector.broadcast %27 : vector<1x8xf32> to vector<7x8xf32>
    %29 = arith.addf %26, %28 : vector<7x8xf32>
    %cst_17 = arith.constant dense<0xFF800000> : vector<8xf32>
    %30 = vector.multi_reduction <maximumf>, %29, %cst_17 [0] : vector<7x8xf32> to vector<8xf32>
    %31 = vector.shape_cast %30 : vector<8xf32> to vector<1x8xf32>
    %32 = math.tanh %31 : vector<1x8xf32>
    %c0_18 = arith.constant 0 : index
    %c0_19 = arith.constant 0 : index
    %c0_20 = arith.constant 0 : index
    %33 = vector.load %arg4[%c0_18, %c0_19, %c0_20] : memref<3x16x8xf32, #tpu.memory_space<vmem>>, vector<1x16x8xf32>
    %34 = vector.shape_cast %33 : vector<1x16x8xf32> to vector<16x8xf32>
    %cst_21 = arith.constant dense<0.000000e+00> : vector<16x8xf32>
    %35 = tpu.matmul %8, %34, %cst_21 {dimension_numbers = #tpu.dot_dimension_numbers<[1], [0], [0], [1], [0, 0, 1, 1], [], []>} : vector<16x16xf32>, vector<16x8xf32>, vector<16x8xf32> -> vector<16x8xf32>
    %c1_22 = arith.constant 1 : index
    %c0_23 = arith.constant 0 : index
    %c0_24 = arith.constant 0 : index
    %36 = vector.load %arg4[%c1_22, %c0_23, %c0_24] : memref<3x16x8xf32, #tpu.memory_space<vmem>>, vector<1x16x8xf32>
    %37 = vector.shape_cast %36 : vector<1x16x8xf32> to vector<16x8xf32>
    %cst_25 = arith.constant dense<0.000000e+00> : vector<16x8xf32>
    %38 = tpu.matmul %8, %37, %cst_25 {dimension_numbers = #tpu.dot_dimension_numbers<[1], [0], [0], [1], [0, 0, 1, 1], [], []>} : vector<16x16xf32>, vector<16x8xf32>, vector<16x8xf32> -> vector<16x8xf32>
    %c2 = arith.constant 2 : index
    %c0_26 = arith.constant 0 : index
    %c0_27 = arith.constant 0 : index
    %39 = vector.load %arg4[%c2, %c0_26, %c0_27] : memref<3x16x8xf32, #tpu.memory_space<vmem>>, vector<1x16x8xf32>
    %40 = vector.shape_cast %39 : vector<1x16x8xf32> to vector<16x8xf32>
    %cst_28 = arith.constant dense<0.000000e+00> : vector<16x8xf32>
    %41 = tpu.matmul %8, %40, %cst_28 {dimension_numbers = #tpu.dot_dimension_numbers<[1], [0], [0], [1], [0, 0, 1, 1], [], []>} : vector<16x16xf32>, vector<16x8xf32>, vector<16x8xf32> -> vector<16x8xf32>
    %42 = vector.extract_strided_slice %35 {offsets = [0, 0], sizes = [6, 8], strides = [1, 1]} : vector<16x8xf32> to vector<6x8xf32>
    %43 = vector.extract_strided_slice %38 {offsets = [1, 0], sizes = [6, 8], strides = [1, 1]} : vector<16x8xf32> to vector<6x8xf32>
    %44 = arith.addf %42, %43 : vector<6x8xf32>
    %45 = vector.extract_strided_slice %41 {offsets = [2, 0], sizes = [6, 8], strides = [1, 1]} : vector<16x8xf32> to vector<6x8xf32>
    %46 = arith.addf %44, %45 : vector<6x8xf32>
    %c0_29 = arith.constant 0 : index
    %c0_30 = arith.constant 0 : index
    %47 = vector.load %arg5[%c0_29, %c0_30] : memref<1x8xf32, #tpu.memory_space<vmem>>, vector<1x8xf32>
    %48 = vector.broadcast %47 : vector<1x8xf32> to vector<6x8xf32>
    %49 = arith.addf %46, %48 : vector<6x8xf32>
    %cst_31 = arith.constant dense<0xFF800000> : vector<8xf32>
    %50 = vector.multi_reduction <maximumf>, %49, %cst_31 [0] : vector<6x8xf32> to vector<8xf32>
    %51 = vector.shape_cast %50 : vector<8xf32> to vector<1x8xf32>
    %52 = math.tanh %51 : vector<1x8xf32>
    %53 = vector.extract_strided_slice %35 {offsets = [8, 0], sizes = [6, 8], strides = [1, 1]} : vector<16x8xf32> to vector<6x8xf32>
    %54 = vector.extract_strided_slice %38 {offsets = [9, 0], sizes = [6, 8], strides = [1, 1]} : vector<16x8xf32> to vector<6x8xf32>
    %55 = arith.addf %53, %54 : vector<6x8xf32>
    %56 = vector.extract_strided_slice %41 {offsets = [10, 0], sizes = [6, 8], strides = [1, 1]} : vector<16x8xf32> to vector<6x8xf32>
    %57 = arith.addf %55, %56 : vector<6x8xf32>
    %c0_32 = arith.constant 0 : index
    %c0_33 = arith.constant 0 : index
    %58 = vector.load %arg5[%c0_32, %c0_33] : memref<1x8xf32, #tpu.memory_space<vmem>>, vector<1x8xf32>
    %59 = vector.broadcast %58 : vector<1x8xf32> to vector<6x8xf32>
    %60 = arith.addf %57, %59 : vector<6x8xf32>
    %cst_34 = arith.constant dense<0xFF800000> : vector<8xf32>
    %61 = vector.multi_reduction <maximumf>, %60, %cst_34 [0] : vector<6x8xf32> to vector<8xf32>
    %62 = vector.shape_cast %61 : vector<8xf32> to vector<1x8xf32>
    %63 = math.tanh %62 : vector<1x8xf32>
    %c0_35 = arith.constant 0 : index
    %c0_36 = arith.constant 0 : index
    %c0_37 = arith.constant 0 : index
    %64 = vector.load %arg6[%c0_35, %c0_36, %c0_37] : memref<3x16x8xf32, #tpu.memory_space<vmem>>, vector<1x16x8xf32>
    %65 = vector.shape_cast %64 : vector<1x16x8xf32> to vector<16x8xf32>
    %cst_38 = arith.constant dense<0.000000e+00> : vector<16x8xf32>
    %66 = tpu.matmul %8, %65, %cst_38 {dimension_numbers = #tpu.dot_dimension_numbers<[1], [0], [0], [1], [0, 0, 1, 1], [], []>} : vector<16x16xf32>, vector<16x8xf32>, vector<16x8xf32> -> vector<16x8xf32>
    %c0_39 = arith.constant 0 : index
    %c0_40 = arith.constant 0 : index
    %c0_41 = arith.constant 0 : index
    %67 = vector.load %arg7[%c0_39, %c0_40, %c0_41] : memref<3x1x8xf32, #tpu.memory_space<vmem>>, vector<1x1x8xf32>
    %68 = vector.shape_cast %67 : vector<1x1x8xf32> to vector<1x8xf32>
    %69 = vector.broadcast %68 : vector<1x8xf32> to vector<16x8xf32>
    %70 = arith.addf %66, %69 : vector<16x8xf32>
    %c1_42 = arith.constant 1 : index
    %c0_43 = arith.constant 0 : index
    %c0_44 = arith.constant 0 : index
    %71 = vector.load %arg6[%c1_42, %c0_43, %c0_44] : memref<3x16x8xf32, #tpu.memory_space<vmem>>, vector<1x16x8xf32>
    %72 = vector.shape_cast %71 : vector<1x16x8xf32> to vector<16x8xf32>
    %cst_45 = arith.constant dense<0.000000e+00> : vector<16x8xf32>
    %73 = tpu.matmul %8, %72, %cst_45 {dimension_numbers = #tpu.dot_dimension_numbers<[1], [0], [0], [1], [0, 0, 1, 1], [], []>} : vector<16x16xf32>, vector<16x8xf32>, vector<16x8xf32> -> vector<16x8xf32>
    %c1_46 = arith.constant 1 : index
    %c0_47 = arith.constant 0 : index
    %c0_48 = arith.constant 0 : index
    %74 = vector.load %arg7[%c1_46, %c0_47, %c0_48] : memref<3x1x8xf32, #tpu.memory_space<vmem>>, vector<1x1x8xf32>
    %75 = vector.shape_cast %74 : vector<1x1x8xf32> to vector<1x8xf32>
    %76 = vector.broadcast %75 : vector<1x8xf32> to vector<16x8xf32>
    %77 = arith.addf %73, %76 : vector<16x8xf32>
    %c2_49 = arith.constant 2 : index
    %c0_50 = arith.constant 0 : index
    %c0_51 = arith.constant 0 : index
    %78 = vector.load %arg6[%c2_49, %c0_50, %c0_51] : memref<3x16x8xf32, #tpu.memory_space<vmem>>, vector<1x16x8xf32>
    %79 = vector.shape_cast %78 : vector<1x16x8xf32> to vector<16x8xf32>
    %cst_52 = arith.constant dense<0.000000e+00> : vector<16x8xf32>
    %80 = tpu.matmul %8, %79, %cst_52 {dimension_numbers = #tpu.dot_dimension_numbers<[1], [0], [0], [1], [0, 0, 1, 1], [], []>} : vector<16x16xf32>, vector<16x8xf32>, vector<16x8xf32> -> vector<16x8xf32>
    %c2_53 = arith.constant 2 : index
    %c0_54 = arith.constant 0 : index
    %c0_55 = arith.constant 0 : index
    %81 = vector.load %arg7[%c2_53, %c0_54, %c0_55] : memref<3x1x8xf32, #tpu.memory_space<vmem>>, vector<1x1x8xf32>
    %82 = vector.shape_cast %81 : vector<1x1x8xf32> to vector<1x8xf32>
    %83 = vector.broadcast %82 : vector<1x8xf32> to vector<16x8xf32>
    %84 = arith.addf %80, %83 : vector<16x8xf32>
    %c0_56 = arith.constant 0 : index
    %c0_57 = arith.constant 0 : index
    %c0_58 = arith.constant 0 : index
    %85 = vector.load %arg8[%c0_56, %c0_57, %c0_58] : memref<3x8x8xf32, #tpu.memory_space<vmem>>, vector<1x8x8xf32>
    %86 = vector.shape_cast %85 : vector<1x8x8xf32> to vector<8x8xf32>
    %c1_59 = arith.constant 1 : index
    %c0_60 = arith.constant 0 : index
    %c0_61 = arith.constant 0 : index
    %87 = vector.load %arg8[%c1_59, %c0_60, %c0_61] : memref<3x8x8xf32, #tpu.memory_space<vmem>>, vector<1x8x8xf32>
    %88 = vector.shape_cast %87 : vector<1x8x8xf32> to vector<8x8xf32>
    %c2_62 = arith.constant 2 : index
    %c0_63 = arith.constant 0 : index
    %c0_64 = arith.constant 0 : index
    %89 = vector.load %arg8[%c2_62, %c0_63, %c0_64] : memref<3x8x8xf32, #tpu.memory_space<vmem>>, vector<1x8x8xf32>
    %90 = vector.shape_cast %89 : vector<1x8x8xf32> to vector<8x8xf32>
    %c0_65 = arith.constant 0 : index
    %c0_66 = arith.constant 0 : index
    %c0_67 = arith.constant 0 : index
    %91 = vector.load %arg9[%c0_65, %c0_66, %c0_67] : memref<3x1x8xf32, #tpu.memory_space<vmem>>, vector<1x1x8xf32>
    %92 = vector.shape_cast %91 : vector<1x1x8xf32> to vector<1x8xf32>
    %c1_68 = arith.constant 1 : index
    %c0_69 = arith.constant 0 : index
    %c0_70 = arith.constant 0 : index
    %93 = vector.load %arg9[%c1_68, %c0_69, %c0_70] : memref<3x1x8xf32, #tpu.memory_space<vmem>>, vector<1x1x8xf32>
    %94 = vector.shape_cast %93 : vector<1x1x8xf32> to vector<1x8xf32>
    %c2_71 = arith.constant 2 : index
    %c0_72 = arith.constant 0 : index
    %c0_73 = arith.constant 0 : index
    %95 = vector.load %arg9[%c2_71, %c0_72, %c0_73] : memref<3x1x8xf32, #tpu.memory_space<vmem>>, vector<1x1x8xf32>
    %96 = vector.shape_cast %95 : vector<1x1x8xf32> to vector<1x8xf32>
    %cst_74 = arith.constant 0.000000e+00 : f32
    %97 = vector.broadcast %cst_74 : f32 to vector<8x8xf32>
    %cst_75 = arith.constant dense<0.000000e+00> : vector<8x8xf32>
    %98 = tpu.matmul %97, %86, %cst_75 {dimension_numbers = #tpu.dot_dimension_numbers<[1], [0], [0], [1], [0, 0, 1, 1], [], []>} : vector<8x8xf32>, vector<8x8xf32>, vector<8x8xf32> -> vector<8x8xf32>
    %99 = vector.broadcast %92 : vector<1x8xf32> to vector<8x8xf32>
    %100 = arith.addf %98, %99 : vector<8x8xf32>
    %cst_76 = arith.constant dense<0.000000e+00> : vector<8x8xf32>
    %101 = tpu.matmul %97, %88, %cst_76 {dimension_numbers = #tpu.dot_dimension_numbers<[1], [0], [0], [1], [0, 0, 1, 1], [], []>} : vector<8x8xf32>, vector<8x8xf32>, vector<8x8xf32> -> vector<8x8xf32>
    %102 = vector.broadcast %94 : vector<1x8xf32> to vector<8x8xf32>
    %103 = arith.addf %101, %102 : vector<8x8xf32>
    %cst_77 = arith.constant dense<0.000000e+00> : vector<8x8xf32>
    %104 = tpu.matmul %97, %90, %cst_77 {dimension_numbers = #tpu.dot_dimension_numbers<[1], [0], [0], [1], [0, 0, 1, 1], [], []>} : vector<8x8xf32>, vector<8x8xf32>, vector<8x8xf32> -> vector<8x8xf32>
    %105 = vector.broadcast %96 : vector<1x8xf32> to vector<8x8xf32>
    %106 = arith.addf %104, %105 : vector<8x8xf32>
    %107 = vector.extract_strided_slice %70 {offsets = [0, 0], sizes = [8, 8], strides = [1, 1]} : vector<16x8xf32> to vector<8x8xf32>
    %108 = arith.addf %107, %100 : vector<8x8xf32>
    %109 = arith.negf %108 : vector<8x8xf32>
    %110 = math.exp %109 : vector<8x8xf32>
    %cst_78 = arith.constant 1.000000e+00 : f32
    %111 = vector.broadcast %cst_78 : f32 to vector<8x8xf32>
    %112 = arith.addf %111, %110 : vector<8x8xf32>
    %113 = arith.divf %111, %112 : vector<8x8xf32>
    %114 = vector.extract_strided_slice %77 {offsets = [0, 0], sizes = [8, 8], strides = [1, 1]} : vector<16x8xf32> to vector<8x8xf32>
    %115 = arith.addf %114, %103 : vector<8x8xf32>
    %116 = arith.negf %115 : vector<8x8xf32>
    %117 = math.exp %116 : vector<8x8xf32>
    %cst_79 = arith.constant 1.000000e+00 : f32
    %118 = vector.broadcast %cst_79 : f32 to vector<8x8xf32>
    %119 = arith.addf %118, %117 : vector<8x8xf32>
    %120 = arith.divf %118, %119 : vector<8x8xf32>
    %121 = vector.extract_strided_slice %84 {offsets = [0, 0], sizes = [8, 8], strides = [1, 1]} : vector<16x8xf32> to vector<8x8xf32>
    %122 = arith.mulf %113, %106 : vector<8x8xf32>
    %123 = arith.addf %121, %122 : vector<8x8xf32>
    %124 = math.tanh %123 : vector<8x8xf32>
    %cst_80 = arith.constant 1.000000e+00 : f32
    %125 = vector.broadcast %cst_80 : f32 to vector<8x8xf32>
    %126 = arith.subf %125, %120 : vector<8x8xf32>
    %127 = arith.mulf %126, %124 : vector<8x8xf32>
    %128 = arith.mulf %120, %97 : vector<8x8xf32>
    %129 = arith.addf %127, %128 : vector<8x8xf32>
    %cst_81 = arith.constant dense<0.000000e+00> : vector<8x8xf32>
    %130 = tpu.matmul %129, %86, %cst_81 {dimension_numbers = #tpu.dot_dimension_numbers<[1], [0], [0], [1], [0, 0, 1, 1], [], []>} : vector<8x8xf32>, vector<8x8xf32>, vector<8x8xf32> -> vector<8x8xf32>
    %131 = vector.broadcast %92 : vector<1x8xf32> to vector<8x8xf32>
    %132 = arith.addf %130, %131 : vector<8x8xf32>
    %cst_82 = arith.constant dense<0.000000e+00> : vector<8x8xf32>
    %133 = tpu.matmul %129, %88, %cst_82 {dimension_numbers = #tpu.dot_dimension_numbers<[1], [0], [0], [1], [0, 0, 1, 1], [], []>} : vector<8x8xf32>, vector<8x8xf32>, vector<8x8xf32> -> vector<8x8xf32>
    %134 = vector.broadcast %94 : vector<1x8xf32> to vector<8x8xf32>
    %135 = arith.addf %133, %134 : vector<8x8xf32>
    %cst_83 = arith.constant dense<0.000000e+00> : vector<8x8xf32>
    %136 = tpu.matmul %129, %90, %cst_83 {dimension_numbers = #tpu.dot_dimension_numbers<[1], [0], [0], [1], [0, 0, 1, 1], [], []>} : vector<8x8xf32>, vector<8x8xf32>, vector<8x8xf32> -> vector<8x8xf32>
    %137 = vector.broadcast %96 : vector<1x8xf32> to vector<8x8xf32>
    %138 = arith.addf %136, %137 : vector<8x8xf32>
    %139 = vector.extract_strided_slice %70 {offsets = [8, 0], sizes = [8, 8], strides = [1, 1]} : vector<16x8xf32> to vector<8x8xf32>
    %140 = arith.addf %139, %132 : vector<8x8xf32>
    %141 = arith.negf %140 : vector<8x8xf32>
    %142 = math.exp %141 : vector<8x8xf32>
    %cst_84 = arith.constant 1.000000e+00 : f32
    %143 = vector.broadcast %cst_84 : f32 to vector<8x8xf32>
    %144 = arith.addf %143, %142 : vector<8x8xf32>
    %145 = arith.divf %143, %144 : vector<8x8xf32>
    %146 = vector.extract_strided_slice %77 {offsets = [8, 0], sizes = [8, 8], strides = [1, 1]} : vector<16x8xf32> to vector<8x8xf32>
    %147 = arith.addf %146, %135 : vector<8x8xf32>
    %148 = arith.negf %147 : vector<8x8xf32>
    %149 = math.exp %148 : vector<8x8xf32>
    %cst_85 = arith.constant 1.000000e+00 : f32
    %150 = vector.broadcast %cst_85 : f32 to vector<8x8xf32>
    %151 = arith.addf %150, %149 : vector<8x8xf32>
    %152 = arith.divf %150, %151 : vector<8x8xf32>
    %153 = vector.extract_strided_slice %84 {offsets = [8, 0], sizes = [8, 8], strides = [1, 1]} : vector<16x8xf32> to vector<8x8xf32>
    %154 = arith.mulf %145, %138 : vector<8x8xf32>
    %155 = arith.addf %153, %154 : vector<8x8xf32>
    %156 = math.tanh %155 : vector<8x8xf32>
    %cst_86 = arith.constant 1.000000e+00 : f32
    %157 = vector.broadcast %cst_86 : f32 to vector<8x8xf32>
    %158 = arith.subf %157, %152 : vector<8x8xf32>
    %159 = arith.mulf %158, %156 : vector<8x8xf32>
    %160 = arith.mulf %152, %129 : vector<8x8xf32>
    %161 = arith.addf %159, %160 : vector<8x8xf32>
    %c0_87 = arith.constant 0 : index
    %c0_88 = arith.constant 0 : index
    %c0_89 = arith.constant 0 : index
    %162 = vector.load %arg10[%c0_87, %c0_88, %c0_89] : memref<3x16x8xf32, #tpu.memory_space<vmem>>, vector<1x16x8xf32>
    %163 = vector.shape_cast %162 : vector<1x16x8xf32> to vector<16x8xf32>
    %cst_90 = arith.constant dense<0.000000e+00> : vector<16x8xf32>
    %164 = tpu.matmul %8, %163, %cst_90 {dimension_numbers = #tpu.dot_dimension_numbers<[1], [0], [0], [1], [0, 0, 1, 1], [], []>} : vector<16x16xf32>, vector<16x8xf32>, vector<16x8xf32> -> vector<16x8xf32>
    %c0_91 = arith.constant 0 : index
    %c0_92 = arith.constant 0 : index
    %c0_93 = arith.constant 0 : index
    %165 = vector.load %arg11[%c0_91, %c0_92, %c0_93] : memref<3x1x8xf32, #tpu.memory_space<vmem>>, vector<1x1x8xf32>
    %166 = vector.shape_cast %165 : vector<1x1x8xf32> to vector<1x8xf32>
    %167 = vector.broadcast %166 : vector<1x8xf32> to vector<16x8xf32>
    %168 = arith.addf %164, %167 : vector<16x8xf32>
    %c1_94 = arith.constant 1 : index
    %c0_95 = arith.constant 0 : index
    %c0_96 = arith.constant 0 : index
    %169 = vector.load %arg10[%c1_94, %c0_95, %c0_96] : memref<3x16x8xf32, #tpu.memory_space<vmem>>, vector<1x16x8xf32>
    %170 = vector.shape_cast %169 : vector<1x16x8xf32> to vector<16x8xf32>
    %cst_97 = arith.constant dense<0.000000e+00> : vector<16x8xf32>
    %171 = tpu.matmul %8, %170, %cst_97 {dimension_numbers = #tpu.dot_dimension_numbers<[1], [0], [0], [1], [0, 0, 1, 1], [], []>} : vector<16x16xf32>, vector<16x8xf32>, vector<16x8xf32> -> vector<16x8xf32>
    %c1_98 = arith.constant 1 : index
    %c0_99 = arith.constant 0 : index
    %c0_100 = arith.constant 0 : index
    %172 = vector.load %arg11[%c1_98, %c0_99, %c0_100] : memref<3x1x8xf32, #tpu.memory_space<vmem>>, vector<1x1x8xf32>
    %173 = vector.shape_cast %172 : vector<1x1x8xf32> to vector<1x8xf32>
    %174 = vector.broadcast %173 : vector<1x8xf32> to vector<16x8xf32>
    %175 = arith.addf %171, %174 : vector<16x8xf32>
    %c2_101 = arith.constant 2 : index
    %c0_102 = arith.constant 0 : index
    %c0_103 = arith.constant 0 : index
    %176 = vector.load %arg10[%c2_101, %c0_102, %c0_103] : memref<3x16x8xf32, #tpu.memory_space<vmem>>, vector<1x16x8xf32>
    %177 = vector.shape_cast %176 : vector<1x16x8xf32> to vector<16x8xf32>
    %cst_104 = arith.constant dense<0.000000e+00> : vector<16x8xf32>
    %178 = tpu.matmul %8, %177, %cst_104 {dimension_numbers = #tpu.dot_dimension_numbers<[1], [0], [0], [1], [0, 0, 1, 1], [], []>} : vector<16x16xf32>, vector<16x8xf32>, vector<16x8xf32> -> vector<16x8xf32>
    %c2_105 = arith.constant 2 : index
    %c0_106 = arith.constant 0 : index
    %c0_107 = arith.constant 0 : index
    %179 = vector.load %arg11[%c2_105, %c0_106, %c0_107] : memref<3x1x8xf32, #tpu.memory_space<vmem>>, vector<1x1x8xf32>
    %180 = vector.shape_cast %179 : vector<1x1x8xf32> to vector<1x8xf32>
    %181 = vector.broadcast %180 : vector<1x8xf32> to vector<16x8xf32>
    %182 = arith.addf %178, %181 : vector<16x8xf32>
    %c0_108 = arith.constant 0 : index
    %c0_109 = arith.constant 0 : index
    %c0_110 = arith.constant 0 : index
    %183 = vector.load %arg12[%c0_108, %c0_109, %c0_110] : memref<3x8x8xf32, #tpu.memory_space<vmem>>, vector<1x8x8xf32>
    %184 = vector.shape_cast %183 : vector<1x8x8xf32> to vector<8x8xf32>
    %c1_111 = arith.constant 1 : index
    %c0_112 = arith.constant 0 : index
    %c0_113 = arith.constant 0 : index
    %185 = vector.load %arg12[%c1_111, %c0_112, %c0_113] : memref<3x8x8xf32, #tpu.memory_space<vmem>>, vector<1x8x8xf32>
    %186 = vector.shape_cast %185 : vector<1x8x8xf32> to vector<8x8xf32>
    %c2_114 = arith.constant 2 : index
    %c0_115 = arith.constant 0 : index
    %c0_116 = arith.constant 0 : index
    %187 = vector.load %arg12[%c2_114, %c0_115, %c0_116] : memref<3x8x8xf32, #tpu.memory_space<vmem>>, vector<1x8x8xf32>
    %188 = vector.shape_cast %187 : vector<1x8x8xf32> to vector<8x8xf32>
    %c0_117 = arith.constant 0 : index
    %c0_118 = arith.constant 0 : index
    %c0_119 = arith.constant 0 : index
    %189 = vector.load %arg13[%c0_117, %c0_118, %c0_119] : memref<3x1x8xf32, #tpu.memory_space<vmem>>, vector<1x1x8xf32>
    %190 = vector.shape_cast %189 : vector<1x1x8xf32> to vector<1x8xf32>
    %c1_120 = arith.constant 1 : index
    %c0_121 = arith.constant 0 : index
    %c0_122 = arith.constant 0 : index
    %191 = vector.load %arg13[%c1_120, %c0_121, %c0_122] : memref<3x1x8xf32, #tpu.memory_space<vmem>>, vector<1x1x8xf32>
    %192 = vector.shape_cast %191 : vector<1x1x8xf32> to vector<1x8xf32>
    %c2_123 = arith.constant 2 : index
    %c0_124 = arith.constant 0 : index
    %c0_125 = arith.constant 0 : index
    %193 = vector.load %arg13[%c2_123, %c0_124, %c0_125] : memref<3x1x8xf32, #tpu.memory_space<vmem>>, vector<1x1x8xf32>
    %194 = vector.shape_cast %193 : vector<1x1x8xf32> to vector<1x8xf32>
    %cst_126 = arith.constant 0.000000e+00 : f32
    %195 = vector.broadcast %cst_126 : f32 to vector<8x8xf32>
    %cst_127 = arith.constant dense<0.000000e+00> : vector<8x8xf32>
    %196 = tpu.matmul %195, %184, %cst_127 {dimension_numbers = #tpu.dot_dimension_numbers<[1], [0], [0], [1], [0, 0, 1, 1], [], []>} : vector<8x8xf32>, vector<8x8xf32>, vector<8x8xf32> -> vector<8x8xf32>
    %197 = vector.broadcast %190 : vector<1x8xf32> to vector<8x8xf32>
    %198 = arith.addf %196, %197 : vector<8x8xf32>
    %cst_128 = arith.constant dense<0.000000e+00> : vector<8x8xf32>
    %199 = tpu.matmul %195, %186, %cst_128 {dimension_numbers = #tpu.dot_dimension_numbers<[1], [0], [0], [1], [0, 0, 1, 1], [], []>} : vector<8x8xf32>, vector<8x8xf32>, vector<8x8xf32> -> vector<8x8xf32>
    %200 = vector.broadcast %192 : vector<1x8xf32> to vector<8x8xf32>
    %201 = arith.addf %199, %200 : vector<8x8xf32>
    %cst_129 = arith.constant dense<0.000000e+00> : vector<8x8xf32>
    %202 = tpu.matmul %195, %188, %cst_129 {dimension_numbers = #tpu.dot_dimension_numbers<[1], [0], [0], [1], [0, 0, 1, 1], [], []>} : vector<8x8xf32>, vector<8x8xf32>, vector<8x8xf32> -> vector<8x8xf32>
    %203 = vector.broadcast %194 : vector<1x8xf32> to vector<8x8xf32>
    %204 = arith.addf %202, %203 : vector<8x8xf32>
    %205 = vector.extract_strided_slice %168 {offsets = [8, 0], sizes = [8, 8], strides = [1, 1]} : vector<16x8xf32> to vector<8x8xf32>
    %206 = arith.addf %205, %198 : vector<8x8xf32>
    %207 = arith.negf %206 : vector<8x8xf32>
    %208 = math.exp %207 : vector<8x8xf32>
    %cst_130 = arith.constant 1.000000e+00 : f32
    %209 = vector.broadcast %cst_130 : f32 to vector<8x8xf32>
    %210 = arith.addf %209, %208 : vector<8x8xf32>
    %211 = arith.divf %209, %210 : vector<8x8xf32>
    %212 = vector.extract_strided_slice %175 {offsets = [8, 0], sizes = [8, 8], strides = [1, 1]} : vector<16x8xf32> to vector<8x8xf32>
    %213 = arith.addf %212, %201 : vector<8x8xf32>
    %214 = arith.negf %213 : vector<8x8xf32>
    %215 = math.exp %214 : vector<8x8xf32>
    %cst_131 = arith.constant 1.000000e+00 : f32
    %216 = vector.broadcast %cst_131 : f32 to vector<8x8xf32>
    %217 = arith.addf %216, %215 : vector<8x8xf32>
    %218 = arith.divf %216, %217 : vector<8x8xf32>
    %219 = vector.extract_strided_slice %182 {offsets = [8, 0], sizes = [8, 8], strides = [1, 1]} : vector<16x8xf32> to vector<8x8xf32>
    %220 = arith.mulf %211, %204 : vector<8x8xf32>
    %221 = arith.addf %219, %220 : vector<8x8xf32>
    %222 = math.tanh %221 : vector<8x8xf32>
    %cst_132 = arith.constant 1.000000e+00 : f32
    %223 = vector.broadcast %cst_132 : f32 to vector<8x8xf32>
    %224 = arith.subf %223, %218 : vector<8x8xf32>
    %225 = arith.mulf %224, %222 : vector<8x8xf32>
    %226 = arith.mulf %218, %195 : vector<8x8xf32>
    %227 = arith.addf %225, %226 : vector<8x8xf32>
    %cst_133 = arith.constant dense<0.000000e+00> : vector<8x8xf32>
    %228 = tpu.matmul %227, %184, %cst_133 {dimension_numbers = #tpu.dot_dimension_numbers<[1], [0], [0], [1], [0, 0, 1, 1], [], []>} : vector<8x8xf32>, vector<8x8xf32>, vector<8x8xf32> -> vector<8x8xf32>
    %229 = vector.broadcast %190 : vector<1x8xf32> to vector<8x8xf32>
    %230 = arith.addf %228, %229 : vector<8x8xf32>
    %cst_134 = arith.constant dense<0.000000e+00> : vector<8x8xf32>
    %231 = tpu.matmul %227, %186, %cst_134 {dimension_numbers = #tpu.dot_dimension_numbers<[1], [0], [0], [1], [0, 0, 1, 1], [], []>} : vector<8x8xf32>, vector<8x8xf32>, vector<8x8xf32> -> vector<8x8xf32>
    %232 = vector.broadcast %192 : vector<1x8xf32> to vector<8x8xf32>
    %233 = arith.addf %231, %232 : vector<8x8xf32>
    %cst_135 = arith.constant dense<0.000000e+00> : vector<8x8xf32>
    %234 = tpu.matmul %227, %188, %cst_135 {dimension_numbers = #tpu.dot_dimension_numbers<[1], [0], [0], [1], [0, 0, 1, 1], [], []>} : vector<8x8xf32>, vector<8x8xf32>, vector<8x8xf32> -> vector<8x8xf32>
    %235 = vector.broadcast %194 : vector<1x8xf32> to vector<8x8xf32>
    %236 = arith.addf %234, %235 : vector<8x8xf32>
    %237 = vector.extract_strided_slice %168 {offsets = [0, 0], sizes = [8, 8], strides = [1, 1]} : vector<16x8xf32> to vector<8x8xf32>
    %238 = arith.addf %237, %230 : vector<8x8xf32>
    %239 = arith.negf %238 : vector<8x8xf32>
    %240 = math.exp %239 : vector<8x8xf32>
    %cst_136 = arith.constant 1.000000e+00 : f32
    %241 = vector.broadcast %cst_136 : f32 to vector<8x8xf32>
    %242 = arith.addf %241, %240 : vector<8x8xf32>
    %243 = arith.divf %241, %242 : vector<8x8xf32>
    %244 = vector.extract_strided_slice %175 {offsets = [0, 0], sizes = [8, 8], strides = [1, 1]} : vector<16x8xf32> to vector<8x8xf32>
    %245 = arith.addf %244, %233 : vector<8x8xf32>
    %246 = arith.negf %245 : vector<8x8xf32>
    %247 = math.exp %246 : vector<8x8xf32>
    %cst_137 = arith.constant 1.000000e+00 : f32
    %248 = vector.broadcast %cst_137 : f32 to vector<8x8xf32>
    %249 = arith.addf %248, %247 : vector<8x8xf32>
    %250 = arith.divf %248, %249 : vector<8x8xf32>
    %251 = vector.extract_strided_slice %182 {offsets = [0, 0], sizes = [8, 8], strides = [1, 1]} : vector<16x8xf32> to vector<8x8xf32>
    %252 = arith.mulf %243, %236 : vector<8x8xf32>
    %253 = arith.addf %251, %252 : vector<8x8xf32>
    %254 = math.tanh %253 : vector<8x8xf32>
    %cst_138 = arith.constant 1.000000e+00 : f32
    %255 = vector.broadcast %cst_138 : f32 to vector<8x8xf32>
    %256 = arith.subf %255, %250 : vector<8x8xf32>
    %257 = arith.mulf %256, %254 : vector<8x8xf32>
    %258 = arith.mulf %250, %227 : vector<8x8xf32>
    %259 = arith.addf %257, %258 : vector<8x8xf32>
    %260 = tpu.concatenate %129, %161 in 0 : vector<8x8xf32>, vector<8x8xf32> -> vector<16x8xf32>
    %261 = tpu.concatenate %259, %227 in 0 : vector<8x8xf32>, vector<8x8xf32> -> vector<16x8xf32>
    %c0_139 = arith.constant 0 : index
    %c0_140 = arith.constant 0 : index
    %c0_141 = arith.constant 0 : index
    %262 = vector.load %arg14[%c0_139, %c0_140, %c0_141] : memref<3x16x8xf32, #tpu.memory_space<vmem>>, vector<1x16x8xf32>
    %263 = vector.shape_cast %262 : vector<1x16x8xf32> to vector<16x8xf32>
    %264 = vector.extract_strided_slice %263 {offsets = [0, 0], sizes = [8, 8], strides = [1, 1]} : vector<16x8xf32> to vector<8x8xf32>
    %cst_142 = arith.constant dense<0.000000e+00> : vector<16x8xf32>
    %265 = tpu.matmul %260, %264, %cst_142 {dimension_numbers = #tpu.dot_dimension_numbers<[1], [0], [0], [1], [0, 0, 1, 1], [], []>} : vector<16x8xf32>, vector<8x8xf32>, vector<16x8xf32> -> vector<16x8xf32>
    %266 = vector.extract_strided_slice %263 {offsets = [8, 0], sizes = [8, 8], strides = [1, 1]} : vector<16x8xf32> to vector<8x8xf32>
    %cst_143 = arith.constant dense<0.000000e+00> : vector<16x8xf32>
    %267 = tpu.matmul %261, %266, %cst_143 {dimension_numbers = #tpu.dot_dimension_numbers<[1], [0], [0], [1], [0, 0, 1, 1], [], []>} : vector<16x8xf32>, vector<8x8xf32>, vector<16x8xf32> -> vector<16x8xf32>
    %268 = arith.addf %265, %267 : vector<16x8xf32>
    %c0_144 = arith.constant 0 : index
    %c0_145 = arith.constant 0 : index
    %c0_146 = arith.constant 0 : index
    %269 = vector.load %arg15[%c0_144, %c0_145, %c0_146] : memref<3x1x8xf32, #tpu.memory_space<vmem>>, vector<1x1x8xf32>
    %270 = vector.shape_cast %269 : vector<1x1x8xf32> to vector<1x8xf32>
    %271 = vector.broadcast %270 : vector<1x8xf32> to vector<16x8xf32>
    %272 = arith.addf %268, %271 : vector<16x8xf32>
    %c1_147 = arith.constant 1 : index
    %c0_148 = arith.constant 0 : index
    %c0_149 = arith.constant 0 : index
    %273 = vector.load %arg14[%c1_147, %c0_148, %c0_149] : memref<3x16x8xf32, #tpu.memory_space<vmem>>, vector<1x16x8xf32>
    %274 = vector.shape_cast %273 : vector<1x16x8xf32> to vector<16x8xf32>
    %275 = vector.extract_strided_slice %274 {offsets = [0, 0], sizes = [8, 8], strides = [1, 1]} : vector<16x8xf32> to vector<8x8xf32>
    %cst_150 = arith.constant dense<0.000000e+00> : vector<16x8xf32>
    %276 = tpu.matmul %260, %275, %cst_150 {dimension_numbers = #tpu.dot_dimension_numbers<[1], [0], [0], [1], [0, 0, 1, 1], [], []>} : vector<16x8xf32>, vector<8x8xf32>, vector<16x8xf32> -> vector<16x8xf32>
    %277 = vector.extract_strided_slice %274 {offsets = [8, 0], sizes = [8, 8], strides = [1, 1]} : vector<16x8xf32> to vector<8x8xf32>
    %cst_151 = arith.constant dense<0.000000e+00> : vector<16x8xf32>
    %278 = tpu.matmul %261, %277, %cst_151 {dimension_numbers = #tpu.dot_dimension_numbers<[1], [0], [0], [1], [0, 0, 1, 1], [], []>} : vector<16x8xf32>, vector<8x8xf32>, vector<16x8xf32> -> vector<16x8xf32>
    %279 = arith.addf %276, %278 : vector<16x8xf32>
    %c1_152 = arith.constant 1 : index
    %c0_153 = arith.constant 0 : index
    %c0_154 = arith.constant 0 : index
    %280 = vector.load %arg15[%c1_152, %c0_153, %c0_154] : memref<3x1x8xf32, #tpu.memory_space<vmem>>, vector<1x1x8xf32>
    %281 = vector.shape_cast %280 : vector<1x1x8xf32> to vector<1x8xf32>
    %282 = vector.broadcast %281 : vector<1x8xf32> to vector<16x8xf32>
    %283 = arith.addf %279, %282 : vector<16x8xf32>
    %c2_155 = arith.constant 2 : index
    %c0_156 = arith.constant 0 : index
    %c0_157 = arith.constant 0 : index
    %284 = vector.load %arg14[%c2_155, %c0_156, %c0_157] : memref<3x16x8xf32, #tpu.memory_space<vmem>>, vector<1x16x8xf32>
    %285 = vector.shape_cast %284 : vector<1x16x8xf32> to vector<16x8xf32>
    %286 = vector.extract_strided_slice %285 {offsets = [0, 0], sizes = [8, 8], strides = [1, 1]} : vector<16x8xf32> to vector<8x8xf32>
    %cst_158 = arith.constant dense<0.000000e+00> : vector<16x8xf32>
    %287 = tpu.matmul %260, %286, %cst_158 {dimension_numbers = #tpu.dot_dimension_numbers<[1], [0], [0], [1], [0, 0, 1, 1], [], []>} : vector<16x8xf32>, vector<8x8xf32>, vector<16x8xf32> -> vector<16x8xf32>
    %288 = vector.extract_strided_slice %285 {offsets = [8, 0], sizes = [8, 8], strides = [1, 1]} : vector<16x8xf32> to vector<8x8xf32>
    %cst_159 = arith.constant dense<0.000000e+00> : vector<16x8xf32>
    %289 = tpu.matmul %261, %288, %cst_159 {dimension_numbers = #tpu.dot_dimension_numbers<[1], [0], [0], [1], [0, 0, 1, 1], [], []>} : vector<16x8xf32>, vector<8x8xf32>, vector<16x8xf32> -> vector<16x8xf32>
    %290 = arith.addf %287, %289 : vector<16x8xf32>
    %c2_160 = arith.constant 2 : index
    %c0_161 = arith.constant 0 : index
    %c0_162 = arith.constant 0 : index
    %291 = vector.load %arg15[%c2_160, %c0_161, %c0_162] : memref<3x1x8xf32, #tpu.memory_space<vmem>>, vector<1x1x8xf32>
    %292 = vector.shape_cast %291 : vector<1x1x8xf32> to vector<1x8xf32>
    %293 = vector.broadcast %292 : vector<1x8xf32> to vector<16x8xf32>
    %294 = arith.addf %290, %293 : vector<16x8xf32>
    %c0_163 = arith.constant 0 : index
    %c0_164 = arith.constant 0 : index
    %c0_165 = arith.constant 0 : index
    %295 = vector.load %arg16[%c0_163, %c0_164, %c0_165] : memref<3x8x8xf32, #tpu.memory_space<vmem>>, vector<1x8x8xf32>
    %296 = vector.shape_cast %295 : vector<1x8x8xf32> to vector<8x8xf32>
    %c1_166 = arith.constant 1 : index
    %c0_167 = arith.constant 0 : index
    %c0_168 = arith.constant 0 : index
    %297 = vector.load %arg16[%c1_166, %c0_167, %c0_168] : memref<3x8x8xf32, #tpu.memory_space<vmem>>, vector<1x8x8xf32>
    %298 = vector.shape_cast %297 : vector<1x8x8xf32> to vector<8x8xf32>
    %c2_169 = arith.constant 2 : index
    %c0_170 = arith.constant 0 : index
    %c0_171 = arith.constant 0 : index
    %299 = vector.load %arg16[%c2_169, %c0_170, %c0_171] : memref<3x8x8xf32, #tpu.memory_space<vmem>>, vector<1x8x8xf32>
    %300 = vector.shape_cast %299 : vector<1x8x8xf32> to vector<8x8xf32>
    %c0_172 = arith.constant 0 : index
    %c0_173 = arith.constant 0 : index
    %c0_174 = arith.constant 0 : index
    %301 = vector.load %arg17[%c0_172, %c0_173, %c0_174] : memref<3x1x8xf32, #tpu.memory_space<vmem>>, vector<1x1x8xf32>
    %302 = vector.shape_cast %301 : vector<1x1x8xf32> to vector<1x8xf32>
    %c1_175 = arith.constant 1 : index
    %c0_176 = arith.constant 0 : index
    %c0_177 = arith.constant 0 : index
    %303 = vector.load %arg17[%c1_175, %c0_176, %c0_177] : memref<3x1x8xf32, #tpu.memory_space<vmem>>, vector<1x1x8xf32>
    %304 = vector.shape_cast %303 : vector<1x1x8xf32> to vector<1x8xf32>
    %c2_178 = arith.constant 2 : index
    %c0_179 = arith.constant 0 : index
    %c0_180 = arith.constant 0 : index
    %305 = vector.load %arg17[%c2_178, %c0_179, %c0_180] : memref<3x1x8xf32, #tpu.memory_space<vmem>>, vector<1x1x8xf32>
    %306 = vector.shape_cast %305 : vector<1x1x8xf32> to vector<1x8xf32>
    %cst_181 = arith.constant 0.000000e+00 : f32
    %307 = vector.broadcast %cst_181 : f32 to vector<8x8xf32>
    %cst_182 = arith.constant dense<0.000000e+00> : vector<8x8xf32>
    %308 = tpu.matmul %307, %296, %cst_182 {dimension_numbers = #tpu.dot_dimension_numbers<[1], [0], [0], [1], [0, 0, 1, 1], [], []>} : vector<8x8xf32>, vector<8x8xf32>, vector<8x8xf32> -> vector<8x8xf32>
    %309 = vector.broadcast %302 : vector<1x8xf32> to vector<8x8xf32>
    %310 = arith.addf %308, %309 : vector<8x8xf32>
    %cst_183 = arith.constant dense<0.000000e+00> : vector<8x8xf32>
    %311 = tpu.matmul %307, %298, %cst_183 {dimension_numbers = #tpu.dot_dimension_numbers<[1], [0], [0], [1], [0, 0, 1, 1], [], []>} : vector<8x8xf32>, vector<8x8xf32>, vector<8x8xf32> -> vector<8x8xf32>
    %312 = vector.broadcast %304 : vector<1x8xf32> to vector<8x8xf32>
    %313 = arith.addf %311, %312 : vector<8x8xf32>
    %cst_184 = arith.constant dense<0.000000e+00> : vector<8x8xf32>
    %314 = tpu.matmul %307, %300, %cst_184 {dimension_numbers = #tpu.dot_dimension_numbers<[1], [0], [0], [1], [0, 0, 1, 1], [], []>} : vector<8x8xf32>, vector<8x8xf32>, vector<8x8xf32> -> vector<8x8xf32>
    %315 = vector.broadcast %306 : vector<1x8xf32> to vector<8x8xf32>
    %316 = arith.addf %314, %315 : vector<8x8xf32>
    %317 = vector.extract_strided_slice %272 {offsets = [0, 0], sizes = [8, 8], strides = [1, 1]} : vector<16x8xf32> to vector<8x8xf32>
    %318 = arith.addf %317, %310 : vector<8x8xf32>
    %319 = arith.negf %318 : vector<8x8xf32>
    %320 = math.exp %319 : vector<8x8xf32>
    %cst_185 = arith.constant 1.000000e+00 : f32
    %321 = vector.broadcast %cst_185 : f32 to vector<8x8xf32>
    %322 = arith.addf %321, %320 : vector<8x8xf32>
    %323 = arith.divf %321, %322 : vector<8x8xf32>
    %324 = vector.extract_strided_slice %283 {offsets = [0, 0], sizes = [8, 8], strides = [1, 1]} : vector<16x8xf32> to vector<8x8xf32>
    %325 = arith.addf %324, %313 : vector<8x8xf32>
    %326 = arith.negf %325 : vector<8x8xf32>
    %327 = math.exp %326 : vector<8x8xf32>
    %cst_186 = arith.constant 1.000000e+00 : f32
    %328 = vector.broadcast %cst_186 : f32 to vector<8x8xf32>
    %329 = arith.addf %328, %327 : vector<8x8xf32>
    %330 = arith.divf %328, %329 : vector<8x8xf32>
    %331 = vector.extract_strided_slice %294 {offsets = [0, 0], sizes = [8, 8], strides = [1, 1]} : vector<16x8xf32> to vector<8x8xf32>
    %332 = arith.mulf %323, %316 : vector<8x8xf32>
    %333 = arith.addf %331, %332 : vector<8x8xf32>
    %334 = math.tanh %333 : vector<8x8xf32>
    %cst_187 = arith.constant 1.000000e+00 : f32
    %335 = vector.broadcast %cst_187 : f32 to vector<8x8xf32>
    %336 = arith.subf %335, %330 : vector<8x8xf32>
    %337 = arith.mulf %336, %334 : vector<8x8xf32>
    %338 = arith.mulf %330, %307 : vector<8x8xf32>
    %339 = arith.addf %337, %338 : vector<8x8xf32>
    %cst_188 = arith.constant dense<0.000000e+00> : vector<8x8xf32>
    %340 = tpu.matmul %339, %296, %cst_188 {dimension_numbers = #tpu.dot_dimension_numbers<[1], [0], [0], [1], [0, 0, 1, 1], [], []>} : vector<8x8xf32>, vector<8x8xf32>, vector<8x8xf32> -> vector<8x8xf32>
    %341 = vector.broadcast %302 : vector<1x8xf32> to vector<8x8xf32>
    %342 = arith.addf %340, %341 : vector<8x8xf32>
    %cst_189 = arith.constant dense<0.000000e+00> : vector<8x8xf32>
    %343 = tpu.matmul %339, %298, %cst_189 {dimension_numbers = #tpu.dot_dimension_numbers<[1], [0], [0], [1], [0, 0, 1, 1], [], []>} : vector<8x8xf32>, vector<8x8xf32>, vector<8x8xf32> -> vector<8x8xf32>
    %344 = vector.broadcast %304 : vector<1x8xf32> to vector<8x8xf32>
    %345 = arith.addf %343, %344 : vector<8x8xf32>
    %cst_190 = arith.constant dense<0.000000e+00> : vector<8x8xf32>
    %346 = tpu.matmul %339, %300, %cst_190 {dimension_numbers = #tpu.dot_dimension_numbers<[1], [0], [0], [1], [0, 0, 1, 1], [], []>} : vector<8x8xf32>, vector<8x8xf32>, vector<8x8xf32> -> vector<8x8xf32>
    %347 = vector.broadcast %306 : vector<1x8xf32> to vector<8x8xf32>
    %348 = arith.addf %346, %347 : vector<8x8xf32>
    %349 = vector.extract_strided_slice %272 {offsets = [8, 0], sizes = [8, 8], strides = [1, 1]} : vector<16x8xf32> to vector<8x8xf32>
    %350 = arith.addf %349, %342 : vector<8x8xf32>
    %351 = arith.negf %350 : vector<8x8xf32>
    %352 = math.exp %351 : vector<8x8xf32>
    %cst_191 = arith.constant 1.000000e+00 : f32
    %353 = vector.broadcast %cst_191 : f32 to vector<8x8xf32>
    %354 = arith.addf %353, %352 : vector<8x8xf32>
    %355 = arith.divf %353, %354 : vector<8x8xf32>
    %356 = vector.extract_strided_slice %283 {offsets = [8, 0], sizes = [8, 8], strides = [1, 1]} : vector<16x8xf32> to vector<8x8xf32>
    %357 = arith.addf %356, %345 : vector<8x8xf32>
    %358 = arith.negf %357 : vector<8x8xf32>
    %359 = math.exp %358 : vector<8x8xf32>
    %cst_192 = arith.constant 1.000000e+00 : f32
    %360 = vector.broadcast %cst_192 : f32 to vector<8x8xf32>
    %361 = arith.addf %360, %359 : vector<8x8xf32>
    %362 = arith.divf %360, %361 : vector<8x8xf32>
    %363 = vector.extract_strided_slice %294 {offsets = [8, 0], sizes = [8, 8], strides = [1, 1]} : vector<16x8xf32> to vector<8x8xf32>
    %364 = arith.mulf %355, %348 : vector<8x8xf32>
    %365 = arith.addf %363, %364 : vector<8x8xf32>
    %366 = math.tanh %365 : vector<8x8xf32>
    %cst_193 = arith.constant 1.000000e+00 : f32
    %367 = vector.broadcast %cst_193 : f32 to vector<8x8xf32>
    %368 = arith.subf %367, %362 : vector<8x8xf32>
    %369 = arith.mulf %368, %366 : vector<8x8xf32>
    %370 = arith.mulf %362, %339 : vector<8x8xf32>
    %371 = arith.addf %369, %370 : vector<8x8xf32>
    %c0_194 = arith.constant 0 : index
    %c0_195 = arith.constant 0 : index
    %c0_196 = arith.constant 0 : index
    %372 = vector.load %arg18[%c0_194, %c0_195, %c0_196] : memref<3x16x8xf32, #tpu.memory_space<vmem>>, vector<1x16x8xf32>
    %373 = vector.shape_cast %372 : vector<1x16x8xf32> to vector<16x8xf32>
    %374 = vector.extract_strided_slice %373 {offsets = [0, 0], sizes = [8, 8], strides = [1, 1]} : vector<16x8xf32> to vector<8x8xf32>
    %cst_197 = arith.constant dense<0.000000e+00> : vector<16x8xf32>
    %375 = tpu.matmul %260, %374, %cst_197 {dimension_numbers = #tpu.dot_dimension_numbers<[1], [0], [0], [1], [0, 0, 1, 1], [], []>} : vector<16x8xf32>, vector<8x8xf32>, vector<16x8xf32> -> vector<16x8xf32>
    %376 = vector.extract_strided_slice %373 {offsets = [8, 0], sizes = [8, 8], strides = [1, 1]} : vector<16x8xf32> to vector<8x8xf32>
    %cst_198 = arith.constant dense<0.000000e+00> : vector<16x8xf32>
    %377 = tpu.matmul %261, %376, %cst_198 {dimension_numbers = #tpu.dot_dimension_numbers<[1], [0], [0], [1], [0, 0, 1, 1], [], []>} : vector<16x8xf32>, vector<8x8xf32>, vector<16x8xf32> -> vector<16x8xf32>
    %378 = arith.addf %375, %377 : vector<16x8xf32>
    %c0_199 = arith.constant 0 : index
    %c0_200 = arith.constant 0 : index
    %c0_201 = arith.constant 0 : index
    %379 = vector.load %arg19[%c0_199, %c0_200, %c0_201] : memref<3x1x8xf32, #tpu.memory_space<vmem>>, vector<1x1x8xf32>
    %380 = vector.shape_cast %379 : vector<1x1x8xf32> to vector<1x8xf32>
    %381 = vector.broadcast %380 : vector<1x8xf32> to vector<16x8xf32>
    %382 = arith.addf %378, %381 : vector<16x8xf32>
    %c1_202 = arith.constant 1 : index
    %c0_203 = arith.constant 0 : index
    %c0_204 = arith.constant 0 : index
    %383 = vector.load %arg18[%c1_202, %c0_203, %c0_204] : memref<3x16x8xf32, #tpu.memory_space<vmem>>, vector<1x16x8xf32>
    %384 = vector.shape_cast %383 : vector<1x16x8xf32> to vector<16x8xf32>
    %385 = vector.extract_strided_slice %384 {offsets = [0, 0], sizes = [8, 8], strides = [1, 1]} : vector<16x8xf32> to vector<8x8xf32>
    %cst_205 = arith.constant dense<0.000000e+00> : vector<16x8xf32>
    %386 = tpu.matmul %260, %385, %cst_205 {dimension_numbers = #tpu.dot_dimension_numbers<[1], [0], [0], [1], [0, 0, 1, 1], [], []>} : vector<16x8xf32>, vector<8x8xf32>, vector<16x8xf32> -> vector<16x8xf32>
    %387 = vector.extract_strided_slice %384 {offsets = [8, 0], sizes = [8, 8], strides = [1, 1]} : vector<16x8xf32> to vector<8x8xf32>
    %cst_206 = arith.constant dense<0.000000e+00> : vector<16x8xf32>
    %388 = tpu.matmul %261, %387, %cst_206 {dimension_numbers = #tpu.dot_dimension_numbers<[1], [0], [0], [1], [0, 0, 1, 1], [], []>} : vector<16x8xf32>, vector<8x8xf32>, vector<16x8xf32> -> vector<16x8xf32>
    %389 = arith.addf %386, %388 : vector<16x8xf32>
    %c1_207 = arith.constant 1 : index
    %c0_208 = arith.constant 0 : index
    %c0_209 = arith.constant 0 : index
    %390 = vector.load %arg19[%c1_207, %c0_208, %c0_209] : memref<3x1x8xf32, #tpu.memory_space<vmem>>, vector<1x1x8xf32>
    %391 = vector.shape_cast %390 : vector<1x1x8xf32> to vector<1x8xf32>
    %392 = vector.broadcast %391 : vector<1x8xf32> to vector<16x8xf32>
    %393 = arith.addf %389, %392 : vector<16x8xf32>
    %c2_210 = arith.constant 2 : index
    %c0_211 = arith.constant 0 : index
    %c0_212 = arith.constant 0 : index
    %394 = vector.load %arg18[%c2_210, %c0_211, %c0_212] : memref<3x16x8xf32, #tpu.memory_space<vmem>>, vector<1x16x8xf32>
    %395 = vector.shape_cast %394 : vector<1x16x8xf32> to vector<16x8xf32>
    %396 = vector.extract_strided_slice %395 {offsets = [0, 0], sizes = [8, 8], strides = [1, 1]} : vector<16x8xf32> to vector<8x8xf32>
    %cst_213 = arith.constant dense<0.000000e+00> : vector<16x8xf32>
    %397 = tpu.matmul %260, %396, %cst_213 {dimension_numbers = #tpu.dot_dimension_numbers<[1], [0], [0], [1], [0, 0, 1, 1], [], []>} : vector<16x8xf32>, vector<8x8xf32>, vector<16x8xf32> -> vector<16x8xf32>
    %398 = vector.extract_strided_slice %395 {offsets = [8, 0], sizes = [8, 8], strides = [1, 1]} : vector<16x8xf32> to vector<8x8xf32>
    %cst_214 = arith.constant dense<0.000000e+00> : vector<16x8xf32>
    %399 = tpu.matmul %261, %398, %cst_214 {dimension_numbers = #tpu.dot_dimension_numbers<[1], [0], [0], [1], [0, 0, 1, 1], [], []>} : vector<16x8xf32>, vector<8x8xf32>, vector<16x8xf32> -> vector<16x8xf32>
    %400 = arith.addf %397, %399 : vector<16x8xf32>
    %c2_215 = arith.constant 2 : index
    %c0_216 = arith.constant 0 : index
    %c0_217 = arith.constant 0 : index
    %401 = vector.load %arg19[%c2_215, %c0_216, %c0_217] : memref<3x1x8xf32, #tpu.memory_space<vmem>>, vector<1x1x8xf32>
    %402 = vector.shape_cast %401 : vector<1x1x8xf32> to vector<1x8xf32>
    %403 = vector.broadcast %402 : vector<1x8xf32> to vector<16x8xf32>
    %404 = arith.addf %400, %403 : vector<16x8xf32>
    %c0_218 = arith.constant 0 : index
    %c0_219 = arith.constant 0 : index
    %c0_220 = arith.constant 0 : index
    %405 = vector.load %arg20[%c0_218, %c0_219, %c0_220] : memref<3x8x8xf32, #tpu.memory_space<vmem>>, vector<1x8x8xf32>
    %406 = vector.shape_cast %405 : vector<1x8x8xf32> to vector<8x8xf32>
    %c1_221 = arith.constant 1 : index
    %c0_222 = arith.constant 0 : index
    %c0_223 = arith.constant 0 : index
    %407 = vector.load %arg20[%c1_221, %c0_222, %c0_223] : memref<3x8x8xf32, #tpu.memory_space<vmem>>, vector<1x8x8xf32>
    %408 = vector.shape_cast %407 : vector<1x8x8xf32> to vector<8x8xf32>
    %c2_224 = arith.constant 2 : index
    %c0_225 = arith.constant 0 : index
    %c0_226 = arith.constant 0 : index
    %409 = vector.load %arg20[%c2_224, %c0_225, %c0_226] : memref<3x8x8xf32, #tpu.memory_space<vmem>>, vector<1x8x8xf32>
    %410 = vector.shape_cast %409 : vector<1x8x8xf32> to vector<8x8xf32>
    %c0_227 = arith.constant 0 : index
    %c0_228 = arith.constant 0 : index
    %c0_229 = arith.constant 0 : index
    %411 = vector.load %arg21[%c0_227, %c0_228, %c0_229] : memref<3x1x8xf32, #tpu.memory_space<vmem>>, vector<1x1x8xf32>
    %412 = vector.shape_cast %411 : vector<1x1x8xf32> to vector<1x8xf32>
    %c1_230 = arith.constant 1 : index
    %c0_231 = arith.constant 0 : index
    %c0_232 = arith.constant 0 : index
    %413 = vector.load %arg21[%c1_230, %c0_231, %c0_232] : memref<3x1x8xf32, #tpu.memory_space<vmem>>, vector<1x1x8xf32>
    %414 = vector.shape_cast %413 : vector<1x1x8xf32> to vector<1x8xf32>
    %c2_233 = arith.constant 2 : index
    %c0_234 = arith.constant 0 : index
    %c0_235 = arith.constant 0 : index
    %415 = vector.load %arg21[%c2_233, %c0_234, %c0_235] : memref<3x1x8xf32, #tpu.memory_space<vmem>>, vector<1x1x8xf32>
    %416 = vector.shape_cast %415 : vector<1x1x8xf32> to vector<1x8xf32>
    %cst_236 = arith.constant 0.000000e+00 : f32
    %417 = vector.broadcast %cst_236 : f32 to vector<8x8xf32>
    %cst_237 = arith.constant dense<0.000000e+00> : vector<8x8xf32>
    %418 = tpu.matmul %417, %406, %cst_237 {dimension_numbers = #tpu.dot_dimension_numbers<[1], [0], [0], [1], [0, 0, 1, 1], [], []>} : vector<8x8xf32>, vector<8x8xf32>, vector<8x8xf32> -> vector<8x8xf32>
    %419 = vector.broadcast %412 : vector<1x8xf32> to vector<8x8xf32>
    %420 = arith.addf %418, %419 : vector<8x8xf32>
    %cst_238 = arith.constant dense<0.000000e+00> : vector<8x8xf32>
    %421 = tpu.matmul %417, %408, %cst_238 {dimension_numbers = #tpu.dot_dimension_numbers<[1], [0], [0], [1], [0, 0, 1, 1], [], []>} : vector<8x8xf32>, vector<8x8xf32>, vector<8x8xf32> -> vector<8x8xf32>
    %422 = vector.broadcast %414 : vector<1x8xf32> to vector<8x8xf32>
    %423 = arith.addf %421, %422 : vector<8x8xf32>
    %cst_239 = arith.constant dense<0.000000e+00> : vector<8x8xf32>
    %424 = tpu.matmul %417, %410, %cst_239 {dimension_numbers = #tpu.dot_dimension_numbers<[1], [0], [0], [1], [0, 0, 1, 1], [], []>} : vector<8x8xf32>, vector<8x8xf32>, vector<8x8xf32> -> vector<8x8xf32>
    %425 = vector.broadcast %416 : vector<1x8xf32> to vector<8x8xf32>
    %426 = arith.addf %424, %425 : vector<8x8xf32>
    %427 = vector.extract_strided_slice %382 {offsets = [8, 0], sizes = [8, 8], strides = [1, 1]} : vector<16x8xf32> to vector<8x8xf32>
    %428 = arith.addf %427, %420 : vector<8x8xf32>
    %429 = arith.negf %428 : vector<8x8xf32>
    %430 = math.exp %429 : vector<8x8xf32>
    %cst_240 = arith.constant 1.000000e+00 : f32
    %431 = vector.broadcast %cst_240 : f32 to vector<8x8xf32>
    %432 = arith.addf %431, %430 : vector<8x8xf32>
    %433 = arith.divf %431, %432 : vector<8x8xf32>
    %434 = vector.extract_strided_slice %393 {offsets = [8, 0], sizes = [8, 8], strides = [1, 1]} : vector<16x8xf32> to vector<8x8xf32>
    %435 = arith.addf %434, %423 : vector<8x8xf32>
    %436 = arith.negf %435 : vector<8x8xf32>
    %437 = math.exp %436 : vector<8x8xf32>
    %cst_241 = arith.constant 1.000000e+00 : f32
    %438 = vector.broadcast %cst_241 : f32 to vector<8x8xf32>
    %439 = arith.addf %438, %437 : vector<8x8xf32>
    %440 = arith.divf %438, %439 : vector<8x8xf32>
    %441 = vector.extract_strided_slice %404 {offsets = [8, 0], sizes = [8, 8], strides = [1, 1]} : vector<16x8xf32> to vector<8x8xf32>
    %442 = arith.mulf %433, %426 : vector<8x8xf32>
    %443 = arith.addf %441, %442 : vector<8x8xf32>
    %444 = math.tanh %443 : vector<8x8xf32>
    %cst_242 = arith.constant 1.000000e+00 : f32
    %445 = vector.broadcast %cst_242 : f32 to vector<8x8xf32>
    %446 = arith.subf %445, %440 : vector<8x8xf32>
    %447 = arith.mulf %446, %444 : vector<8x8xf32>
    %448 = arith.mulf %440, %417 : vector<8x8xf32>
    %449 = arith.addf %447, %448 : vector<8x8xf32>
    %cst_243 = arith.constant dense<0.000000e+00> : vector<8x8xf32>
    %450 = tpu.matmul %449, %406, %cst_243 {dimension_numbers = #tpu.dot_dimension_numbers<[1], [0], [0], [1], [0, 0, 1, 1], [], []>} : vector<8x8xf32>, vector<8x8xf32>, vector<8x8xf32> -> vector<8x8xf32>
    %451 = vector.broadcast %412 : vector<1x8xf32> to vector<8x8xf32>
    %452 = arith.addf %450, %451 : vector<8x8xf32>
    %cst_244 = arith.constant dense<0.000000e+00> : vector<8x8xf32>
    %453 = tpu.matmul %449, %408, %cst_244 {dimension_numbers = #tpu.dot_dimension_numbers<[1], [0], [0], [1], [0, 0, 1, 1], [], []>} : vector<8x8xf32>, vector<8x8xf32>, vector<8x8xf32> -> vector<8x8xf32>
    %454 = vector.broadcast %414 : vector<1x8xf32> to vector<8x8xf32>
    %455 = arith.addf %453, %454 : vector<8x8xf32>
    %cst_245 = arith.constant dense<0.000000e+00> : vector<8x8xf32>
    %456 = tpu.matmul %449, %410, %cst_245 {dimension_numbers = #tpu.dot_dimension_numbers<[1], [0], [0], [1], [0, 0, 1, 1], [], []>} : vector<8x8xf32>, vector<8x8xf32>, vector<8x8xf32> -> vector<8x8xf32>
    %457 = vector.broadcast %416 : vector<1x8xf32> to vector<8x8xf32>
    %458 = arith.addf %456, %457 : vector<8x8xf32>
    %459 = vector.extract_strided_slice %382 {offsets = [0, 0], sizes = [8, 8], strides = [1, 1]} : vector<16x8xf32> to vector<8x8xf32>
    %460 = arith.addf %459, %452 : vector<8x8xf32>
    %461 = arith.negf %460 : vector<8x8xf32>
    %462 = math.exp %461 : vector<8x8xf32>
    %cst_246 = arith.constant 1.000000e+00 : f32
    %463 = vector.broadcast %cst_246 : f32 to vector<8x8xf32>
    %464 = arith.addf %463, %462 : vector<8x8xf32>
    %465 = arith.divf %463, %464 : vector<8x8xf32>
    %466 = vector.extract_strided_slice %393 {offsets = [0, 0], sizes = [8, 8], strides = [1, 1]} : vector<16x8xf32> to vector<8x8xf32>
    %467 = arith.addf %466, %455 : vector<8x8xf32>
    %468 = arith.negf %467 : vector<8x8xf32>
    %469 = math.exp %468 : vector<8x8xf32>
    %cst_247 = arith.constant 1.000000e+00 : f32
    %470 = vector.broadcast %cst_247 : f32 to vector<8x8xf32>
    %471 = arith.addf %470, %469 : vector<8x8xf32>
    %472 = arith.divf %470, %471 : vector<8x8xf32>
    %473 = vector.extract_strided_slice %404 {offsets = [0, 0], sizes = [8, 8], strides = [1, 1]} : vector<16x8xf32> to vector<8x8xf32>
    %474 = arith.mulf %465, %458 : vector<8x8xf32>
    %475 = arith.addf %473, %474 : vector<8x8xf32>
    %476 = math.tanh %475 : vector<8x8xf32>
    %cst_248 = arith.constant 1.000000e+00 : f32
    %477 = vector.broadcast %cst_248 : f32 to vector<8x8xf32>
    %478 = arith.subf %477, %472 : vector<8x8xf32>
    %479 = arith.mulf %478, %476 : vector<8x8xf32>
    %480 = arith.mulf %472, %449 : vector<8x8xf32>
    %481 = arith.addf %479, %480 : vector<8x8xf32>
    %c0_249 = arith.constant 0 : index
    %c0_250 = arith.constant 0 : index
    %482 = vector.load %arg22[%c0_249, %c0_250] : memref<32x16xf32, #tpu.memory_space<vmem>>, vector<32x16xf32>
    %c0_251 = arith.constant 0 : index
    %c0_252 = arith.constant 0 : index
    %483 = vector.load %arg23[%c0_251, %c0_252] : memref<1x16xf32, #tpu.memory_space<vmem>>, vector<1x16xf32>
    %c0_253 = arith.constant 0 : index
    %c0_254 = arith.constant 0 : index
    %484 = vector.load %arg24[%c0_253, %c0_254] : memref<16x3xf32, #tpu.memory_space<vmem>>, vector<16x3xf32>
    %c0_255 = arith.constant 0 : index
    %c0_256 = arith.constant 0 : index
    %485 = vector.load %arg25[%c0_255, %c0_256] : memref<1x3xf32, #tpu.memory_space<vmem>>, vector<1x3xf32>
    %cst_257 = arith.constant dense<0xFF800000> : vector<8xf32>
    %486 = vector.multi_reduction <maximumf>, %339, %cst_257 [0] : vector<8x8xf32> to vector<8xf32>
    %487 = vector.shape_cast %486 : vector<8xf32> to vector<1x8xf32>
    %488 = math.tanh %487 : vector<1x8xf32>
    %cst_258 = arith.constant dense<0xFF800000> : vector<8xf32>
    %489 = vector.multi_reduction <maximumf>, %481, %cst_258 [0] : vector<8x8xf32> to vector<8xf32>
    %490 = vector.shape_cast %489 : vector<8xf32> to vector<1x8xf32>
    %491 = math.tanh %490 : vector<1x8xf32>
    %492 = math.tanh %23 : vector<1x8xf32>
    %493 = vector.extract_strided_slice %482 {offsets = [0, 0], sizes = [8, 16], strides = [1, 1]} : vector<32x16xf32> to vector<8x16xf32>
    %cst_259 = arith.constant dense<0.000000e+00> : vector<1x16xf32>
    %494 = tpu.matmul %492, %493, %cst_259 {dimension_numbers = #tpu.dot_dimension_numbers<[1], [0], [0], [1], [0, 0, 1, 1], [], []>} : vector<1x8xf32>, vector<8x16xf32>, vector<1x16xf32> -> vector<1x16xf32>
    %495 = arith.addf %483, %494 : vector<1x16xf32>
    %496 = math.tanh %52 : vector<1x8xf32>
    %497 = vector.extract_strided_slice %482 {offsets = [8, 0], sizes = [8, 16], strides = [1, 1]} : vector<32x16xf32> to vector<8x16xf32>
    %cst_260 = arith.constant dense<0.000000e+00> : vector<1x16xf32>
    %498 = tpu.matmul %496, %497, %cst_260 {dimension_numbers = #tpu.dot_dimension_numbers<[1], [0], [0], [1], [0, 0, 1, 1], [], []>} : vector<1x8xf32>, vector<8x16xf32>, vector<1x16xf32> -> vector<1x16xf32>
    %499 = arith.addf %495, %498 : vector<1x16xf32>
    %500 = math.tanh %488 : vector<1x8xf32>
    %501 = vector.extract_strided_slice %482 {offsets = [16, 0], sizes = [8, 16], strides = [1, 1]} : vector<32x16xf32> to vector<8x16xf32>
    %cst_261 = arith.constant dense<0.000000e+00> : vector<1x16xf32>
    %502 = tpu.matmul %500, %501, %cst_261 {dimension_numbers = #tpu.dot_dimension_numbers<[1], [0], [0], [1], [0, 0, 1, 1], [], []>} : vector<1x8xf32>, vector<8x16xf32>, vector<1x16xf32> -> vector<1x16xf32>
    %503 = arith.addf %499, %502 : vector<1x16xf32>
    %504 = math.tanh %491 : vector<1x8xf32>
    %505 = vector.extract_strided_slice %482 {offsets = [24, 0], sizes = [8, 16], strides = [1, 1]} : vector<32x16xf32> to vector<8x16xf32>
    %cst_262 = arith.constant dense<0.000000e+00> : vector<1x16xf32>
    %506 = tpu.matmul %504, %505, %cst_262 {dimension_numbers = #tpu.dot_dimension_numbers<[1], [0], [0], [1], [0, 0, 1, 1], [], []>} : vector<1x8xf32>, vector<8x16xf32>, vector<1x16xf32> -> vector<1x16xf32>
    %507 = arith.addf %503, %506 : vector<1x16xf32>
    %508 = math.tanh %507 : vector<1x16xf32>
    %cst_263 = arith.constant dense<0.000000e+00> : vector<1x3xf32>
    %509 = tpu.matmul %508, %484, %cst_263 {dimension_numbers = #tpu.dot_dimension_numbers<[1], [0], [0], [1], [0, 0, 1, 1], [], []>} : vector<1x16xf32>, vector<16x3xf32>, vector<1x3xf32> -> vector<1x3xf32>
    %510 = arith.addf %509, %485 : vector<1x3xf32>
    %cst_264 = arith.constant dense<0xFF800000> : vector<8xf32>
    %511 = vector.multi_reduction <maximumf>, %371, %cst_264 [0] : vector<8x8xf32> to vector<8xf32>
    %512 = vector.shape_cast %511 : vector<8xf32> to vector<1x8xf32>
    %513 = math.tanh %512 : vector<1x8xf32>
    %cst_265 = arith.constant dense<0xFF800000> : vector<8xf32>
    %514 = vector.multi_reduction <maximumf>, %449, %cst_265 [0] : vector<8x8xf32> to vector<8xf32>
    %515 = vector.shape_cast %514 : vector<8xf32> to vector<1x8xf32>
    %516 = math.tanh %515 : vector<1x8xf32>
    %517 = math.tanh %32 : vector<1x8xf32>
    %518 = vector.extract_strided_slice %482 {offsets = [0, 0], sizes = [8, 16], strides = [1, 1]} : vector<32x16xf32> to vector<8x16xf32>
    %cst_266 = arith.constant dense<0.000000e+00> : vector<1x16xf32>
    %519 = tpu.matmul %517, %518, %cst_266 {dimension_numbers = #tpu.dot_dimension_numbers<[1], [0], [0], [1], [0, 0, 1, 1], [], []>} : vector<1x8xf32>, vector<8x16xf32>, vector<1x16xf32> -> vector<1x16xf32>
    %520 = arith.addf %483, %519 : vector<1x16xf32>
    %521 = math.tanh %63 : vector<1x8xf32>
    %522 = vector.extract_strided_slice %482 {offsets = [8, 0], sizes = [8, 16], strides = [1, 1]} : vector<32x16xf32> to vector<8x16xf32>
    %cst_267 = arith.constant dense<0.000000e+00> : vector<1x16xf32>
    %523 = tpu.matmul %521, %522, %cst_267 {dimension_numbers = #tpu.dot_dimension_numbers<[1], [0], [0], [1], [0, 0, 1, 1], [], []>} : vector<1x8xf32>, vector<8x16xf32>, vector<1x16xf32> -> vector<1x16xf32>
    %524 = arith.addf %520, %523 : vector<1x16xf32>
    %525 = math.tanh %513 : vector<1x8xf32>
    %526 = vector.extract_strided_slice %482 {offsets = [16, 0], sizes = [8, 16], strides = [1, 1]} : vector<32x16xf32> to vector<8x16xf32>
    %cst_268 = arith.constant dense<0.000000e+00> : vector<1x16xf32>
    %527 = tpu.matmul %525, %526, %cst_268 {dimension_numbers = #tpu.dot_dimension_numbers<[1], [0], [0], [1], [0, 0, 1, 1], [], []>} : vector<1x8xf32>, vector<8x16xf32>, vector<1x16xf32> -> vector<1x16xf32>
    %528 = arith.addf %524, %527 : vector<1x16xf32>
    %529 = math.tanh %516 : vector<1x8xf32>
    %530 = vector.extract_strided_slice %482 {offsets = [24, 0], sizes = [8, 16], strides = [1, 1]} : vector<32x16xf32> to vector<8x16xf32>
    %cst_269 = arith.constant dense<0.000000e+00> : vector<1x16xf32>
    %531 = tpu.matmul %529, %530, %cst_269 {dimension_numbers = #tpu.dot_dimension_numbers<[1], [0], [0], [1], [0, 0, 1, 1], [], []>} : vector<1x8xf32>, vector<8x16xf32>, vector<1x16xf32> -> vector<1x16xf32>
    %532 = arith.addf %528, %531 : vector<1x16xf32>
    %533 = math.tanh %532 : vector<1x16xf32>
    %cst_270 = arith.constant dense<0.000000e+00> : vector<1x3xf32>
    %534 = tpu.matmul %533, %484, %cst_270 {dimension_numbers = #tpu.dot_dimension_numbers<[1], [0], [0], [1], [0, 0, 1, 1], [], []>} : vector<1x16xf32>, vector<16x3xf32>, vector<1x3xf32> -> vector<1x3xf32>
    %535 = arith.addf %534, %485 : vector<1x3xf32>
    %536 = tpu.concatenate %510, %535 in 0 : vector<1x3xf32>, vector<1x3xf32> -> vector<2x3xf32>
    %c0_271 = arith.constant 0 : index
    %c0_272 = arith.constant 0 : index
    %537 = vector.load %arg26[%c0_271, %c0_272] : memref<2x3xf32, #tpu.memory_space<vmem>>, vector<2x3xf32>
    tpu.vector_store %arg26[%c0_271, %c0_272], %536 {strides = array<i32>} : memref<2x3xf32, #tpu.memory_space<vmem>>, vector<2x3xf32>,
    return
  }
}

</mosaic_0001>

<llo_original>
// kernel: forward.1
$region0: #{forward.1}
  #allocation0 [shape = 'u32[]', space=smem, size = 0x4, offset = 0x4, fixed_abs, tag = 'smem constant byte address 0x4 - core index']
  #allocation1 [shape = 'u32[144,128]{1,0:T(1,128)}', space=vmem, size = 0x12000, scoped, tag = 'internal scratch']
  %s0 = inlined_call_operand.vmem [shape: s32[16,1], index: 0, kind: input, shape index: {}]
  %s1 = inlined_call_operand.vmem [shape: f32[128,16], index: 1, kind: input, shape index: {}]
  %s2 = inlined_call_operand.vmem [shape: f32[2,16,8], index: 2, kind: input, shape index: {}]
  %s3 = inlined_call_operand.vmem [shape: f32[1,8], index: 3, kind: input, shape index: {}]
  %s4 = inlined_call_operand.vmem [shape: f32[3,16,8], index: 4, kind: input, shape index: {}]
  %s5 = inlined_call_operand.vmem [shape: f32[1,8], index: 5, kind: input, shape index: {}]
  %s6 = inlined_call_operand.vmem [shape: f32[3,16,8], index: 6, kind: input, shape index: {}]
  %s7 = inlined_call_operand.vmem [shape: f32[3,1,8], index: 7, kind: input, shape index: {}]
  %s8 = inlined_call_operand.vmem [shape: f32[3,8,8], index: 8, kind: input, shape index: {}]
  %s9 = inlined_call_operand.vmem [shape: f32[3,1,8], index: 9, kind: input, shape index: {}]
  %s10 = inlined_call_operand.vmem [shape: f32[3,16,8], index: 10, kind: input, shape index: {}]
  %s11 = inlined_call_operand.vmem [shape: f32[3,1,8], index: 11, kind: input, shape index: {}]
  %s12 = inlined_call_operand.vmem [shape: f32[3,8,8], index: 12, kind: input, shape index: {}]
  %s13 = inlined_call_operand.vmem [shape: f32[3,1,8], index: 13, kind: input, shape index: {}]
  %s14 = inlined_call_operand.vmem [shape: f32[3,16,8], index: 14, kind: input, shape index: {}]
  %s15 = inlined_call_operand.vmem [shape: f32[3,1,8], index: 15, kind: input, shape index: {}]
  %s16 = inlined_call_operand.vmem [shape: f32[3,8,8], index: 16, kind: input, shape index: {}]
  %s17 = inlined_call_operand.vmem [shape: f32[3,1,8], index: 17, kind: input, shape index: {}]
  %s18 = inlined_call_operand.vmem [shape: f32[3,16,8], index: 18, kind: input, shape index: {}]
  %s19 = inlined_call_operand.vmem [shape: f32[3,1,8], index: 19, kind: input, shape index: {}]
  %s20 = inlined_call_operand.vmem [shape: f32[3,8,8], index: 20, kind: input, shape index: {}]
  %s21 = inlined_call_operand.vmem [shape: f32[3,1,8], index: 21, kind: input, shape index: {}]
  %s22 = inlined_call_operand.vmem [shape: f32[32,16], index: 22, kind: input, shape index: {}]
  %s23 = inlined_call_operand.vmem [shape: f32[1,16], index: 23, kind: input, shape index: {}]
  %s24 = inlined_call_operand.vmem [shape: f32[16,3], index: 24, kind: input, shape index: {}]
  %s25 = inlined_call_operand.vmem [shape: f32[1,3], index: 25, kind: input, shape index: {}]
  %s26 = inlined_call_operand.hbm [shape: f32[2,3], index: 26, kind: output, shape index: {}]
  %s27 = sld [smem:[#allocation0]]
  $region114: #{forward.1} parent=0
    _
  %s29 = ssub.s32 1, %s27
  %s30 = scalar_select 0, %s29, %s27
  $region1: #{forward.1} parent=0
    #allocation2 [shape = 'u8[1024]{0}', space=vmem, size = 0x400, scoped, tag = 'output window, operand 0, single buffered']
    #allocation3 [shape = 's32[1]{0}', space=sflag, size = 0x4, scoped, tag = 'scoped memory for forward.1']
    %31 = vsyncpa [#allocation3], 0
    // Predicated region
    $region2: #{forward.1} parent=1 // pred_check
      _
    $region3: #{forward.1} parent=1 // pred_check_branch
      %33 = sbr.rel (0) target = $region5
    $region4: #{forward.1} parent=1 // pred_region
      _
    $region5: #{forward.1} parent=1 // pred_fallthru
      _
    // Predicated region
    $region6: #{forward.1} parent=1 // pred_check
      _
    $region7: #{forward.1} parent=1 // pred_check_branch
      %35 = sbr.rel (0) target = $region9
    $region8: #{forward.1} parent=1 // pred_region
      _
    $region9: #{forward.1} parent=1 // pred_fallthru
      _
    // Predicated region
    $region10: #{forward.1} parent=1 // pred_check
      _
    $region11: #{forward.1} parent=1 // pred_check_branch
      %37 = sbr.rel (0) target = $region13
    $region12: #{forward.1} parent=1 // pred_region
      _
    $region13: #{forward.1} parent=1 // pred_fallthru
      _
    // Predicated region
    $region14: #{forward.1} parent=1 // pred_check
      _
    $region15: #{forward.1} parent=1 // pred_check_branch
      %39 = sbr.rel (0) target = $region17
    $region16: #{forward.1} parent=1 // pred_region
      _
    $region17: #{forward.1} parent=1 // pred_fallthru
      _
    // Predicated region
    $region18: #{forward.1} parent=1 // pred_check
      _
    $region19: #{forward.1} parent=1 // pred_check_branch
      %41 = sbr.rel (0) target = $region21
    $region20: #{forward.1} parent=1 // pred_region
      _
    $region21: #{forward.1} parent=1 // pred_fallthru
      _
    // Predicated region
    $region22: #{forward.1} parent=1 // pred_check
      _
    $region23: #{forward.1} parent=1 // pred_check_branch
      %43 = sbr.rel (0) target = $region25
    $region24: #{forward.1} parent=1 // pred_region
      _
    $region25: #{forward.1} parent=1 // pred_fallthru
      _
    // Predicated region
    $region26: #{forward.1} parent=1 // pred_check
      _
    $region27: #{forward.1} parent=1 // pred_check_branch
      %45 = sbr.rel (0) target = $region29
    $region28: #{forward.1} parent=1 // pred_region
      _
    $region29: #{forward.1} parent=1 // pred_fallthru
      _
    // Predicated region
    $region30: #{forward.1} parent=1 // pred_check
      _
    $region31: #{forward.1} parent=1 // pred_check_branch
      %47 = sbr.rel (0) target = $region33
    $region32: #{forward.1} parent=1 // pred_region
      _
    $region33: #{forward.1} parent=1 // pred_fallthru
      _
    // Predicated region
    $region34: #{forward.1} parent=1 // pred_check
      _
    $region35: #{forward.1} parent=1 // pred_check_branch
      %49 = sbr.rel (0) target = $region37
    $region36: #{forward.1} parent=1 // pred_region
      _
    $region37: #{forward.1} parent=1 // pred_fallthru
      _
    // Predicated region
    $region38: #{forward.1} parent=1 // pred_check
      _
    $region39: #{forward.1} parent=1 // pred_check_branch
      %51 = sbr.rel (0) target = $region41
    $region40: #{forward.1} parent=1 // pred_region
      _
    $region41: #{forward.1} parent=1 // pred_fallthru
      _
    // Predicated region
    $region42: #{forward.1} parent=1 // pred_check
      _
    $region43: #{forward.1} parent=1 // pred_check_branch
      %53 = sbr.rel (0) target = $region45
    $region44: #{forward.1} parent=1 // pred_region
      _
    $region45: #{forward.1} parent=1 // pred_fallthru
      _
    // Predicated region
    $region46: #{forward.1} parent=1 // pred_check
      _
    $region47: #{forward.1} parent=1 // pred_check_branch
      %55 = sbr.rel (0) target = $region49
    $region48: #{forward.1} parent=1 // pred_region
      _
    $region49: #{forward.1} parent=1 // pred_fallthru
      _
    // Predicated region
    $region50: #{forward.1} parent=1 // pred_check
      _
    $region51: #{forward.1} parent=1 // pred_check_branch
      %57 = sbr.rel (0) target = $region53
    $region52: #{forward.1} parent=1 // pred_region
      _
    $region53: #{forward.1} parent=1 // pred_fallthru
      _
    // Predicated region
    $region54: #{forward.1} parent=1 // pred_check
      _
    $region55: #{forward.1} parent=1 // pred_check_branch
      %59 = sbr.rel (0) target = $region57
    $region56: #{forward.1} parent=1 // pred_region
      _
    $region57: #{forward.1} parent=1 // pred_fallthru
      _
    // Predicated region
    $region58: #{forward.1} parent=1 // pred_check
      _
    $region59: #{forward.1} parent=1 // pred_check_branch
      %61 = sbr.rel (0) target = $region61
    $region60: #{forward.1} parent=1 // pred_region
      _
    $region61: #{forward.1} parent=1 // pred_fallthru
      _
    // Predicated region
    $region62: #{forward.1} parent=1 // pred_check
      _
    $region63: #{forward.1} parent=1 // pred_check_branch
      %63 = sbr.rel (0) target = $region65
    $region64: #{forward.1} parent=1 // pred_region
      _
    $region65: #{forward.1} parent=1 // pred_fallthru
      _
    // Predicated region
    $region66: #{forward.1} parent=1 // pred_check
      _
    $region67: #{forward.1} parent=1 // pred_check_branch
      %65 = sbr.rel (0) target = $region69
    $region68: #{forward.1} parent=1 // pred_region
      _
    $region69: #{forward.1} parent=1 // pred_fallthru
      _
    // Predicated region
    $region70: #{forward.1} parent=1 // pred_check
      _
    $region71: #{forward.1} parent=1 // pred_check_branch
      %67 = sbr.rel (0) target = $region73
    $region72: #{forward.1} parent=1 // pred_region
      _
    $region73: #{forward.1} parent=1 // pred_fallthru
      _
    // Predicated region
    $region74: #{forward.1} parent=1 // pred_check
      _
    $region75: #{forward.1} parent=1 // pred_check_branch
      %69 = sbr.rel (0) target = $region77
    $region76: #{forward.1} parent=1 // pred_region
      _
    $region77: #{forward.1} parent=1 // pred_fallthru
      _
    // Predicated region
    $region78: #{forward.1} parent=1 // pred_check
      _
    $region79: #{forward.1} parent=1 // pred_check_branch
      %71 = sbr.rel (0) target = $region81
    $region80: #{forward.1} parent=1 // pred_region
      _
    $region81: #{forward.1} parent=1 // pred_fallthru
      _
    // Predicated region
    $region82: #{forward.1} parent=1 // pred_check
      _
    $region83: #{forward.1} parent=1 // pred_check_branch
      %73 = sbr.rel (0) target = $region85
    $region84: #{forward.1} parent=1 // pred_region
      _
    $region85: #{forward.1} parent=1 // pred_fallthru
      _
    // Predicated region
    $region86: #{forward.1} parent=1 // pred_check
      _
    $region87: #{forward.1} parent=1 // pred_check_branch
      %75 = sbr.rel (0) target = $region89
    $region88: #{forward.1} parent=1 // pred_region
      _
    $region89: #{forward.1} parent=1 // pred_fallthru
      _
    // Predicated region
    $region90: #{forward.1} parent=1 // pred_check
      _
    $region91: #{forward.1} parent=1 // pred_check_branch
      %77 = sbr.rel (0) target = $region93
    $region92: #{forward.1} parent=1 // pred_region
      _
    $region93: #{forward.1} parent=1 // pred_fallthru
      _
    // Predicated region
    $region94: #{forward.1} parent=1 // pred_check
      _
    $region95: #{forward.1} parent=1 // pred_check_branch
      %79 = sbr.rel (0) target = $region97
    $region96: #{forward.1} parent=1 // pred_region
      _
    $region97: #{forward.1} parent=1 // pred_fallthru
      _
    // Predicated region
    $region98: #{forward.1} parent=1 // pred_check
      _
    $region99: #{forward.1} parent=1 // pred_check_branch
      %81 = sbr.rel (0) target = $region101
    $region100: #{forward.1} parent=1 // pred_region
      _
    $region101: #{forward.1} parent=1 // pred_fallthru
      _
    // Predicated region
    $region102: #{forward.1} parent=1 // pred_check
      _
    $region103: #{forward.1} parent=1 // pred_check_branch
      %83 = sbr.rel (0) target = $region105
    $region104: #{forward.1} parent=1 // pred_region
      _
    $region105: #{forward.1} parent=1 // pred_fallthru
      _
    %v84 = vld [vmem:[%s0] sm:$0xff]
    %v85 = vld [vmem:[%s0 + $0x8] sm:$0xff]
    %v86 = vlaneseq
    %v87 = vand.u32 %v86, 127
    %88 = vset.pattern.permute.xlu0 0
    %89 = vperm.xlu0 %88, %v84
    %v90 = vpop.permute.xlu0 %89
    %91 = vset.pattern.permute.xlu0 0
    %92 = vperm.xlu0 %91, %v85
    %v93 = vpop.permute.xlu0 %92
    %vm94 = vcmp.eq.s32.totalorder %v90, %v87
    %vm95 = vcmp.eq.s32.totalorder %v93, %v87
    %v96 = vsel %vm94, 1.0, 0.0
    %v97 = vsel %vm95, 1.0, 0.0
    %v98 = vld [vmem:[%s1] sm:$0xff]
    %v99 = vld [vmem:[%s1 + $0x8] sm:$0xff]
    %v100 = vld [vmem:[%s1 + $0x10] sm:$0xff]
    %v101 = vld [vmem:[%s1 + $0x18] sm:$0xff]
    %v102 = vld [vmem:[%s1 + $0x20] sm:$0xff]
    %v103 = vld [vmem:[%s1 + $0x28] sm:$0xff]
    %v104 = vld [vmem:[%s1 + $0x30] sm:$0xff]
    %v105 = vld [vmem:[%s1 + $0x38] sm:$0xff]
    %v106 = vld [vmem:[%s1 + $0x40] sm:$0xff]
    %v107 = vld [vmem:[%s1 + $0x48] sm:$0xff]
    %v108 = vld [vmem:[%s1 + $0x50] sm:$0xff]
    %v109 = vld [vmem:[%s1 + $0x58] sm:$0xff]
    %v110 = vld [vmem:[%s1 + $0x60] sm:$0xff]
    %v111 = vld [vmem:[%s1 + $0x68] sm:$0xff]
    %v112 = vld [vmem:[%s1 + $0x70] sm:$0xff]
    %v113 = vld [vmem:[%s1 + $0x78] sm:$0xff]
    %114 = vmatprep.subr.mxu0 0.0
    %115 = vmatpush1.msra.mxu0 %v113
    %116 = vmatprep.subr.mxu0 0.0
    %117 = vmatpush1.msra.mxu0 %v112
    %118 = vmatprep.subr.mxu0 0.0
    %119 = vmatpush1.msra.mxu0 %v111
    %120 = vmatprep.subr.mxu0 0.0
    %121 = vmatpush1.msra.mxu0 %v110
    %122 = vmatprep.subr.mxu0 0.0
    %123 = vmatpush1.msra.mxu0 %v109
    %124 = vmatprep.subr.mxu0 0.0
    %125 = vmatpush1.msra.mxu0 %v108
    %126 = vmatprep.subr.mxu0 0.0
    %127 = vmatpush1.msra.mxu0 %v107
    %128 = vmatprep.subr.mxu0 0.0
    %129 = vmatpush1.msra.mxu0 %v106
    %130 = vmatprep.subr.mxu0 0.0
    %131 = vmatpush1.msra.mxu0 %v105
    %132 = vmatprep.subr.mxu0 0.0
    %133 = vmatpush1.msra.mxu0 %v104
    %134 = vmatprep.subr.mxu0 0.0
    %135 = vmatpush1.msra.mxu0 %v103
    %136 = vmatprep.subr.mxu0 0.0
    %137 = vmatpush1.msra.mxu0 %v102
    %138 = vmatprep.subr.mxu0 0.0
    %139 = vmatpush1.msra.mxu0 %v101
    %140 = vmatprep.subr.mxu0 0.0
    %141 = vmatpush1.msra.mxu0 %v100
    %142 = vmatprep.subr.mxu0 0.0
    %143 = vmatpush1.msra.mxu0 %v99
    %144 = vmatprep.subr.mxu0 0.0
    %145 = vmatpush1.msra.mxu0 %v98
    %146 = vmatprep.subr.mxu0 0.0
    %147 = vmatpush2.msra.mxu0 0.0
    %148 = vmatprep.subr.mxu0 0.0
    %149 = vmatpush2.msra.mxu0 0.0
    %150 = vmatprep.subr.mxu0 0.0
    %151 = vmatpush2.msra.mxu0 0.0
    %152 = vmatprep.subr.mxu0 0.0
    %153 = vmatpush2.msra.mxu0 0.0
    %154 = vmatprep.subr.mxu0 0.0
    %155 = vmatpush2.msra.mxu0 0.0
    %156 = vmatprep.subr.mxu0 0.0
    %157 = vmatpush2.msra.mxu0 0.0
    %158 = vmatprep.subr.mxu0 0.0
    %159 = vmatpush2.msra.mxu0 0.0
    %160 = vmatprep.subr.mxu0 0.0
    %161 = vmatpush2.msra.mxu0 0.0
    %162 = vmatprep.subr.mxu0 0.0
    %163 = vmatpush2.msra.mxu0 0.0
    %164 = vmatprep.subr.mxu0 0.0
    %165 = vmatpush2.msra.mxu0 0.0
    %166 = vmatprep.subr.mxu0 0.0
    %167 = vmatpush2.msra.mxu0 0.0
    %168 = vmatprep.subr.mxu0 0.0
    %169 = vmatpush2.msra.mxu0 0.0
    %170 = vmatprep.subr.mxu0 0.0
    %171 = vmatpush2.msra.mxu0 0.0
    %172 = vmatprep.subr.mxu0 0.0
    %173 = vmatpush2.msra.mxu0 0.0
    %174 = vmatprep.subr.mxu0 0.0
    %175 = vmatpush2.msra.mxu0 0.0
    %176 = vmatprep.subr.mxu0 0.0
    %177 = vmatpush2.msra.mxu0 0.0
    %178 = vmatprep.mubr.f32.mxu0 0.0
    %179 = vmatmul.mubr.f32.gmra.mxu0 %v96
    %v180 = vpop.f32.mrf.mxu0
    %v181 = vadd.f32 0.0, %v180
    %v182 = vpop.f32.mrf.mxu0
    %183 = vmatprep.mubr.f32.mxu0 0.0
    %184 = vmatmul.mubr.f32.gmra.mxu0 %v97
    %v185 = vpop.f32.mrf.mxu0
    %v186 = vadd.f32 0.0, %v185
    %v187 = vpop.f32.mrf.mxu0
    %188 = vdwg.mxu0
    %v189 = vld [vmem:[%s2] sm:$0xff]
    %v190 = vld [vmem:[%s2 + $0x8] sm:$0xff]
    %vm191 = vcmask 130048
    %v193 = vsel %vm191, %v181, 0
    %v196 = vsel %vm191, %v186, 0
    %198 = vmatprep.subr.mxu0 0.0
    %199 = vmatpush1.msra.mxu0 0.0
    %200 = vmatprep.subr.mxu0 0.0
    %201 = vmatpush1.msra.mxu0 0.0
    %202 = vmatprep.subr.mxu0 0.0
    %203 = vmatpush1.msra.mxu0 0.0
    %204 = vmatprep.subr.mxu0 0.0
    %205 = vmatpush1.msra.mxu0 0.0
    %206 = vmatprep.subr.mxu0 0.0
    %207 = vmatpush1.msra.mxu0 0.0
    %208 = vmatprep.subr.mxu0 0.0
    %209 = vmatpush1.msra.mxu0 0.0
    %210 = vmatprep.subr.mxu0 0.0
    %211 = vmatpush1.msra.mxu0 0.0
    %212 = vmatprep.subr.mxu0 0.0
    %213 = vmatpush1.msra.mxu0 0.0
    %214 = vmatprep.subr.mxu0 0.0
    %215 = vmatpush1.msra.mxu0 0.0
    %216 = vmatprep.subr.mxu0 0.0
    %217 = vmatpush1.msra.mxu0 0.0
    %218 = vmatprep.subr.mxu0 0.0
    %219 = vmatpush1.msra.mxu0 0.0
    %220 = vmatprep.subr.mxu0 0.0
    %221 = vmatpush1.msra.mxu0 0.0
    %222 = vmatprep.subr.mxu0 0.0
    %223 = vmatpush1.msra.mxu0 0.0
    %224 = vmatprep.subr.mxu0 0.0
    %225 = vmatpush1.msra.mxu0 0.0
    %226 = vmatprep.subr.mxu0 0.0
    %227 = vmatpush1.msra.mxu0 %v190
    %228 = vmatprep.subr.mxu0 0.0
    %229 = vmatpush1.msra.mxu0 %v189
    %230 = vmatprep.subr.mxu0 0.0
    %231 = vmatpush2.msra.mxu0 0.0
    %232 = vmatprep.subr.mxu0 0.0
    %233 = vmatpush2.msra.mxu0 0.0
    %234 = vmatprep.subr.mxu0 0.0
    %235 = vmatpush2.msra.mxu0 0.0
    %236 = vmatprep.subr.mxu0 0.0
    %237 = vmatpush2.msra.mxu0 0.0
    %238 = vmatprep.subr.mxu0 0.0
    %239 = vmatpush2.msra.mxu0 0.0
    %240 = vmatprep.subr.mxu0 0.0
    %241 = vmatpush2.msra.mxu0 0.0
    %242 = vmatprep.subr.mxu0 0.0
    %243 = vmatpush2.msra.mxu0 0.0
    %244 = vmatprep.subr.mxu0 0.0
    %245 = vmatpush2.msra.mxu0 0.0
    %246 = vmatprep.subr.mxu0 0.0
    %247 = vmatpush2.msra.mxu0 0.0
    %248 = vmatprep.subr.mxu0 0.0
    %249 = vmatpush2.msra.mxu0 0.0
    %250 = vmatprep.subr.mxu0 0.0
    %251 = vmatpush2.msra.mxu0 0.0
    %252 = vmatprep.subr.mxu0 0.0
    %253 = vmatpush2.msra.mxu0 0.0
    %254 = vmatprep.subr.mxu0 0.0
    %255 = vmatpush2.msra.mxu0 0.0
    %256 = vmatprep.subr.mxu0 0.0
    %257 = vmatpush2.msra.mxu0 0.0
    %258 = vmatprep.subr.mxu0 0.0
    %259 = vmatpush2.msra.mxu0 0.0
    %260 = vmatprep.subr.mxu0 0.0
    %261 = vmatpush2.msra.mxu0 0.0
    %262 = vmatprep.mubr.f32.mxu0 0.0
    %263 = vmatmul.mubr.f32.gmra.mxu0 %v193
    %v264 = vpop.f32.mrf.mxu0
    %v265 = vadd.f32 0.0, %v264
    %v266 = vpop.f32.mrf.mxu0
    %267 = vmatprep.mubr.f32.mxu0 0.0
    %268 = vmatmul.mubr.f32.gmra.mxu0 %v196
    %v269 = vpop.f32.mrf.mxu0
    %v270 = vadd.f32 0.0, %v269
    %v271 = vpop.f32.mrf.mxu0
    %272 = vdwg.mxu0
    %s273 = scalar_lea.vmem %s2, 16
    %v274 = vld [vmem:[%s273] sm:$0xff]
    %v275 = vld [vmem:[%s273 + $0x8] sm:$0xff]
    %276 = vmatprep.subr.mxu0 0.0
    %277 = vmatpush1.msra.mxu0 0.0
    %278 = vmatprep.subr.mxu0 0.0
    %279 = vmatpush1.msra.mxu0 0.0
    %280 = vmatprep.subr.mxu0 0.0
    %281 = vmatpush1.msra.mxu0 0.0
    %282 = vmatprep.subr.mxu0 0.0
    %283 = vmatpush1.msra.mxu0 0.0
    %284 = vmatprep.subr.mxu0 0.0
    %285 = vmatpush1.msra.mxu0 0.0
    %286 = vmatprep.subr.mxu0 0.0
    %287 = vmatpush1.msra.mxu0 0.0
    %288 = vmatprep.subr.mxu0 0.0
    %289 = vmatpush1.msra.mxu0 0.0
    %290 = vmatprep.subr.mxu0 0.0
    %291 = vmatpush1.msra.mxu0 0.0
    %292 = vmatprep.subr.mxu0 0.0
    %293 = vmatpush1.msra.mxu0 0.0
    %294 = vmatprep.subr.mxu0 0.0
    %295 = vmatpush1.msra.mxu0 0.0
    %296 = vmatprep.subr.mxu0 0.0
    %297 = vmatpush1.msra.mxu0 0.0
    %298 = vmatprep.subr.mxu0 0.0
    %299 = vmatpush1.msra.mxu0 0.0
    %300 = vmatprep.subr.mxu0 0.0
    %301 = vmatpush1.msra.mxu0 0.0
    %302 = vmatprep.subr.mxu0 0.0
    %303 = vmatpush1.msra.mxu0 0.0
    %304 = vmatprep.subr.mxu0 0.0
    %305 = vmatpush1.msra.mxu0 %v275
    %306 = vmatprep.subr.mxu0 0.0
    %307 = vmatpush1.msra.mxu0 %v274
    %308 = vmatprep.subr.mxu0 0.0
    %309 = vmatpush2.msra.mxu0 0.0
    %310 = vmatprep.subr.mxu0 0.0
    %311 = vmatpush2.msra.mxu0 0.0
    %312 = vmatprep.subr.mxu0 0.0
    %313 = vmatpush2.msra.mxu0 0.0
    %314 = vmatprep.subr.mxu0 0.0
    %315 = vmatpush2.msra.mxu0 0.0
    %316 = vmatprep.subr.mxu0 0.0
    %317 = vmatpush2.msra.mxu0 0.0
    %318 = vmatprep.subr.mxu0 0.0
    %319 = vmatpush2.msra.mxu0 0.0
    %320 = vmatprep.subr.mxu0 0.0
    %321 = vmatpush2.msra.mxu0 0.0
    %322 = vmatprep.subr.mxu0 0.0
    %323 = vmatpush2.msra.mxu0 0.0
    %324 = vmatprep.subr.mxu0 0.0
    %325 = vmatpush2.msra.mxu0 0.0
    %326 = vmatprep.subr.mxu0 0.0
    %327 = vmatpush2.msra.mxu0 0.0
    %328 = vmatprep.subr.mxu0 0.0
    %329 = vmatpush2.msra.mxu0 0.0
    %330 = vmatprep.subr.mxu0 0.0
    %331 = vmatpush2.msra.mxu0 0.0
    %332 = vmatprep.subr.mxu0 0.0
    %333 = vmatpush2.msra.mxu0 0.0
    %334 = vmatprep.subr.mxu0 0.0
    %335 = vmatpush2.msra.mxu0 0.0
    %336 = vmatprep.subr.mxu0 0.0
    %337 = vmatpush2.msra.mxu0 0.0
    %338 = vmatprep.subr.mxu0 0.0
    %339 = vmatpush2.msra.mxu0 0.0
    %340 = vmatprep.mubr.f32.mxu0 0.0
    %341 = vmatmul.mubr.f32.gmra.mxu0 %v193
    %v342 = vpop.f32.mrf.mxu0
    %v343 = vadd.f32 0.0, %v342
    %v344 = vpop.f32.mrf.mxu0
    %345 = vmatprep.mubr.f32.mxu0 0.0
    %346 = vmatmul.mubr.f32.gmra.mxu0 %v196
    %v347 = vpop.f32.mrf.mxu0
    %v348 = vadd.f32 0.0, %v347
    %v349 = vpop.f32.mrf.mxu0
    %350 = vdwg.mxu0
    %v352 = vrot.slane %v343, 1
    %v354 = vadd.f32 %v265, %v352
    %v355 = vld [vmem:[%s3] sm:$0x1]
    %v357 = vlaneseq
    %v358 = vshrl.u32 %v357, 7
    %v359 = vsub.s32 0, %v358
    %v360 = vrot.slane %v355, %v359
    %v362 = vadd.f32 %v354, %v360
    %vm363 = vcmask 63488
    %v364 = vsel %vm363, %v362, -inf
    %v365 = vrot.slane %v364, 4
    %v366 = vmax.f32 %v364, %v365
    %v367 = vrot.slane %v366, 2
    %v368 = vmax.f32 %v366, %v367
    %v369 = vrot.slane %v368, 1
    %v370 = vmax.f32 %v368, %v369
    %v371 = vtanh.pop %v370
    %v373 = vrot.slane %v348, 1
    %v375 = vadd.f32 %v270, %v373
    %v376 = vadd.f32 %v375, %v360
    %v377 = vsel %vm363, %v376, -inf
    %v378 = vrot.slane %v377, 4
    %v379 = vmax.f32 %v377, %v378
    %v380 = vrot.slane %v379, 2
    %v381 = vmax.f32 %v379, %v380
    %v382 = vrot.slane %v381, 1
    %v383 = vmax.f32 %v381, %v382
    %v384 = vtanh.pop %v383
    %v385 = vld [vmem:[%s4] sm:$0xff]
    %v386 = vld [vmem:[%s4 + $0x8] sm:$0xff]
    %387 = vmatprep.subr.mxu0 0.0
    %388 = vmatpush1.msra.mxu0 0.0
    %389 = vmatprep.subr.mxu0 0.0
    %390 = vmatpush1.msra.mxu0 0.0
    %391 = vmatprep.subr.mxu0 0.0
    %392 = vmatpush1.msra.mxu0 0.0
    %393 = vmatprep.subr.mxu0 0.0
    %394 = vmatpush1.msra.mxu0 0.0
    %395 = vmatprep.subr.mxu0 0.0
    %396 = vmatpush1.msra.mxu0 0.0
    %397 = vmatprep.subr.mxu0 0.0
    %398 = vmatpush1.msra.mxu0 0.0
    %399 = vmatprep.subr.mxu0 0.0
    %400 = vmatpush1.msra.mxu0 0.0
    %401 = vmatprep.subr.mxu0 0.0
    %402 = vmatpush1.msra.mxu0 0.0
    %403 = vmatprep.subr.mxu0 0.0
    %404 = vmatpush1.msra.mxu0 0.0
    %405 = vmatprep.subr.mxu0 0.0
    %406 = vmatpush1.msra.mxu0 0.0
    %407 = vmatprep.subr.mxu0 0.0
    %408 = vmatpush1.msra.mxu0 0.0
    %409 = vmatprep.subr.mxu0 0.0
    %410 = vmatpush1.msra.mxu0 0.0
    %411 = vmatprep.subr.mxu0 0.0
    %412 = vmatpush1.msra.mxu0 0.0
    %413 = vmatprep.subr.mxu0 0.0
    %414 = vmatpush1.msra.mxu0 0.0
    %415 = vmatprep.subr.mxu0 0.0
    %416 = vmatpush1.msra.mxu0 %v386
    %417 = vmatprep.subr.mxu0 0.0
    %418 = vmatpush1.msra.mxu0 %v385
    %419 = vmatprep.subr.mxu0 0.0
    %420 = vmatpush2.msra.mxu0 0.0
    %421 = vmatprep.subr.mxu0 0.0
    %422 = vmatpush2.msra.mxu0 0.0
    %423 = vmatprep.subr.mxu0 0.0
    %424 = vmatpush2.msra.mxu0 0.0
    %425 = vmatprep.subr.mxu0 0.0
    %426 = vmatpush2.msra.mxu0 0.0
    %427 = vmatprep.subr.mxu0 0.0
    %428 = vmatpush2.msra.mxu0 0.0
    %429 = vmatprep.subr.mxu0 0.0
    %430 = vmatpush2.msra.mxu0 0.0
    %431 = vmatprep.subr.mxu0 0.0
    %432 = vmatpush2.msra.mxu0 0.0
    %433 = vmatprep.subr.mxu0 0.0
    %434 = vmatpush2.msra.mxu0 0.0
    %435 = vmatprep.subr.mxu0 0.0
    %436 = vmatpush2.msra.mxu0 0.0
    %437 = vmatprep.subr.mxu0 0.0
    %438 = vmatpush2.msra.mxu0 0.0
    %439 = vmatprep.subr.mxu0 0.0
    %440 = vmatpush2.msra.mxu0 0.0
    %441 = vmatprep.subr.mxu0 0.0
    %442 = vmatpush2.msra.mxu0 0.0
    %443 = vmatprep.subr.mxu0 0.0
    %444 = vmatpush2.msra.mxu0 0.0
    %445 = vmatprep.subr.mxu0 0.0
    %446 = vmatpush2.msra.mxu0 0.0
    %447 = vmatprep.subr.mxu0 0.0
    %448 = vmatpush2.msra.mxu0 0.0
    %449 = vmatprep.subr.mxu0 0.0
    %450 = vmatpush2.msra.mxu0 0.0
    %451 = vmatprep.mubr.f32.mxu0 0.0
    %452 = vmatmul.mubr.f32.gmra.mxu0 %v193
    %v453 = vpop.f32.mrf.mxu0
    %v454 = vadd.f32 0.0, %v453
    %v455 = vpop.f32.mrf.mxu0
    %456 = vmatprep.mubr.f32.mxu0 0.0
    %457 = vmatmul.mubr.f32.gmra.mxu0 %v196
    %v458 = vpop.f32.mrf.mxu0
    %v459 = vadd.f32 0.0, %v458
    %v460 = vpop.f32.mrf.mxu0
    %461 = vdwg.mxu0
    %s462 = scalar_lea.vmem %s4, 16
    %v463 = vld [vmem:[%s462] sm:$0xff]
    %v464 = vld [vmem:[%s462 + $0x8] sm:$0xff]
    %465 = vmatprep.subr.mxu0 0.0
    %466 = vmatpush1.msra.mxu0 0.0
    %467 = vmatprep.subr.mxu0 0.0
    %468 = vmatpush1.msra.mxu0 0.0
    %469 = vmatprep.subr.mxu0 0.0
    %470 = vmatpush1.msra.mxu0 0.0
    %471 = vmatprep.subr.mxu0 0.0
    %472 = vmatpush1.msra.mxu0 0.0
    %473 = vmatprep.subr.mxu0 0.0
    %474 = vmatpush1.msra.mxu0 0.0
    %475 = vmatprep.subr.mxu0 0.0
    %476 = vmatpush1.msra.mxu0 0.0
    %477 = vmatprep.subr.mxu0 0.0
    %478 = vmatpush1.msra.mxu0 0.0
    %479 = vmatprep.subr.mxu0 0.0
    %480 = vmatpush1.msra.mxu0 0.0
    %481 = vmatprep.subr.mxu0 0.0
    %482 = vmatpush1.msra.mxu0 0.0
    %483 = vmatprep.subr.mxu0 0.0
    %484 = vmatpush1.msra.mxu0 0.0
    %485 = vmatprep.subr.mxu0 0.0
    %486 = vmatpush1.msra.mxu0 0.0
    %487 = vmatprep.subr.mxu0 0.0
    %488 = vmatpush1.msra.mxu0 0.0
    %489 = vmatprep.subr.mxu0 0.0
    %490 = vmatpush1.msra.mxu0 0.0
    %491 = vmatprep.subr.mxu0 0.0
    %492 = vmatpush1.msra.mxu0 0.0
    %493 = vmatprep.subr.mxu0 0.0
    %494 = vmatpush1.msra.mxu0 %v464
    %495 = vmatprep.subr.mxu0 0.0
    %496 = vmatpush1.msra.mxu0 %v463
    %497 = vmatprep.subr.mxu0 0.0
    %498 = vmatpush2.msra.mxu0 0.0
    %499 = vmatprep.subr.mxu0 0.0
    %500 = vmatpush2.msra.mxu0 0.0
    %501 = vmatprep.subr.mxu0 0.0
    %502 = vmatpush2.msra.mxu0 0.0
    %503 = vmatprep.subr.mxu0 0.0
    %504 = vmatpush2.msra.mxu0 0.0
    %505 = vmatprep.subr.mxu0 0.0
    %506 = vmatpush2.msra.mxu0 0.0
    %507 = vmatprep.subr.mxu0 0.0
    %508 = vmatpush2.msra.mxu0 0.0
    %509 = vmatprep.subr.mxu0 0.0
    %510 = vmatpush2.msra.mxu0 0.0
    %511 = vmatprep.subr.mxu0 0.0
    %512 = vmatpush2.msra.mxu0 0.0
    %513 = vmatprep.subr.mxu0 0.0
    %514 = vmatpush2.msra.mxu0 0.0
    %515 = vmatprep.subr.mxu0 0.0
    %516 = vmatpush2.msra.mxu0 0.0
    %517 = vmatprep.subr.mxu0 0.0
    %518 = vmatpush2.msra.mxu0 0.0
    %519 = vmatprep.subr.mxu0 0.0
    %520 = vmatpush2.msra.mxu0 0.0
    %521 = vmatprep.subr.mxu0 0.0
    %522 = vmatpush2.msra.mxu0 0.0
    %523 = vmatprep.subr.mxu0 0.0
    %524 = vmatpush2.msra.mxu0 0.0
    %525 = vmatprep.subr.mxu0 0.0
    %526 = vmatpush2.msra.mxu0 0.0
    %527 = vmatprep.subr.mxu0 0.0
    %528 = vmatpush2.msra.mxu0 0.0
    %529 = vmatprep.mubr.f32.mxu0 0.0
    %530 = vmatmul.mubr.f32.gmra.mxu0 %v193
    %v531 = vpop.f32.mrf.mxu0
    %v532 = vadd.f32 0.0, %v531
    %v533 = vpop.f32.mrf.mxu0
    %534 = vmatprep.mubr.f32.mxu0 0.0
    %535 = vmatmul.mubr.f32.gmra.mxu0 %v196
    %v536 = vpop.f32.mrf.mxu0
    %v537 = vadd.f32 0.0, %v536
    %v538 = vpop.f32.mrf.mxu0
    %539 = vdwg.mxu0
    %s540 = scalar_lea.vmem %s4, 32
    %v541 = vld [vmem:[%s540] sm:$0xff]
    %v542 = vld [vmem:[%s540 + $0x8] sm:$0xff]
    %543 = vmatprep.subr.mxu0 0.0
    %544 = vmatpush1.msra.mxu0 0.0
    %545 = vmatprep.subr.mxu0 0.0
    %546 = vmatpush1.msra.mxu0 0.0
    %547 = vmatprep.subr.mxu0 0.0
    %548 = vmatpush1.msra.mxu0 0.0
    %549 = vmatprep.subr.mxu0 0.0
    %550 = vmatpush1.msra.mxu0 0.0
    %551 = vmatprep.subr.mxu0 0.0
    %552 = vmatpush1.msra.mxu0 0.0
    %553 = vmatprep.subr.mxu0 0.0
    %554 = vmatpush1.msra.mxu0 0.0
    %555 = vmatprep.subr.mxu0 0.0
    %556 = vmatpush1.msra.mxu0 0.0
    %557 = vmatprep.subr.mxu0 0.0
    %558 = vmatpush1.msra.mxu0 0.0
    %559 = vmatprep.subr.mxu0 0.0
    %560 = vmatpush1.msra.mxu0 0.0
    %561 = vmatprep.subr.mxu0 0.0
    %562 = vmatpush1.msra.mxu0 0.0
    %563 = vmatprep.subr.mxu0 0.0
    %564 = vmatpush1.msra.mxu0 0.0
    %565 = vmatprep.subr.mxu0 0.0
    %566 = vmatpush1.msra.mxu0 0.0
    %567 = vmatprep.subr.mxu0 0.0
    %568 = vmatpush1.msra.mxu0 0.0
    %569 = vmatprep.subr.mxu0 0.0
    %570 = vmatpush1.msra.mxu0 0.0
    %571 = vmatprep.subr.mxu0 0.0
    %572 = vmatpush1.msra.mxu0 %v542
    %573 = vmatprep.subr.mxu0 0.0
    %574 = vmatpush1.msra.mxu0 %v541
    %575 = vmatprep.subr.mxu0 0.0
    %576 = vmatpush2.msra.mxu0 0.0
    %577 = vmatprep.subr.mxu0 0.0
    %578 = vmatpush2.msra.mxu0 0.0
    %579 = vmatprep.subr.mxu0 0.0
    %580 = vmatpush2.msra.mxu0 0.0
    %581 = vmatprep.subr.mxu0 0.0
    %582 = vmatpush2.msra.mxu0 0.0
    %583 = vmatprep.subr.mxu0 0.0
    %584 = vmatpush2.msra.mxu0 0.0
    %585 = vmatprep.subr.mxu0 0.0
    %586 = vmatpush2.msra.mxu0 0.0
    %587 = vmatprep.subr.mxu0 0.0
    %588 = vmatpush2.msra.mxu0 0.0
    %589 = vmatprep.subr.mxu0 0.0
    %590 = vmatpush2.msra.mxu0 0.0
    %591 = vmatprep.subr.mxu0 0.0
    %592 = vmatpush2.msra.mxu0 0.0
    %593 = vmatprep.subr.mxu0 0.0
    %594 = vmatpush2.msra.mxu0 0.0
    %595 = vmatprep.subr.mxu0 0.0
    %596 = vmatpush2.msra.mxu0 0.0
    %597 = vmatprep.subr.mxu0 0.0
    %598 = vmatpush2.msra.mxu0 0.0
    %599 = vmatprep.subr.mxu0 0.0
    %600 = vmatpush2.msra.mxu0 0.0
    %601 = vmatprep.subr.mxu0 0.0
    %602 = vmatpush2.msra.mxu0 0.0
    %603 = vmatprep.subr.mxu0 0.0
    %604 = vmatpush2.msra.mxu0 0.0
    %605 = vmatprep.subr.mxu0 0.0
    %606 = vmatpush2.msra.mxu0 0.0
    %607 = vmatprep.mubr.f32.mxu0 0.0
    %608 = vmatmul.mubr.f32.gmra.mxu0 %v193
    %v609 = vpop.f32.mrf.mxu0
    %v610 = vadd.f32 0.0, %v609
    %v611 = vpop.f32.mrf.mxu0
    %612 = vmatprep.mubr.f32.mxu0 0.0
    %613 = vmatmul.mubr.f32.gmra.mxu0 %v196
    %v614 = vpop.f32.mrf.mxu0
    %v615 = vadd.f32 0.0, %v614
    %v616 = vpop.f32.mrf.mxu0
    %617 = vdwg.mxu0
    %v619 = vrot.slane %v532, 1
    %v621 = vadd.f32 %v454, %v619
    %v623 = vrot.slane %v610, 2
    %v625 = vadd.f32 %v621, %v623
    %v626 = vld [vmem:[%s5] sm:$0x1]
    %v628 = vlaneseq
    %v629 = vshrl.u32 %v628, 7
    %v630 = vsub.s32 0, %v629
    %v631 = vrot.slane %v626, %v630
    %v633 = vadd.f32 %v625, %v631
    %vm634 = vcmask 62464
    %v635 = vsel %vm634, %v633, -inf
    %v636 = vrot.slane %v635, 4
    %v637 = vmax.f32 %v635, %v636
    %v638 = vrot.slane %v637, 2
    %v639 = vmax.f32 %v637, %v638
    %v640 = vrot.slane %v639, 1
    %v641 = vmax.f32 %v639, %v640
    %v642 = vtanh.pop %v641
    %v644 = vrot.slane %v537, 1
    %v646 = vadd.f32 %v459, %v644
    %v648 = vrot.slane %v615, 2
    %v650 = vadd.f32 %v646, %v648
    %v651 = vadd.f32 %v650, %v631
    %v652 = vsel %vm634, %v651, -inf
    %v653 = vrot.slane %v652, 4
    %v654 = vmax.f32 %v652, %v653
    %v655 = vrot.slane %v654, 2
    %v656 = vmax.f32 %v654, %v655
    %v657 = vrot.slane %v656, 1
    %v658 = vmax.f32 %v656, %v657
    %v659 = vtanh.pop %v658
    %v660 = vld [vmem:[%s6] sm:$0xff]
    %v661 = vld [vmem:[%s6 + $0x8] sm:$0xff]
    %v662 = vld [vmem:[%s7] sm:$0x1]
    %v664 = vlaneseq
    %v665 = vshrl.u32 %v664, 7
    %v666 = vsub.s32 0, %v665
    %v667 = vrot.slane %v662, %v666
    %669 = vmatprep.subr.mxu0 0.0
    %670 = vmatpush1.msra.mxu0 0.0
    %671 = vmatprep.subr.mxu0 0.0
    %672 = vmatpush1.msra.mxu0 0.0
    %673 = vmatprep.subr.mxu0 0.0
    %674 = vmatpush1.msra.mxu0 0.0
    %675 = vmatprep.subr.mxu0 0.0
    %676 = vmatpush1.msra.mxu0 0.0
    %677 = vmatprep.subr.mxu0 0.0
    %678 = vmatpush1.msra.mxu0 0.0
    %679 = vmatprep.subr.mxu0 0.0
    %680 = vmatpush1.msra.mxu0 0.0
    %681 = vmatprep.subr.mxu0 0.0
    %682 = vmatpush1.msra.mxu0 0.0
    %683 = vmatprep.subr.mxu0 0.0
    %684 = vmatpush1.msra.mxu0 0.0
    %685 = vmatprep.subr.mxu0 0.0
    %686 = vmatpush1.msra.mxu0 0.0
    %687 = vmatprep.subr.mxu0 0.0
    %688 = vmatpush1.msra.mxu0 0.0
    %689 = vmatprep.subr.mxu0 0.0
    %690 = vmatpush1.msra.mxu0 0.0
    %691 = vmatprep.subr.mxu0 0.0
    %692 = vmatpush1.msra.mxu0 0.0
    %693 = vmatprep.subr.mxu0 0.0
    %694 = vmatpush1.msra.mxu0 0.0
    %695 = vmatprep.subr.mxu0 0.0
    %696 = vmatpush1.msra.mxu0 0.0
    %697 = vmatprep.subr.mxu0 0.0
    %698 = vmatpush1.msra.mxu0 %v661
    %699 = vmatprep.subr.mxu0 0.0
    %700 = vmatpush1.msra.mxu0 %v660
    %701 = vmatprep.subr.mxu0 0.0
    %702 = vmatpush2.msra.mxu0 0.0
    %703 = vmatprep.subr.mxu0 0.0
    %704 = vmatpush2.msra.mxu0 0.0
    %705 = vmatprep.subr.mxu0 0.0
    %706 = vmatpush2.msra.mxu0 0.0
    %707 = vmatprep.subr.mxu0 0.0
    %708 = vmatpush2.msra.mxu0 0.0
    %709 = vmatprep.subr.mxu0 0.0
    %710 = vmatpush2.msra.mxu0 0.0
    %711 = vmatprep.subr.mxu0 0.0
    %712 = vmatpush2.msra.mxu0 0.0
    %713 = vmatprep.subr.mxu0 0.0
    %714 = vmatpush2.msra.mxu0 0.0
    %715 = vmatprep.subr.mxu0 0.0
    %716 = vmatpush2.msra.mxu0 0.0
    %717 = vmatprep.subr.mxu0 0.0
    %718 = vmatpush2.msra.mxu0 0.0
    %719 = vmatprep.subr.mxu0 0.0
    %720 = vmatpush2.msra.mxu0 0.0
    %721 = vmatprep.subr.mxu0 0.0
    %722 = vmatpush2.msra.mxu0 0.0
    %723 = vmatprep.subr.mxu0 0.0
    %724 = vmatpush2.msra.mxu0 0.0
    %725 = vmatprep.subr.mxu0 0.0
    %726 = vmatpush2.msra.mxu0 0.0
    %727 = vmatprep.subr.mxu0 0.0
    %728 = vmatpush2.msra.mxu0 0.0
    %729 = vmatprep.subr.mxu0 0.0
    %730 = vmatpush2.msra.mxu0 0.0
    %731 = vmatprep.subr.mxu0 0.0
    %732 = vmatpush2.msra.mxu0 0.0
    %733 = vmatprep.mubr.f32.mxu0 0.0
    %734 = vmatmul.mubr.f32.gmra.mxu0 %v193
    %v735 = vpop.f32.mrf.mxu0
    %v736 = vadd.f32 %v667, %v735
    %v737 = vpop.f32.mrf.mxu0
    %738 = vmatprep.mubr.f32.mxu0 0.0
    %739 = vmatmul.mubr.f32.gmra.mxu0 %v196
    %v740 = vpop.f32.mrf.mxu0
    %v741 = vadd.f32 %v667, %v740
    %v742 = vpop.f32.mrf.mxu0
    %743 = vdwg.mxu0
    %s744 = scalar_lea.vmem %s6, 16
    %v745 = vld [vmem:[%s744] sm:$0xff]
    %v746 = vld [vmem:[%s744 + $0x8] sm:$0xff]
    %s747 = scalar_lea.vmem %s7, 1
    %v748 = vld [vmem:[%s747] sm:$0x1]
    %v750 = vlaneseq
    %v751 = vshrl.u32 %v750, 7
    %v752 = vsub.s32 0, %v751
    %v753 = vrot.slane %v748, %v752
    %755 = vmatprep.subr.mxu0 0.0
    %756 = vmatpush1.msra.mxu0 0.0
    %757 = vmatprep.subr.mxu0 0.0
    %758 = vmatpush1.msra.mxu0 0.0
    %759 = vmatprep.subr.mxu0 0.0
    %760 = vmatpush1.msra.mxu0 0.0
    %761 = vmatprep.subr.mxu0 0.0
    %762 = vmatpush1.msra.mxu0 0.0
    %763 = vmatprep.subr.mxu0 0.0
    %764 = vmatpush1.msra.mxu0 0.0
    %765 = vmatprep.subr.mxu0 0.0
    %766 = vmatpush1.msra.mxu0 0.0
    %767 = vmatprep.subr.mxu0 0.0
    %768 = vmatpush1.msra.mxu0 0.0
    %769 = vmatprep.subr.mxu0 0.0
    %770 = vmatpush1.msra.mxu0 0.0
    %771 = vmatprep.subr.mxu0 0.0
    %772 = vmatpush1.msra.mxu0 0.0
    %773 = vmatprep.subr.mxu0 0.0
    %774 = vmatpush1.msra.mxu0 0.0
    %775 = vmatprep.subr.mxu0 0.0
    %776 = vmatpush1.msra.mxu0 0.0
    %777 = vmatprep.subr.mxu0 0.0
    %778 = vmatpush1.msra.mxu0 0.0
    %779 = vmatprep.subr.mxu0 0.0
    %780 = vmatpush1.msra.mxu0 0.0
    %781 = vmatprep.subr.mxu0 0.0
    %782 = vmatpush1.msra.mxu0 0.0
    %783 = vmatprep.subr.mxu0 0.0
    %784 = vmatpush1.msra.mxu0 %v746
    %785 = vmatprep.subr.mxu0 0.0
    %786 = vmatpush1.msra.mxu0 %v745
    %787 = vmatprep.subr.mxu0 0.0
    %788 = vmatpush2.msra.mxu0 0.0
    %789 = vmatprep.subr.mxu0 0.0
    %790 = vmatpush2.msra.mxu0 0.0
    %791 = vmatprep.subr.mxu0 0.0
    %792 = vmatpush2.msra.mxu0 0.0
    %793 = vmatprep.subr.mxu0 0.0
    %794 = vmatpush2.msra.mxu0 0.0
    %795 = vmatprep.subr.mxu0 0.0
    %796 = vmatpush2.msra.mxu0 0.0
    %797 = vmatprep.subr.mxu0 0.0
    %798 = vmatpush2.msra.mxu0 0.0
    %799 = vmatprep.subr.mxu0 0.0
    %800 = vmatpush2.msra.mxu0 0.0
    %801 = vmatprep.subr.mxu0 0.0
    %802 = vmatpush2.msra.mxu0 0.0
    %803 = vmatprep.subr.mxu0 0.0
    %804 = vmatpush2.msra.mxu0 0.0
    %805 = vmatprep.subr.mxu0 0.0
    %806 = vmatpush2.msra.mxu0 0.0
    %807 = vmatprep.subr.mxu0 0.0
    %808 = vmatpush2.msra.mxu0 0.0
    %809 = vmatprep.subr.mxu0 0.0
    %810 = vmatpush2.msra.mxu0 0.0
    %811 = vmatprep.subr.mxu0 0.0
    %812 = vmatpush2.msra.mxu0 0.0
    %813 = vmatprep.subr.mxu0 0.0
    %814 = vmatpush2.msra.mxu0 0.0
    %815 = vmatprep.subr.mxu0 0.0
    %816 = vmatpush2.msra.mxu0 0.0
    %817 = vmatprep.subr.mxu0 0.0
    %818 = vmatpush2.msra.mxu0 0.0
    %819 = vmatprep.mubr.f32.mxu0 0.0
    %820 = vmatmul.mubr.f32.gmra.mxu0 %v193
    %v821 = vpop.f32.mrf.mxu0
    %v822 = vadd.f32 %v753, %v821
    %v823 = vpop.f32.mrf.mxu0
    %824 = vmatprep.mubr.f32.mxu0 0.0
    %825 = vmatmul.mubr.f32.gmra.mxu0 %v196
    %v826 = vpop.f32.mrf.mxu0
    %v827 = vadd.f32 %v753, %v826
    %v828 = vpop.f32.mrf.mxu0
    %829 = vdwg.mxu0
    %s830 = scalar_lea.vmem %s6, 32
    %v831 = vld [vmem:[%s830] sm:$0xff]
    %v832 = vld [vmem:[%s830 + $0x8] sm:$0xff]
    %s833 = scalar_lea.vmem %s7, 2
    %v834 = vld [vmem:[%s833] sm:$0x1]
    %v836 = vlaneseq
    %v837 = vshrl.u32 %v836, 7
    %v838 = vsub.s32 0, %v837
    %v839 = vrot.slane %v834, %v838
    %841 = vmatprep.subr.mxu0 0.0
    %842 = vmatpush1.msra.mxu0 0.0
    %843 = vmatprep.subr.mxu0 0.0
    %844 = vmatpush1.msra.mxu0 0.0
    %845 = vmatprep.subr.mxu0 0.0
    %846 = vmatpush1.msra.mxu0 0.0
    %847 = vmatprep.subr.mxu0 0.0
    %848 = vmatpush1.msra.mxu0 0.0
    %849 = vmatprep.subr.mxu0 0.0
    %850 = vmatpush1.msra.mxu0 0.0
    %851 = vmatprep.subr.mxu0 0.0
    %852 = vmatpush1.msra.mxu0 0.0
    %853 = vmatprep.subr.mxu0 0.0
    %854 = vmatpush1.msra.mxu0 0.0
    %855 = vmatprep.subr.mxu0 0.0
    %856 = vmatpush1.msra.mxu0 0.0
    %857 = vmatprep.subr.mxu0 0.0
    %858 = vmatpush1.msra.mxu0 0.0
    %859 = vmatprep.subr.mxu0 0.0
    %860 = vmatpush1.msra.mxu0 0.0
    %861 = vmatprep.subr.mxu0 0.0
    %862 = vmatpush1.msra.mxu0 0.0
    %863 = vmatprep.subr.mxu0 0.0
    %864 = vmatpush1.msra.mxu0 0.0
    %865 = vmatprep.subr.mxu0 0.0
    %866 = vmatpush1.msra.mxu0 0.0
    %867 = vmatprep.subr.mxu0 0.0
    %868 = vmatpush1.msra.mxu0 0.0
    %869 = vmatprep.subr.mxu0 0.0
    %870 = vmatpush1.msra.mxu0 %v832
    %871 = vmatprep.subr.mxu0 0.0
    %872 = vmatpush1.msra.mxu0 %v831
    %873 = vmatprep.subr.mxu0 0.0
    %874 = vmatpush2.msra.mxu0 0.0
    %875 = vmatprep.subr.mxu0 0.0
    %876 = vmatpush2.msra.mxu0 0.0
    %877 = vmatprep.subr.mxu0 0.0
    %878 = vmatpush2.msra.mxu0 0.0
    %879 = vmatprep.subr.mxu0 0.0
    %880 = vmatpush2.msra.mxu0 0.0
    %881 = vmatprep.subr.mxu0 0.0
    %882 = vmatpush2.msra.mxu0 0.0
    %883 = vmatprep.subr.mxu0 0.0
    %884 = vmatpush2.msra.mxu0 0.0
    %885 = vmatprep.subr.mxu0 0.0
    %886 = vmatpush2.msra.mxu0 0.0
    %887 = vmatprep.subr.mxu0 0.0
    %888 = vmatpush2.msra.mxu0 0.0
    %889 = vmatprep.subr.mxu0 0.0
    %890 = vmatpush2.msra.mxu0 0.0
    %891 = vmatprep.subr.mxu0 0.0
    %892 = vmatpush2.msra.mxu0 0.0
    %893 = vmatprep.subr.mxu0 0.0
    %894 = vmatpush2.msra.mxu0 0.0
    %895 = vmatprep.subr.mxu0 0.0
    %896 = vmatpush2.msra.mxu0 0.0
    %897 = vmatprep.subr.mxu0 0.0
    %898 = vmatpush2.msra.mxu0 0.0
    %899 = vmatprep.subr.mxu0 0.0
    %900 = vmatpush2.msra.mxu0 0.0
    %901 = vmatprep.subr.mxu0 0.0
    %902 = vmatpush2.msra.mxu0 0.0
    %903 = vmatprep.subr.mxu0 0.0
    %904 = vmatpush2.msra.mxu0 0.0
    %905 = vmatprep.mubr.f32.mxu0 0.0
    %906 = vmatmul.mubr.f32.gmra.mxu0 %v193
    %v907 = vpop.f32.mrf.mxu0
    %v908 = vadd.f32 %v839, %v907
    %v909 = vpop.f32.mrf.mxu0
    %910 = vmatprep.mubr.f32.mxu0 0.0
    %911 = vmatmul.mubr.f32.gmra.mxu0 %v196
    %v912 = vpop.f32.mrf.mxu0
    %v913 = vadd.f32 %v839, %v912
    %v914 = vpop.f32.mrf.mxu0
    %915 = vdwg.mxu0
    %v916 = vld [vmem:[%s8] sm:$0xff]
    %s917 = scalar_lea.vmem %s8, 8
    %v918 = vld [vmem:[%s917] sm:$0xff]
    %s919 = scalar_lea.vmem %s8, 16
    %v920 = vld [vmem:[%s919] sm:$0xff]
    %v921 = vld [vmem:[%s9] sm:$0x1]
    %s922 = scalar_lea.vmem %s9, 1
    %v923 = vld [vmem:[%s922] sm:$0x1]
    %s924 = scalar_lea.vmem %s9, 2
    %v925 = vld [vmem:[%s924] sm:$0x1]
    %v927 = vlaneseq
    %v928 = vshrl.u32 %v927, 7
    %v929 = vsub.s32 0, %v928
    %v930 = vrot.slane %v921, %v929
    %vm932 = vcmask 64512
    %v934 = vsel %vm932, 0.0, 0
    %936 = vmatprep.subr.mxu0 0.0
    %937 = vmatpush1.msra.mxu0 0.0
    %938 = vmatprep.subr.mxu0 0.0
    %939 = vmatpush1.msra.mxu0 0.0
    %940 = vmatprep.subr.mxu0 0.0
    %941 = vmatpush1.msra.mxu0 0.0
    %942 = vmatprep.subr.mxu0 0.0
    %943 = vmatpush1.msra.mxu0 0.0
    %944 = vmatprep.subr.mxu0 0.0
    %945 = vmatpush1.msra.mxu0 0.0
    %946 = vmatprep.subr.mxu0 0.0
    %947 = vmatpush1.msra.mxu0 0.0
    %948 = vmatprep.subr.mxu0 0.0
    %949 = vmatpush1.msra.mxu0 0.0
    %950 = vmatprep.subr.mxu0 0.0
    %951 = vmatpush1.msra.mxu0 0.0
    %952 = vmatprep.subr.mxu0 0.0
    %953 = vmatpush1.msra.mxu0 0.0
    %954 = vmatprep.subr.mxu0 0.0
    %955 = vmatpush1.msra.mxu0 0.0
    %956 = vmatprep.subr.mxu0 0.0
    %957 = vmatpush1.msra.mxu0 0.0
    %958 = vmatprep.subr.mxu0 0.0
    %959 = vmatpush1.msra.mxu0 0.0
    %960 = vmatprep.subr.mxu0 0.0
    %961 = vmatpush1.msra.mxu0 0.0
    %962 = vmatprep.subr.mxu0 0.0
    %963 = vmatpush1.msra.mxu0 0.0
    %964 = vmatprep.subr.mxu0 0.0
    %965 = vmatpush1.msra.mxu0 0.0
    %966 = vmatprep.subr.mxu0 0.0
    %967 = vmatpush1.msra.mxu0 %v916
    %968 = vmatprep.subr.mxu0 0.0
    %969 = vmatpush2.msra.mxu0 0.0
    %970 = vmatprep.subr.mxu0 0.0
    %971 = vmatpush2.msra.mxu0 0.0
    %972 = vmatprep.subr.mxu0 0.0
    %973 = vmatpush2.msra.mxu0 0.0
    %974 = vmatprep.subr.mxu0 0.0
    %975 = vmatpush2.msra.mxu0 0.0
    %976 = vmatprep.subr.mxu0 0.0
    %977 = vmatpush2.msra.mxu0 0.0
    %978 = vmatprep.subr.mxu0 0.0
    %979 = vmatpush2.msra.mxu0 0.0
    %980 = vmatprep.subr.mxu0 0.0
    %981 = vmatpush2.msra.mxu0 0.0
    %982 = vmatprep.subr.mxu0 0.0
    %983 = vmatpush2.msra.mxu0 0.0
    %984 = vmatprep.subr.mxu0 0.0
    %985 = vmatpush2.msra.mxu0 0.0
    %986 = vmatprep.subr.mxu0 0.0
    %987 = vmatpush2.msra.mxu0 0.0
    %988 = vmatprep.subr.mxu0 0.0
    %989 = vmatpush2.msra.mxu0 0.0
    %990 = vmatprep.subr.mxu0 0.0
    %991 = vmatpush2.msra.mxu0 0.0
    %992 = vmatprep.subr.mxu0 0.0
    %993 = vmatpush2.msra.mxu0 0.0
    %994 = vmatprep.subr.mxu0 0.0
    %995 = vmatpush2.msra.mxu0 0.0
    %996 = vmatprep.subr.mxu0 0.0
    %997 = vmatpush2.msra.mxu0 0.0
    %998 = vmatprep.subr.mxu0 0.0
    %999 = vmatpush2.msra.mxu0 0.0
    %1000 = vmatprep.mubr.f32.mxu0 0.0
    %1001 = vmatmul.mubr.f32.gmra.mxu0 %v934
    %v1002 = vpop.f32.mrf.mxu0
    %v1003 = vadd.f32 %v930, %v1002
    %v1004 = vpop.f32.mrf.mxu0
    %1005 = vdwg.mxu0
    %v1007 = vlaneseq
    %v1008 = vshrl.u32 %v1007, 7
    %v1009 = vsub.s32 0, %v1008
    %v1010 = vrot.slane %v923, %v1009
    %1012 = vmatprep.subr.mxu0 0.0
    %1013 = vmatpush1.msra.mxu0 0.0
    %1014 = vmatprep.subr.mxu0 0.0
    %1015 = vmatpush1.msra.mxu0 0.0
    %1016 = vmatprep.subr.mxu0 0.0
    %1017 = vmatpush1.msra.mxu0 0.0
    %1018 = vmatprep.subr.mxu0 0.0
    %1019 = vmatpush1.msra.mxu0 0.0
    %1020 = vmatprep.subr.mxu0 0.0
    %1021 = vmatpush1.msra.mxu0 0.0
    %1022 = vmatprep.subr.mxu0 0.0
    %1023 = vmatpush1.msra.mxu0 0.0
    %1024 = vmatprep.subr.mxu0 0.0
    %1025 = vmatpush1.msra.mxu0 0.0
    %1026 = vmatprep.subr.mxu0 0.0
    %1027 = vmatpush1.msra.mxu0 0.0
    %1028 = vmatprep.subr.mxu0 0.0
    %1029 = vmatpush1.msra.mxu0 0.0
    %1030 = vmatprep.subr.mxu0 0.0
    %1031 = vmatpush1.msra.mxu0 0.0
    %1032 = vmatprep.subr.mxu0 0.0
    %1033 = vmatpush1.msra.mxu0 0.0
    %1034 = vmatprep.subr.mxu0 0.0
    %1035 = vmatpush1.msra.mxu0 0.0
    %1036 = vmatprep.subr.mxu0 0.0
    %1037 = vmatpush1.msra.mxu0 0.0
    %1038 = vmatprep.subr.mxu0 0.0
    %1039 = vmatpush1.msra.mxu0 0.0
    %1040 = vmatprep.subr.mxu0 0.0
    %1041 = vmatpush1.msra.mxu0 0.0
    %1042 = vmatprep.subr.mxu0 0.0
    %1043 = vmatpush1.msra.mxu0 %v918
    %1044 = vmatprep.subr.mxu0 0.0
    %1045 = vmatpush2.msra.mxu0 0.0
    %1046 = vmatprep.subr.mxu0 0.0
    %1047 = vmatpush2.msra.mxu0 0.0
    %1048 = vmatprep.subr.mxu0 0.0
    %1049 = vmatpush2.msra.mxu0 0.0
    %1050 = vmatprep.subr.mxu0 0.0
    %1051 = vmatpush2.msra.mxu0 0.0
    %1052 = vmatprep.subr.mxu0 0.0
    %1053 = vmatpush2.msra.mxu0 0.0
    %1054 = vmatprep.subr.mxu0 0.0
    %1055 = vmatpush2.msra.mxu0 0.0
    %1056 = vmatprep.subr.mxu0 0.0
    %1057 = vmatpush2.msra.mxu0 0.0
    %1058 = vmatprep.subr.mxu0 0.0
    %1059 = vmatpush2.msra.mxu0 0.0
    %1060 = vmatprep.subr.mxu0 0.0
    %1061 = vmatpush2.msra.mxu0 0.0
    %1062 = vmatprep.subr.mxu0 0.0
    %1063 = vmatpush2.msra.mxu0 0.0
    %1064 = vmatprep.subr.mxu0 0.0
    %1065 = vmatpush2.msra.mxu0 0.0
    %1066 = vmatprep.subr.mxu0 0.0
    %1067 = vmatpush2.msra.mxu0 0.0
    %1068 = vmatprep.subr.mxu0 0.0
    %1069 = vmatpush2.msra.mxu0 0.0
    %1070 = vmatprep.subr.mxu0 0.0
    %1071 = vmatpush2.msra.mxu0 0.0
    %1072 = vmatprep.subr.mxu0 0.0
    %1073 = vmatpush2.msra.mxu0 0.0
    %1074 = vmatprep.subr.mxu0 0.0
    %1075 = vmatpush2.msra.mxu0 0.0
    %1076 = vmatprep.mubr.f32.mxu0 0.0
    %1077 = vmatmul.mubr.f32.gmra.mxu0 %v934
    %v1078 = vpop.f32.mrf.mxu0
    %v1079 = vadd.f32 %v1010, %v1078
    %v1080 = vpop.f32.mrf.mxu0
    %1081 = vdwg.mxu0
    %v1083 = vlaneseq
    %v1084 = vshrl.u32 %v1083, 7
    %v1085 = vsub.s32 0, %v1084
    %v1086 = vrot.slane %v925, %v1085
    %1088 = vmatprep.subr.mxu0 0.0
    %1089 = vmatpush1.msra.mxu0 0.0
    %1090 = vmatprep.subr.mxu0 0.0
    %1091 = vmatpush1.msra.mxu0 0.0
    %1092 = vmatprep.subr.mxu0 0.0
    %1093 = vmatpush1.msra.mxu0 0.0
    %1094 = vmatprep.subr.mxu0 0.0
    %1095 = vmatpush1.msra.mxu0 0.0
    %1096 = vmatprep.subr.mxu0 0.0
    %1097 = vmatpush1.msra.mxu0 0.0
    %1098 = vmatprep.subr.mxu0 0.0
    %1099 = vmatpush1.msra.mxu0 0.0
    %1100 = vmatprep.subr.mxu0 0.0
    %1101 = vmatpush1.msra.mxu0 0.0
    %1102 = vmatprep.subr.mxu0 0.0
    %1103 = vmatpush1.msra.mxu0 0.0
    %1104 = vmatprep.subr.mxu0 0.0
    %1105 = vmatpush1.msra.mxu0 0.0
    %1106 = vmatprep.subr.mxu0 0.0
    %1107 = vmatpush1.msra.mxu0 0.0
    %1108 = vmatprep.subr.mxu0 0.0
    %1109 = vmatpush1.msra.mxu0 0.0
    %1110 = vmatprep.subr.mxu0 0.0
    %1111 = vmatpush1.msra.mxu0 0.0
    %1112 = vmatprep.subr.mxu0 0.0
    %1113 = vmatpush1.msra.mxu0 0.0
    %1114 = vmatprep.subr.mxu0 0.0
    %1115 = vmatpush1.msra.mxu0 0.0
    %1116 = vmatprep.subr.mxu0 0.0
    %1117 = vmatpush1.msra.mxu0 0.0
    %1118 = vmatprep.subr.mxu0 0.0
    %1119 = vmatpush1.msra.mxu0 %v920
    %1120 = vmatprep.subr.mxu0 0.0
    %1121 = vmatpush2.msra.mxu0 0.0
    %1122 = vmatprep.subr.mxu0 0.0
    %1123 = vmatpush2.msra.mxu0 0.0
    %1124 = vmatprep.subr.mxu0 0.0
    %1125 = vmatpush2.msra.mxu0 0.0
    %1126 = vmatprep.subr.mxu0 0.0
    %1127 = vmatpush2.msra.mxu0 0.0
    %1128 = vmatprep.subr.mxu0 0.0
    %1129 = vmatpush2.msra.mxu0 0.0
    %1130 = vmatprep.subr.mxu0 0.0
    %1131 = vmatpush2.msra.mxu0 0.0
    %1132 = vmatprep.subr.mxu0 0.0
    %1133 = vmatpush2.msra.mxu0 0.0
    %1134 = vmatprep.subr.mxu0 0.0
    %1135 = vmatpush2.msra.mxu0 0.0
    %1136 = vmatprep.subr.mxu0 0.0
    %1137 = vmatpush2.msra.mxu0 0.0
    %1138 = vmatprep.subr.mxu0 0.0
    %1139 = vmatpush2.msra.mxu0 0.0
    %1140 = vmatprep.subr.mxu0 0.0
    %1141 = vmatpush2.msra.mxu0 0.0
    %1142 = vmatprep.subr.mxu0 0.0
    %1143 = vmatpush2.msra.mxu0 0.0
    %1144 = vmatprep.subr.mxu0 0.0
    %1145 = vmatpush2.msra.mxu0 0.0
    %1146 = vmatprep.subr.mxu0 0.0
    %1147 = vmatpush2.msra.mxu0 0.0
    %1148 = vmatprep.subr.mxu0 0.0
    %1149 = vmatpush2.msra.mxu0 0.0
    %1150 = vmatprep.subr.mxu0 0.0
    %1151 = vmatpush2.msra.mxu0 0.0
    %1152 = vmatprep.mubr.f32.mxu0 0.0
    %1153 = vmatmul.mubr.f32.gmra.mxu0 %v934
    %v1154 = vpop.f32.mrf.mxu0
    %v1155 = vadd.f32 %v1086, %v1154
    %v1156 = vpop.f32.mrf.mxu0
    %1157 = vdwg.mxu0
    %v1158 = vadd.f32 %v736, %v1003
    %v1159 = vxor.u32 %v1158, 2147483648
    %v1160 = vmul.f32 %v1159, 1.442695
    %v1161 = vpow.pop %v1160
    %v1162 = vadd.f32 %v1161, 1.0
    %v1163 = vrcp.pop %v1162
    %v1164 = vmul.f32 1.0, %v1163
    %v1165 = vadd.f32 %v822, %v1079
    %v1166 = vxor.u32 %v1165, 2147483648
    %v1167 = vmul.f32 %v1166, 1.442695
    %v1168 = vpow.pop %v1167
    %v1169 = vadd.f32 %v1168, 1.0
    %v1170 = vrcp.pop %v1169
    %v1171 = vmul.f32 1.0, %v1170
    %v1172 = vmul.f32 %v1164, %v1155
    %v1173 = vadd.f32 %v908, %v1172
    %v1174 = vtanh.pop %v1173
    %v1175 = vsub.f32 1.0, %v1171
    %v1176 = vmul.f32 %v1175, %v1174
    %v1177 = vmul.f32 %v1171, 0.0
    %v1178 = vadd.f32 %v1176, %v1177
    %v1180 = vsel %vm932, %v1178, 0
    %1182 = vmatprep.subr.mxu0 0.0
    %1183 = vmatpush1.msra.mxu0 0.0
    %1184 = vmatprep.subr.mxu0 0.0
    %1185 = vmatpush1.msra.mxu0 0.0
    %1186 = vmatprep.subr.mxu0 0.0
    %1187 = vmatpush1.msra.mxu0 0.0
    %1188 = vmatprep.subr.mxu0 0.0
    %1189 = vmatpush1.msra.mxu0 0.0
    %1190 = vmatprep.subr.mxu0 0.0
    %1191 = vmatpush1.msra.mxu0 0.0
    %1192 = vmatprep.subr.mxu0 0.0
    %1193 = vmatpush1.msra.mxu0 0.0
    %1194 = vmatprep.subr.mxu0 0.0
    %1195 = vmatpush1.msra.mxu0 0.0
    %1196 = vmatprep.subr.mxu0 0.0
    %1197 = vmatpush1.msra.mxu0 0.0
    %1198 = vmatprep.subr.mxu0 0.0
    %1199 = vmatpush1.msra.mxu0 0.0
    %1200 = vmatprep.subr.mxu0 0.0
    %1201 = vmatpush1.msra.mxu0 0.0
    %1202 = vmatprep.subr.mxu0 0.0
    %1203 = vmatpush1.msra.mxu0 0.0
    %1204 = vmatprep.subr.mxu0 0.0
    %1205 = vmatpush1.msra.mxu0 0.0
    %1206 = vmatprep.subr.mxu0 0.0
    %1207 = vmatpush1.msra.mxu0 0.0
    %1208 = vmatprep.subr.mxu0 0.0
    %1209 = vmatpush1.msra.mxu0 0.0
    %1210 = vmatprep.subr.mxu0 0.0
    %1211 = vmatpush1.msra.mxu0 0.0
    %1212 = vmatprep.subr.mxu0 0.0
    %1213 = vmatpush1.msra.mxu0 %v916
    %1214 = vmatprep.subr.mxu0 0.0
    %1215 = vmatpush2.msra.mxu0 0.0
    %1216 = vmatprep.subr.mxu0 0.0
    %1217 = vmatpush2.msra.mxu0 0.0
    %1218 = vmatprep.subr.mxu0 0.0
    %1219 = vmatpush2.msra.mxu0 0.0
    %1220 = vmatprep.subr.mxu0 0.0
    %1221 = vmatpush2.msra.mxu0 0.0
    %1222 = vmatprep.subr.mxu0 0.0
    %1223 = vmatpush2.msra.mxu0 0.0
    %1224 = vmatprep.subr.mxu0 0.0
    %1225 = vmatpush2.msra.mxu0 0.0
    %1226 = vmatprep.subr.mxu0 0.0
    %1227 = vmatpush2.msra.mxu0 0.0
    %1228 = vmatprep.subr.mxu0 0.0
    %1229 = vmatpush2.msra.mxu0 0.0
    %1230 = vmatprep.subr.mxu0 0.0
    %1231 = vmatpush2.msra.mxu0 0.0
    %1232 = vmatprep.subr.mxu0 0.0
    %1233 = vmatpush2.msra.mxu0 0.0
    %1234 = vmatprep.subr.mxu0 0.0
    %1235 = vmatpush2.msra.mxu0 0.0
    %1236 = vmatprep.subr.mxu0 0.0
    %1237 = vmatpush2.msra.mxu0 0.0
    %1238 = vmatprep.subr.mxu0 0.0
    %1239 = vmatpush2.msra.mxu0 0.0
    %1240 = vmatprep.subr.mxu0 0.0
    %1241 = vmatpush2.msra.mxu0 0.0
    %1242 = vmatprep.subr.mxu0 0.0
    %1243 = vmatpush2.msra.mxu0 0.0
    %1244 = vmatprep.subr.mxu0 0.0
    %1245 = vmatpush2.msra.mxu0 0.0
    %1246 = vmatprep.mubr.f32.mxu0 0.0
    %1247 = vmatmul.mubr.f32.gmra.mxu0 %v1180
    %v1248 = vpop.f32.mrf.mxu0
    %v1249 = vadd.f32 %v930, %v1248
    %v1250 = vpop.f32.mrf.mxu0
    %1251 = vdwg.mxu0
    %1252 = vmatprep.subr.mxu0 0.0
    %1253 = vmatpush1.msra.mxu0 0.0
    %1254 = vmatprep.subr.mxu0 0.0
    %1255 = vmatpush1.msra.mxu0 0.0
    %1256 = vmatprep.subr.mxu0 0.0
    %1257 = vmatpush1.msra.mxu0 0.0
    %1258 = vmatprep.subr.mxu0 0.0
    %1259 = vmatpush1.msra.mxu0 0.0
    %1260 = vmatprep.subr.mxu0 0.0
    %1261 = vmatpush1.msra.mxu0 0.0
    %1262 = vmatprep.subr.mxu0 0.0
    %1263 = vmatpush1.msra.mxu0 0.0
    %1264 = vmatprep.subr.mxu0 0.0
    %1265 = vmatpush1.msra.mxu0 0.0
    %1266 = vmatprep.subr.mxu0 0.0
    %1267 = vmatpush1.msra.mxu0 0.0
    %1268 = vmatprep.subr.mxu0 0.0
    %1269 = vmatpush1.msra.mxu0 0.0
    %1270 = vmatprep.subr.mxu0 0.0
    %1271 = vmatpush1.msra.mxu0 0.0
    %1272 = vmatprep.subr.mxu0 0.0
    %1273 = vmatpush1.msra.mxu0 0.0
    %1274 = vmatprep.subr.mxu0 0.0
    %1275 = vmatpush1.msra.mxu0 0.0
    %1276 = vmatprep.subr.mxu0 0.0
    %1277 = vmatpush1.msra.mxu0 0.0
    %1278 = vmatprep.subr.mxu0 0.0
    %1279 = vmatpush1.msra.mxu0 0.0
    %1280 = vmatprep.subr.mxu0 0.0
    %1281 = vmatpush1.msra.mxu0 0.0
    %1282 = vmatprep.subr.mxu0 0.0
    %1283 = vmatpush1.msra.mxu0 %v918
    %1284 = vmatprep.subr.mxu0 0.0
    %1285 = vmatpush2.msra.mxu0 0.0
    %1286 = vmatprep.subr.mxu0 0.0
    %1287 = vmatpush2.msra.mxu0 0.0
    %1288 = vmatprep.subr.mxu0 0.0
    %1289 = vmatpush2.msra.mxu0 0.0
    %1290 = vmatprep.subr.mxu0 0.0
    %1291 = vmatpush2.msra.mxu0 0.0
    %1292 = vmatprep.subr.mxu0 0.0
    %1293 = vmatpush2.msra.mxu0 0.0
    %1294 = vmatprep.subr.mxu0 0.0
    %1295 = vmatpush2.msra.mxu0 0.0
    %1296 = vmatprep.subr.mxu0 0.0
    %1297 = vmatpush2.msra.mxu0 0.0
    %1298 = vmatprep.subr.mxu0 0.0
    %1299 = vmatpush2.msra.mxu0 0.0
    %1300 = vmatprep.subr.mxu0 0.0
    %1301 = vmatpush2.msra.mxu0 0.0
    %1302 = vmatprep.subr.mxu0 0.0
    %1303 = vmatpush2.msra.mxu0 0.0
    %1304 = vmatprep.subr.mxu0 0.0
    %1305 = vmatpush2.msra.mxu0 0.0
    %1306 = vmatprep.subr.mxu0 0.0
    %1307 = vmatpush2.msra.mxu0 0.0
    %1308 = vmatprep.subr.mxu0 0.0
    %1309 = vmatpush2.msra.mxu0 0.0
    %1310 = vmatprep.subr.mxu0 0.0
    %1311 = vmatpush2.msra.mxu0 0.0
    %1312 = vmatprep.subr.mxu0 0.0
    %1313 = vmatpush2.msra.mxu0 0.0
    %1314 = vmatprep.subr.mxu0 0.0
    %1315 = vmatpush2.msra.mxu0 0.0
    %1316 = vmatprep.mubr.f32.mxu0 0.0
    %1317 = vmatmul.mubr.f32.gmra.mxu0 %v1180
    %v1318 = vpop.f32.mrf.mxu0
    %v1319 = vadd.f32 %v1010, %v1318
    %v1320 = vpop.f32.mrf.mxu0
    %1321 = vdwg.mxu0
    %1322 = vmatprep.subr.mxu0 0.0
    %1323 = vmatpush1.msra.mxu0 0.0
    %1324 = vmatprep.subr.mxu0 0.0
    %1325 = vmatpush1.msra.mxu0 0.0
    %1326 = vmatprep.subr.mxu0 0.0
    %1327 = vmatpush1.msra.mxu0 0.0
    %1328 = vmatprep.subr.mxu0 0.0
    %1329 = vmatpush1.msra.mxu0 0.0
    %1330 = vmatprep.subr.mxu0 0.0
    %1331 = vmatpush1.msra.mxu0 0.0
    %1332 = vmatprep.subr.mxu0 0.0
    %1333 = vmatpush1.msra.mxu0 0.0
    %1334 = vmatprep.subr.mxu0 0.0
    %1335 = vmatpush1.msra.mxu0 0.0
    %1336 = vmatprep.subr.mxu0 0.0
    %1337 = vmatpush1.msra.mxu0 0.0
    %1338 = vmatprep.subr.mxu0 0.0
    %1339 = vmatpush1.msra.mxu0 0.0
    %1340 = vmatprep.subr.mxu0 0.0
    %1341 = vmatpush1.msra.mxu0 0.0
    %1342 = vmatprep.subr.mxu0 0.0
    %1343 = vmatpush1.msra.mxu0 0.0
    %1344 = vmatprep.subr.mxu0 0.0
    %1345 = vmatpush1.msra.mxu0 0.0
    %1346 = vmatprep.subr.mxu0 0.0
    %1347 = vmatpush1.msra.mxu0 0.0
    %1348 = vmatprep.subr.mxu0 0.0
    %1349 = vmatpush1.msra.mxu0 0.0
    %1350 = vmatprep.subr.mxu0 0.0
    %1351 = vmatpush1.msra.mxu0 0.0
    %1352 = vmatprep.subr.mxu0 0.0
    %1353 = vmatpush1.msra.mxu0 %v920
    %1354 = vmatprep.subr.mxu0 0.0
    %1355 = vmatpush2.msra.mxu0 0.0
    %1356 = vmatprep.subr.mxu0 0.0
    %1357 = vmatpush2.msra.mxu0 0.0
    %1358 = vmatprep.subr.mxu0 0.0
    %1359 = vmatpush2.msra.mxu0 0.0
    %1360 = vmatprep.subr.mxu0 0.0
    %1361 = vmatpush2.msra.mxu0 0.0
    %1362 = vmatprep.subr.mxu0 0.0
    %1363 = vmatpush2.msra.mxu0 0.0
    %1364 = vmatprep.subr.mxu0 0.0
    %1365 = vmatpush2.msra.mxu0 0.0
    %1366 = vmatprep.subr.mxu0 0.0
    %1367 = vmatpush2.msra.mxu0 0.0
    %1368 = vmatprep.subr.mxu0 0.0
    %1369 = vmatpush2.msra.mxu0 0.0
    %1370 = vmatprep.subr.mxu0 0.0
    %1371 = vmatpush2.msra.mxu0 0.0
    %1372 = vmatprep.subr.mxu0 0.0
    %1373 = vmatpush2.msra.mxu0 0.0
    %1374 = vmatprep.subr.mxu0 0.0
    %1375 = vmatpush2.msra.mxu0 0.0
    %1376 = vmatprep.subr.mxu0 0.0
    %1377 = vmatpush2.msra.mxu0 0.0
    %1378 = vmatprep.subr.mxu0 0.0
    %1379 = vmatpush2.msra.mxu0 0.0
    %1380 = vmatprep.subr.mxu0 0.0
    %1381 = vmatpush2.msra.mxu0 0.0
    %1382 = vmatprep.subr.mxu0 0.0
    %1383 = vmatpush2.msra.mxu0 0.0
    %1384 = vmatprep.subr.mxu0 0.0
    %1385 = vmatpush2.msra.mxu0 0.0
    %1386 = vmatprep.mubr.f32.mxu0 0.0
    %1387 = vmatmul.mubr.f32.gmra.mxu0 %v1180
    %v1388 = vpop.f32.mrf.mxu0
    %v1389 = vadd.f32 %v1086, %v1388
    %v1390 = vpop.f32.mrf.mxu0
    %1391 = vdwg.mxu0
    %v1392 = vadd.f32 %v741, %v1249
    %v1393 = vxor.u32 %v1392, 2147483648
    %v1394 = vmul.f32 %v1393, 1.442695
    %v1395 = vpow.pop %v1394
    %v1396 = vadd.f32 %v1395, 1.0
    %v1397 = vrcp.pop %v1396
    %v1398 = vmul.f32 1.0, %v1397
    %v1399 = vadd.f32 %v827, %v1319
    %v1400 = vxor.u32 %v1399, 2147483648
    %v1401 = vmul.f32 %v1400, 1.442695
    %v1402 = vpow.pop %v1401
    %v1403 = vadd.f32 %v1402, 1.0
    %v1404 = vrcp.pop %v1403
    %v1405 = vmul.f32 1.0, %v1404
    %v1406 = vmul.f32 %v1398, %v1389
    %v1407 = vadd.f32 %v913, %v1406
    %v1408 = vtanh.pop %v1407
    %v1409 = vsub.f32 1.0, %v1405
    %v1410 = vmul.f32 %v1409, %v1408
    %v1411 = vmul.f32 %v1405, %v1178
    %v1412 = vadd.f32 %v1410, %v1411
    %v1413 = vld [vmem:[%s10] sm:$0xff]
    %v1414 = vld [vmem:[%s10 + $0x8] sm:$0xff]
    %v1415 = vld [vmem:[%s11] sm:$0x1]
    %v1417 = vlaneseq
    %v1418 = vshrl.u32 %v1417, 7
    %v1419 = vsub.s32 0, %v1418
    %v1420 = vrot.slane %v1415, %v1419
    %1422 = vmatprep.subr.mxu0 0.0
    %1423 = vmatpush1.msra.mxu0 0.0
    %1424 = vmatprep.subr.mxu0 0.0
    %1425 = vmatpush1.msra.mxu0 0.0
    %1426 = vmatprep.subr.mxu0 0.0
    %1427 = vmatpush1.msra.mxu0 0.0
    %1428 = vmatprep.subr.mxu0 0.0
    %1429 = vmatpush1.msra.mxu0 0.0
    %1430 = vmatprep.subr.mxu0 0.0
    %1431 = vmatpush1.msra.mxu0 0.0
    %1432 = vmatprep.subr.mxu0 0.0
    %1433 = vmatpush1.msra.mxu0 0.0
    %1434 = vmatprep.subr.mxu0 0.0
    %1435 = vmatpush1.msra.mxu0 0.0
    %1436 = vmatprep.subr.mxu0 0.0
    %1437 = vmatpush1.msra.mxu0 0.0
    %1438 = vmatprep.subr.mxu0 0.0
    %1439 = vmatpush1.msra.mxu0 0.0
    %1440 = vmatprep.subr.mxu0 0.0
    %1441 = vmatpush1.msra.mxu0 0.0
    %1442 = vmatprep.subr.mxu0 0.0
    %1443 = vmatpush1.msra.mxu0 0.0
    %1444 = vmatprep.subr.mxu0 0.0
    %1445 = vmatpush1.msra.mxu0 0.0
    %1446 = vmatprep.subr.mxu0 0.0
    %1447 = vmatpush1.msra.mxu0 0.0
    %1448 = vmatprep.subr.mxu0 0.0
    %1449 = vmatpush1.msra.mxu0 0.0
    %1450 = vmatprep.subr.mxu0 0.0
    %1451 = vmatpush1.msra.mxu0 %v1414
    %1452 = vmatprep.subr.mxu0 0.0
    %1453 = vmatpush1.msra.mxu0 %v1413
    %1454 = vmatprep.subr.mxu0 0.0
    %1455 = vmatpush2.msra.mxu0 0.0
    %1456 = vmatprep.subr.mxu0 0.0
    %1457 = vmatpush2.msra.mxu0 0.0
    %1458 = vmatprep.subr.mxu0 0.0
    %1459 = vmatpush2.msra.mxu0 0.0
    %1460 = vmatprep.subr.mxu0 0.0
    %1461 = vmatpush2.msra.mxu0 0.0
    %1462 = vmatprep.subr.mxu0 0.0
    %1463 = vmatpush2.msra.mxu0 0.0
    %1464 = vmatprep.subr.mxu0 0.0
    %1465 = vmatpush2.msra.mxu0 0.0
    %1466 = vmatprep.subr.mxu0 0.0
    %1467 = vmatpush2.msra.mxu0 0.0
    %1468 = vmatprep.subr.mxu0 0.0
    %1469 = vmatpush2.msra.mxu0 0.0
    %1470 = vmatprep.subr.mxu0 0.0
    %1471 = vmatpush2.msra.mxu0 0.0
    %1472 = vmatprep.subr.mxu0 0.0
    %1473 = vmatpush2.msra.mxu0 0.0
    %1474 = vmatprep.subr.mxu0 0.0
    %1475 = vmatpush2.msra.mxu0 0.0
    %1476 = vmatprep.subr.mxu0 0.0
    %1477 = vmatpush2.msra.mxu0 0.0
    %1478 = vmatprep.subr.mxu0 0.0
    %1479 = vmatpush2.msra.mxu0 0.0
    %1480 = vmatprep.subr.mxu0 0.0
    %1481 = vmatpush2.msra.mxu0 0.0
    %1482 = vmatprep.subr.mxu0 0.0
    %1483 = vmatpush2.msra.mxu0 0.0
    %1484 = vmatprep.subr.mxu0 0.0
    %1485 = vmatpush2.msra.mxu0 0.0
    %1486 = vmatprep.mubr.f32.mxu0 0.0
    %1487 = vmatmul.mubr.f32.gmra.mxu0 %v193
    %v1488 = vpop.f32.mrf.mxu0
    %v1489 = vadd.f32 %v1420, %v1488
    %v1490 = vpop.f32.mrf.mxu0
    %1491 = vmatprep.mubr.f32.mxu0 0.0
    %1492 = vmatmul.mubr.f32.gmra.mxu0 %v196
    %v1493 = vpop.f32.mrf.mxu0
    %v1494 = vadd.f32 %v1420, %v1493
    %v1495 = vpop.f32.mrf.mxu0
    %1496 = vdwg.mxu0
    %s1497 = scalar_lea.vmem %s10, 16
    %v1498 = vld [vmem:[%s1497] sm:$0xff]
    %v1499 = vld [vmem:[%s1497 + $0x8] sm:$0xff]
    %s1500 = scalar_lea.vmem %s11, 1
    %v1501 = vld [vmem:[%s1500] sm:$0x1]
    %v1503 = vlaneseq
    %v1504 = vshrl.u32 %v1503, 7
    %v1505 = vsub.s32 0, %v1504
    %v1506 = vrot.slane %v1501, %v1505
    %1508 = vmatprep.subr.mxu0 0.0
    %1509 = vmatpush1.msra.mxu0 0.0
    %1510 = vmatprep.subr.mxu0 0.0
    %1511 = vmatpush1.msra.mxu0 0.0
    %1512 = vmatprep.subr.mxu0 0.0
    %1513 = vmatpush1.msra.mxu0 0.0
    %1514 = vmatprep.subr.mxu0 0.0
    %1515 = vmatpush1.msra.mxu0 0.0
    %1516 = vmatprep.subr.mxu0 0.0
    %1517 = vmatpush1.msra.mxu0 0.0
    %1518 = vmatprep.subr.mxu0 0.0
    %1519 = vmatpush1.msra.mxu0 0.0
    %1520 = vmatprep.subr.mxu0 0.0
    %1521 = vmatpush1.msra.mxu0 0.0
    %1522 = vmatprep.subr.mxu0 0.0
    %1523 = vmatpush1.msra.mxu0 0.0
    %1524 = vmatprep.subr.mxu0 0.0
    %1525 = vmatpush1.msra.mxu0 0.0
    %1526 = vmatprep.subr.mxu0 0.0
    %1527 = vmatpush1.msra.mxu0 0.0
    %1528 = vmatprep.subr.mxu0 0.0
    %1529 = vmatpush1.msra.mxu0 0.0
    %1530 = vmatprep.subr.mxu0 0.0
    %1531 = vmatpush1.msra.mxu0 0.0
    %1532 = vmatprep.subr.mxu0 0.0
    %1533 = vmatpush1.msra.mxu0 0.0
    %1534 = vmatprep.subr.mxu0 0.0
    %1535 = vmatpush1.msra.mxu0 0.0
    %1536 = vmatprep.subr.mxu0 0.0
    %1537 = vmatpush1.msra.mxu0 %v1499
    %1538 = vmatprep.subr.mxu0 0.0
    %1539 = vmatpush1.msra.mxu0 %v1498
    %1540 = vmatprep.subr.mxu0 0.0
    %1541 = vmatpush2.msra.mxu0 0.0
    %1542 = vmatprep.subr.mxu0 0.0
    %1543 = vmatpush2.msra.mxu0 0.0
    %1544 = vmatprep.subr.mxu0 0.0
    %1545 = vmatpush2.msra.mxu0 0.0
    %1546 = vmatprep.subr.mxu0 0.0
    %1547 = vmatpush2.msra.mxu0 0.0
    %1548 = vmatprep.subr.mxu0 0.0
    %1549 = vmatpush2.msra.mxu0 0.0
    %1550 = vmatprep.subr.mxu0 0.0
    %1551 = vmatpush2.msra.mxu0 0.0
    %1552 = vmatprep.subr.mxu0 0.0
    %1553 = vmatpush2.msra.mxu0 0.0
    %1554 = vmatprep.subr.mxu0 0.0
    %1555 = vmatpush2.msra.mxu0 0.0
    %1556 = vmatprep.subr.mxu0 0.0
    %1557 = vmatpush2.msra.mxu0 0.0
    %1558 = vmatprep.subr.mxu0 0.0
    %1559 = vmatpush2.msra.mxu0 0.0
    %1560 = vmatprep.subr.mxu0 0.0
    %1561 = vmatpush2.msra.mxu0 0.0
    %1562 = vmatprep.subr.mxu0 0.0
    %1563 = vmatpush2.msra.mxu0 0.0
    %1564 = vmatprep.subr.mxu0 0.0
    %1565 = vmatpush2.msra.mxu0 0.0
    %1566 = vmatprep.subr.mxu0 0.0
    %1567 = vmatpush2.msra.mxu0 0.0
    %1568 = vmatprep.subr.mxu0 0.0
    %1569 = vmatpush2.msra.mxu0 0.0
    %1570 = vmatprep.subr.mxu0 0.0
    %1571 = vmatpush2.msra.mxu0 0.0
    %1572 = vmatprep.mubr.f32.mxu0 0.0
    %1573 = vmatmul.mubr.f32.gmra.mxu0 %v193
    %v1574 = vpop.f32.mrf.mxu0
    %v1575 = vadd.f32 %v1506, %v1574
    %v1576 = vpop.f32.mrf.mxu0
    %1577 = vmatprep.mubr.f32.mxu0 0.0
    %1578 = vmatmul.mubr.f32.gmra.mxu0 %v196
    %v1579 = vpop.f32.mrf.mxu0
    %v1580 = vadd.f32 %v1506, %v1579
    %v1581 = vpop.f32.mrf.mxu0
    %1582 = vdwg.mxu0
    %s1583 = scalar_lea.vmem %s10, 32
    %v1584 = vld [vmem:[%s1583] sm:$0xff]
    %v1585 = vld [vmem:[%s1583 + $0x8] sm:$0xff]
    %s1586 = scalar_lea.vmem %s11, 2
    %v1587 = vld [vmem:[%s1586] sm:$0x1]
    %v1589 = vlaneseq
    %v1590 = vshrl.u32 %v1589, 7
    %v1591 = vsub.s32 0, %v1590
    %v1592 = vrot.slane %v1587, %v1591
    %1594 = vmatprep.subr.mxu0 0.0
    %1595 = vmatpush1.msra.mxu0 0.0
    %1596 = vmatprep.subr.mxu0 0.0
    %1597 = vmatpush1.msra.mxu0 0.0
    %1598 = vmatprep.subr.mxu0 0.0
    %1599 = vmatpush1.msra.mxu0 0.0
    %1600 = vmatprep.subr.mxu0 0.0
    %1601 = vmatpush1.msra.mxu0 0.0
    %1602 = vmatprep.subr.mxu0 0.0
    %1603 = vmatpush1.msra.mxu0 0.0
    %1604 = vmatprep.subr.mxu0 0.0
    %1605 = vmatpush1.msra.mxu0 0.0
    %1606 = vmatprep.subr.mxu0 0.0
    %1607 = vmatpush1.msra.mxu0 0.0
    %1608 = vmatprep.subr.mxu0 0.0
    %1609 = vmatpush1.msra.mxu0 0.0
    %1610 = vmatprep.subr.mxu0 0.0
    %1611 = vmatpush1.msra.mxu0 0.0
    %1612 = vmatprep.subr.mxu0 0.0
    %1613 = vmatpush1.msra.mxu0 0.0
    %1614 = vmatprep.subr.mxu0 0.0
    %1615 = vmatpush1.msra.mxu0 0.0
    %1616 = vmatprep.subr.mxu0 0.0
    %1617 = vmatpush1.msra.mxu0 0.0
    %1618 = vmatprep.subr.mxu0 0.0
    %1619 = vmatpush1.msra.mxu0 0.0
    %1620 = vmatprep.subr.mxu0 0.0
    %1621 = vmatpush1.msra.mxu0 0.0
    %1622 = vmatprep.subr.mxu0 0.0
    %1623 = vmatpush1.msra.mxu0 %v1585
    %1624 = vmatprep.subr.mxu0 0.0
    %1625 = vmatpush1.msra.mxu0 %v1584
    %1626 = vmatprep.subr.mxu0 0.0
    %1627 = vmatpush2.msra.mxu0 0.0
    %1628 = vmatprep.subr.mxu0 0.0
    %1629 = vmatpush2.msra.mxu0 0.0
    %1630 = vmatprep.subr.mxu0 0.0
    %1631 = vmatpush2.msra.mxu0 0.0
    %1632 = vmatprep.subr.mxu0 0.0
    %1633 = vmatpush2.msra.mxu0 0.0
    %1634 = vmatprep.subr.mxu0 0.0
    %1635 = vmatpush2.msra.mxu0 0.0
    %1636 = vmatprep.subr.mxu0 0.0
    %1637 = vmatpush2.msra.mxu0 0.0
    %1638 = vmatprep.subr.mxu0 0.0
    %1639 = vmatpush2.msra.mxu0 0.0
    %1640 = vmatprep.subr.mxu0 0.0
    %1641 = vmatpush2.msra.mxu0 0.0
    %1642 = vmatprep.subr.mxu0 0.0
    %1643 = vmatpush2.msra.mxu0 0.0
    %1644 = vmatprep.subr.mxu0 0.0
    %1645 = vmatpush2.msra.mxu0 0.0
    %1646 = vmatprep.subr.mxu0 0.0
    %1647 = vmatpush2.msra.mxu0 0.0
    %1648 = vmatprep.subr.mxu0 0.0
    %1649 = vmatpush2.msra.mxu0 0.0
    %1650 = vmatprep.subr.mxu0 0.0
    %1651 = vmatpush2.msra.mxu0 0.0
    %1652 = vmatprep.subr.mxu0 0.0
    %1653 = vmatpush2.msra.mxu0 0.0
    %1654 = vmatprep.subr.mxu0 0.0
    %1655 = vmatpush2.msra.mxu0 0.0
    %1656 = vmatprep.subr.mxu0 0.0
    %1657 = vmatpush2.msra.mxu0 0.0
    %1658 = vmatprep.mubr.f32.mxu0 0.0
    %1659 = vmatmul.mubr.f32.gmra.mxu0 %v193
    %v1660 = vpop.f32.mrf.mxu0
    %v1661 = vadd.f32 %v1592, %v1660
    %v1662 = vpop.f32.mrf.mxu0
    %1663 = vmatprep.mubr.f32.mxu0 0.0
    %1664 = vmatmul.mubr.f32.gmra.mxu0 %v196
    %v1665 = vpop.f32.mrf.mxu0
    %v1666 = vadd.f32 %v1592, %v1665
    %v1667 = vpop.f32.mrf.mxu0
    %1668 = vdwg.mxu0
    %v1669 = vld [vmem:[%s12] sm:$0xff]
    %s1670 = scalar_lea.vmem %s12, 8
    %v1671 = vld [vmem:[%s1670] sm:$0xff]
    %s1672 = scalar_lea.vmem %s12, 16
    %v1673 = vld [vmem:[%s1672] sm:$0xff]
    %v1674 = vld [vmem:[%s13] sm:$0x1]
    %s1675 = scalar_lea.vmem %s13, 1
    %v1676 = vld [vmem:[%s1675] sm:$0x1]
    %s1677 = scalar_lea.vmem %s13, 2
    %v1678 = vld [vmem:[%s1677] sm:$0x1]
    %v1680 = vlaneseq
    %v1681 = vshrl.u32 %v1680, 7
    %v1682 = vsub.s32 0, %v1681
    %v1683 = vrot.slane %v1674, %v1682
    %1685 = vmatprep.subr.mxu0 0.0
    %1686 = vmatpush1.msra.mxu0 0.0
    %1687 = vmatprep.subr.mxu0 0.0
    %1688 = vmatpush1.msra.mxu0 0.0
    %1689 = vmatprep.subr.mxu0 0.0
    %1690 = vmatpush1.msra.mxu0 0.0
    %1691 = vmatprep.subr.mxu0 0.0
    %1692 = vmatpush1.msra.mxu0 0.0
    %1693 = vmatprep.subr.mxu0 0.0
    %1694 = vmatpush1.msra.mxu0 0.0
    %1695 = vmatprep.subr.mxu0 0.0
    %1696 = vmatpush1.msra.mxu0 0.0
    %1697 = vmatprep.subr.mxu0 0.0
    %1698 = vmatpush1.msra.mxu0 0.0
    %1699 = vmatprep.subr.mxu0 0.0
    %1700 = vmatpush1.msra.mxu0 0.0
    %1701 = vmatprep.subr.mxu0 0.0
    %1702 = vmatpush1.msra.mxu0 0.0
    %1703 = vmatprep.subr.mxu0 0.0
    %1704 = vmatpush1.msra.mxu0 0.0
    %1705 = vmatprep.subr.mxu0 0.0
    %1706 = vmatpush1.msra.mxu0 0.0
    %1707 = vmatprep.subr.mxu0 0.0
    %1708 = vmatpush1.msra.mxu0 0.0
    %1709 = vmatprep.subr.mxu0 0.0
    %1710 = vmatpush1.msra.mxu0 0.0
    %1711 = vmatprep.subr.mxu0 0.0
    %1712 = vmatpush1.msra.mxu0 0.0
    %1713 = vmatprep.subr.mxu0 0.0
    %1714 = vmatpush1.msra.mxu0 0.0
    %1715 = vmatprep.subr.mxu0 0.0
    %1716 = vmatpush1.msra.mxu0 %v1669
    %1717 = vmatprep.subr.mxu0 0.0
    %1718 = vmatpush2.msra.mxu0 0.0
    %1719 = vmatprep.subr.mxu0 0.0
    %1720 = vmatpush2.msra.mxu0 0.0
    %1721 = vmatprep.subr.mxu0 0.0
    %1722 = vmatpush2.msra.mxu0 0.0
    %1723 = vmatprep.subr.mxu0 0.0
    %1724 = vmatpush2.msra.mxu0 0.0
    %1725 = vmatprep.subr.mxu0 0.0
    %1726 = vmatpush2.msra.mxu0 0.0
    %1727 = vmatprep.subr.mxu0 0.0
    %1728 = vmatpush2.msra.mxu0 0.0
    %1729 = vmatprep.subr.mxu0 0.0
    %1730 = vmatpush2.msra.mxu0 0.0
    %1731 = vmatprep.subr.mxu0 0.0
    %1732 = vmatpush2.msra.mxu0 0.0
    %1733 = vmatprep.subr.mxu0 0.0
    %1734 = vmatpush2.msra.mxu0 0.0
    %1735 = vmatprep.subr.mxu0 0.0
    %1736 = vmatpush2.msra.mxu0 0.0
    %1737 = vmatprep.subr.mxu0 0.0
    %1738 = vmatpush2.msra.mxu0 0.0
    %1739 = vmatprep.subr.mxu0 0.0
    %1740 = vmatpush2.msra.mxu0 0.0
    %1741 = vmatprep.subr.mxu0 0.0
    %1742 = vmatpush2.msra.mxu0 0.0
    %1743 = vmatprep.subr.mxu0 0.0
    %1744 = vmatpush2.msra.mxu0 0.0
    %1745 = vmatprep.subr.mxu0 0.0
    %1746 = vmatpush2.msra.mxu0 0.0
    %1747 = vmatprep.subr.mxu0 0.0
    %1748 = vmatpush2.msra.mxu0 0.0
    %1749 = vmatprep.mubr.f32.mxu0 0.0
    %1750 = vmatmul.mubr.f32.gmra.mxu0 %v934
    %v1751 = vpop.f32.mrf.mxu0
    %v1752 = vadd.f32 %v1683, %v1751
    %v1753 = vpop.f32.mrf.mxu0
    %1754 = vdwg.mxu0
    %v1756 = vlaneseq
    %v1757 = vshrl.u32 %v1756, 7
    %v1758 = vsub.s32 0, %v1757
    %v1759 = vrot.slane %v1676, %v1758
    %1761 = vmatprep.subr.mxu0 0.0
    %1762 = vmatpush1.msra.mxu0 0.0
    %1763 = vmatprep.subr.mxu0 0.0
    %1764 = vmatpush1.msra.mxu0 0.0
    %1765 = vmatprep.subr.mxu0 0.0
    %1766 = vmatpush1.msra.mxu0 0.0
    %1767 = vmatprep.subr.mxu0 0.0
    %1768 = vmatpush1.msra.mxu0 0.0
    %1769 = vmatprep.subr.mxu0 0.0
    %1770 = vmatpush1.msra.mxu0 0.0
    %1771 = vmatprep.subr.mxu0 0.0
    %1772 = vmatpush1.msra.mxu0 0.0
    %1773 = vmatprep.subr.mxu0 0.0
    %1774 = vmatpush1.msra.mxu0 0.0
    %1775 = vmatprep.subr.mxu0 0.0
    %1776 = vmatpush1.msra.mxu0 0.0
    %1777 = vmatprep.subr.mxu0 0.0
    %1778 = vmatpush1.msra.mxu0 0.0
    %1779 = vmatprep.subr.mxu0 0.0
    %1780 = vmatpush1.msra.mxu0 0.0
    %1781 = vmatprep.subr.mxu0 0.0
    %1782 = vmatpush1.msra.mxu0 0.0
    %1783 = vmatprep.subr.mxu0 0.0
    %1784 = vmatpush1.msra.mxu0 0.0
    %1785 = vmatprep.subr.mxu0 0.0
    %1786 = vmatpush1.msra.mxu0 0.0
    %1787 = vmatprep.subr.mxu0 0.0
    %1788 = vmatpush1.msra.mxu0 0.0
    %1789 = vmatprep.subr.mxu0 0.0
    %1790 = vmatpush1.msra.mxu0 0.0
    %1791 = vmatprep.subr.mxu0 0.0
    %1792 = vmatpush1.msra.mxu0 %v1671
    %1793 = vmatprep.subr.mxu0 0.0
    %1794 = vmatpush2.msra.mxu0 0.0
    %1795 = vmatprep.subr.mxu0 0.0
    %1796 = vmatpush2.msra.mxu0 0.0
    %1797 = vmatprep.subr.mxu0 0.0
    %1798 = vmatpush2.msra.mxu0 0.0
    %1799 = vmatprep.subr.mxu0 0.0
    %1800 = vmatpush2.msra.mxu0 0.0
    %1801 = vmatprep.subr.mxu0 0.0
    %1802 = vmatpush2.msra.mxu0 0.0
    %1803 = vmatprep.subr.mxu0 0.0
    %1804 = vmatpush2.msra.mxu0 0.0
    %1805 = vmatprep.subr.mxu0 0.0
    %1806 = vmatpush2.msra.mxu0 0.0
    %1807 = vmatprep.subr.mxu0 0.0
    %1808 = vmatpush2.msra.mxu0 0.0
    %1809 = vmatprep.subr.mxu0 0.0
    %1810 = vmatpush2.msra.mxu0 0.0
    %1811 = vmatprep.subr.mxu0 0.0
    %1812 = vmatpush2.msra.mxu0 0.0
    %1813 = vmatprep.subr.mxu0 0.0
    %1814 = vmatpush2.msra.mxu0 0.0
    %1815 = vmatprep.subr.mxu0 0.0
    %1816 = vmatpush2.msra.mxu0 0.0
    %1817 = vmatprep.subr.mxu0 0.0
    %1818 = vmatpush2.msra.mxu0 0.0
    %1819 = vmatprep.subr.mxu0 0.0
    %1820 = vmatpush2.msra.mxu0 0.0
    %1821 = vmatprep.subr.mxu0 0.0
    %1822 = vmatpush2.msra.mxu0 0.0
    %1823 = vmatprep.subr.mxu0 0.0
    %1824 = vmatpush2.msra.mxu0 0.0
    %1825 = vmatprep.mubr.f32.mxu0 0.0
    %1826 = vmatmul.mubr.f32.gmra.mxu0 %v934
    %v1827 = vpop.f32.mrf.mxu0
    %v1828 = vadd.f32 %v1759, %v1827
    %v1829 = vpop.f32.mrf.mxu0
    %1830 = vdwg.mxu0
    %v1832 = vlaneseq
    %v1833 = vshrl.u32 %v1832, 7
    %v1834 = vsub.s32 0, %v1833
    %v1835 = vrot.slane %v1678, %v1834
    %1837 = vmatprep.subr.mxu0 0.0
    %1838 = vmatpush1.msra.mxu0 0.0
    %1839 = vmatprep.subr.mxu0 0.0
    %1840 = vmatpush1.msra.mxu0 0.0
    %1841 = vmatprep.subr.mxu0 0.0
    %1842 = vmatpush1.msra.mxu0 0.0
    %1843 = vmatprep.subr.mxu0 0.0
    %1844 = vmatpush1.msra.mxu0 0.0
    %1845 = vmatprep.subr.mxu0 0.0
    %1846 = vmatpush1.msra.mxu0 0.0
    %1847 = vmatprep.subr.mxu0 0.0
    %1848 = vmatpush1.msra.mxu0 0.0
    %1849 = vmatprep.subr.mxu0 0.0
    %1850 = vmatpush1.msra.mxu0 0.0
    %1851 = vmatprep.subr.mxu0 0.0
    %1852 = vmatpush1.msra.mxu0 0.0
    %1853 = vmatprep.subr.mxu0 0.0
    %1854 = vmatpush1.msra.mxu0 0.0
    %1855 = vmatprep.subr.mxu0 0.0
    %1856 = vmatpush1.msra.mxu0 0.0
    %1857 = vmatprep.subr.mxu0 0.0
    %1858 = vmatpush1.msra.mxu0 0.0
    %1859 = vmatprep.subr.mxu0 0.0
    %1860 = vmatpush1.msra.mxu0 0.0
    %1861 = vmatprep.subr.mxu0 0.0
    %1862 = vmatpush1.msra.mxu0 0.0
    %1863 = vmatprep.subr.mxu0 0.0
    %1864 = vmatpush1.msra.mxu0 0.0
    %1865 = vmatprep.subr.mxu0 0.0
    %1866 = vmatpush1.msra.mxu0 0.0
    %1867 = vmatprep.subr.mxu0 0.0
    %1868 = vmatpush1.msra.mxu0 %v1673
    %1869 = vmatprep.subr.mxu0 0.0
    %1870 = vmatpush2.msra.mxu0 0.0
    %1871 = vmatprep.subr.mxu0 0.0
    %1872 = vmatpush2.msra.mxu0 0.0
    %1873 = vmatprep.subr.mxu0 0.0
    %1874 = vmatpush2.msra.mxu0 0.0
    %1875 = vmatprep.subr.mxu0 0.0
    %1876 = vmatpush2.msra.mxu0 0.0
    %1877 = vmatprep.subr.mxu0 0.0
    %1878 = vmatpush2.msra.mxu0 0.0
    %1879 = vmatprep.subr.mxu0 0.0
    %1880 = vmatpush2.msra.mxu0 0.0
    %1881 = vmatprep.subr.mxu0 0.0
    %1882 = vmatpush2.msra.mxu0 0.0
    %1883 = vmatprep.subr.mxu0 0.0
    %1884 = vmatpush2.msra.mxu0 0.0
    %1885 = vmatprep.subr.mxu0 0.0
    %1886 = vmatpush2.msra.mxu0 0.0
    %1887 = vmatprep.subr.mxu0 0.0
    %1888 = vmatpush2.msra.mxu0 0.0
    %1889 = vmatprep.subr.mxu0 0.0
    %1890 = vmatpush2.msra.mxu0 0.0
    %1891 = vmatprep.subr.mxu0 0.0
    %1892 = vmatpush2.msra.mxu0 0.0
    %1893 = vmatprep.subr.mxu0 0.0
    %1894 = vmatpush2.msra.mxu0 0.0
    %1895 = vmatprep.subr.mxu0 0.0
    %1896 = vmatpush2.msra.mxu0 0.0
    %1897 = vmatprep.subr.mxu0 0.0
    %1898 = vmatpush2.msra.mxu0 0.0
    %1899 = vmatprep.subr.mxu0 0.0
    %1900 = vmatpush2.msra.mxu0 0.0
    %1901 = vmatprep.mubr.f32.mxu0 0.0
    %1902 = vmatmul.mubr.f32.gmra.mxu0 %v934
    %v1903 = vpop.f32.mrf.mxu0
    %v1904 = vadd.f32 %v1835, %v1903
    %v1905 = vpop.f32.mrf.mxu0
    %1906 = vdwg.mxu0
    %v1907 = vadd.f32 %v1494, %v1752
    %v1908 = vxor.u32 %v1907, 2147483648
    %v1909 = vmul.f32 %v1908, 1.442695
    %v1910 = vpow.pop %v1909
    %v1911 = vadd.f32 %v1910, 1.0
    %v1912 = vrcp.pop %v1911
    %v1913 = vmul.f32 1.0, %v1912
    %v1914 = vadd.f32 %v1580, %v1828
    %v1915 = vxor.u32 %v1914, 2147483648
    %v1916 = vmul.f32 %v1915, 1.442695
    %v1917 = vpow.pop %v1916
    %v1918 = vadd.f32 %v1917, 1.0
    %v1919 = vrcp.pop %v1918
    %v1920 = vmul.f32 1.0, %v1919
    %v1921 = vmul.f32 %v1913, %v1904
    %v1922 = vadd.f32 %v1666, %v1921
    %v1923 = vtanh.pop %v1922
    %v1924 = vsub.f32 1.0, %v1920
    %v1925 = vmul.f32 %v1924, %v1923
    %v1926 = vmul.f32 %v1920, 0.0
    %v1927 = vadd.f32 %v1925, %v1926
    %v1929 = vsel %vm932, %v1927, 0
    %1931 = vmatprep.subr.mxu0 0.0
    %1932 = vmatpush1.msra.mxu0 0.0
    %1933 = vmatprep.subr.mxu0 0.0
    %1934 = vmatpush1.msra.mxu0 0.0
    %1935 = vmatprep.subr.mxu0 0.0
    %1936 = vmatpush1.msra.mxu0 0.0
    %1937 = vmatprep.subr.mxu0 0.0
    %1938 = vmatpush1.msra.mxu0 0.0
    %1939 = vmatprep.subr.mxu0 0.0
    %1940 = vmatpush1.msra.mxu0 0.0
    %1941 = vmatprep.subr.mxu0 0.0
    %1942 = vmatpush1.msra.mxu0 0.0
    %1943 = vmatprep.subr.mxu0 0.0
    %1944 = vmatpush1.msra.mxu0 0.0
    %1945 = vmatprep.subr.mxu0 0.0
    %1946 = vmatpush1.msra.mxu0 0.0
    %1947 = vmatprep.subr.mxu0 0.0
    %1948 = vmatpush1.msra.mxu0 0.0
    %1949 = vmatprep.subr.mxu0 0.0
    %1950 = vmatpush1.msra.mxu0 0.0
    %1951 = vmatprep.subr.mxu0 0.0
    %1952 = vmatpush1.msra.mxu0 0.0
    %1953 = vmatprep.subr.mxu0 0.0
    %1954 = vmatpush1.msra.mxu0 0.0
    %1955 = vmatprep.subr.mxu0 0.0
    %1956 = vmatpush1.msra.mxu0 0.0
    %1957 = vmatprep.subr.mxu0 0.0
    %1958 = vmatpush1.msra.mxu0 0.0
    %1959 = vmatprep.subr.mxu0 0.0
    %1960 = vmatpush1.msra.mxu0 0.0
    %1961 = vmatprep.subr.mxu0 0.0
    %1962 = vmatpush1.msra.mxu0 %v1669
    %1963 = vmatprep.subr.mxu0 0.0
    %1964 = vmatpush2.msra.mxu0 0.0
    %1965 = vmatprep.subr.mxu0 0.0
    %1966 = vmatpush2.msra.mxu0 0.0
    %1967 = vmatprep.subr.mxu0 0.0
    %1968 = vmatpush2.msra.mxu0 0.0
    %1969 = vmatprep.subr.mxu0 0.0
    %1970 = vmatpush2.msra.mxu0 0.0
    %1971 = vmatprep.subr.mxu0 0.0
    %1972 = vmatpush2.msra.mxu0 0.0
    %1973 = vmatprep.subr.mxu0 0.0
    %1974 = vmatpush2.msra.mxu0 0.0
    %1975 = vmatprep.subr.mxu0 0.0
    %1976 = vmatpush2.msra.mxu0 0.0
    %1977 = vmatprep.subr.mxu0 0.0
    %1978 = vmatpush2.msra.mxu0 0.0
    %1979 = vmatprep.subr.mxu0 0.0
    %1980 = vmatpush2.msra.mxu0 0.0
    %1981 = vmatprep.subr.mxu0 0.0
    %1982 = vmatpush2.msra.mxu0 0.0
    %1983 = vmatprep.subr.mxu0 0.0
    %1984 = vmatpush2.msra.mxu0 0.0
    %1985 = vmatprep.subr.mxu0 0.0
    %1986 = vmatpush2.msra.mxu0 0.0
    %1987 = vmatprep.subr.mxu0 0.0
    %1988 = vmatpush2.msra.mxu0 0.0
    %1989 = vmatprep.subr.mxu0 0.0
    %1990 = vmatpush2.msra.mxu0 0.0
    %1991 = vmatprep.subr.mxu0 0.0
    %1992 = vmatpush2.msra.mxu0 0.0
    %1993 = vmatprep.subr.mxu0 0.0
    %1994 = vmatpush2.msra.mxu0 0.0
    %1995 = vmatprep.mubr.f32.mxu0 0.0
    %1996 = vmatmul.mubr.f32.gmra.mxu0 %v1929
    %v1997 = vpop.f32.mrf.mxu0
    %v1998 = vadd.f32 %v1683, %v1997
    %v1999 = vpop.f32.mrf.mxu0
    %2000 = vdwg.mxu0
    %2001 = vmatprep.subr.mxu0 0.0
    %2002 = vmatpush1.msra.mxu0 0.0
    %2003 = vmatprep.subr.mxu0 0.0
    %2004 = vmatpush1.msra.mxu0 0.0
    %2005 = vmatprep.subr.mxu0 0.0
    %2006 = vmatpush1.msra.mxu0 0.0
    %2007 = vmatprep.subr.mxu0 0.0
    %2008 = vmatpush1.msra.mxu0 0.0
    %2009 = vmatprep.subr.mxu0 0.0
    %2010 = vmatpush1.msra.mxu0 0.0
    %2011 = vmatprep.subr.mxu0 0.0
    %2012 = vmatpush1.msra.mxu0 0.0
    %2013 = vmatprep.subr.mxu0 0.0
    %2014 = vmatpush1.msra.mxu0 0.0
    %2015 = vmatprep.subr.mxu0 0.0
    %2016 = vmatpush1.msra.mxu0 0.0
    %2017 = vmatprep.subr.mxu0 0.0
    %2018 = vmatpush1.msra.mxu0 0.0
    %2019 = vmatprep.subr.mxu0 0.0
    %2020 = vmatpush1.msra.mxu0 0.0
    %2021 = vmatprep.subr.mxu0 0.0
    %2022 = vmatpush1.msra.mxu0 0.0
    %2023 = vmatprep.subr.mxu0 0.0
    %2024 = vmatpush1.msra.mxu0 0.0
    %2025 = vmatprep.subr.mxu0 0.0
    %2026 = vmatpush1.msra.mxu0 0.0
    %2027 = vmatprep.subr.mxu0 0.0
    %2028 = vmatpush1.msra.mxu0 0.0
    %2029 = vmatprep.subr.mxu0 0.0
    %2030 = vmatpush1.msra.mxu0 0.0
    %2031 = vmatprep.subr.mxu0 0.0
    %2032 = vmatpush1.msra.mxu0 %v1671
    %2033 = vmatprep.subr.mxu0 0.0
    %2034 = vmatpush2.msra.mxu0 0.0
    %2035 = vmatprep.subr.mxu0 0.0
    %2036 = vmatpush2.msra.mxu0 0.0
    %2037 = vmatprep.subr.mxu0 0.0
    %2038 = vmatpush2.msra.mxu0 0.0
    %2039 = vmatprep.subr.mxu0 0.0
    %2040 = vmatpush2.msra.mxu0 0.0
    %2041 = vmatprep.subr.mxu0 0.0
    %2042 = vmatpush2.msra.mxu0 0.0
    %2043 = vmatprep.subr.mxu0 0.0
    %2044 = vmatpush2.msra.mxu0 0.0
    %2045 = vmatprep.subr.mxu0 0.0
    %2046 = vmatpush2.msra.mxu0 0.0
    %2047 = vmatprep.subr.mxu0 0.0
    %2048 = vmatpush2.msra.mxu0 0.0
    %2049 = vmatprep.subr.mxu0 0.0
    %2050 = vmatpush2.msra.mxu0 0.0
    %2051 = vmatprep.subr.mxu0 0.0
    %2052 = vmatpush2.msra.mxu0 0.0
    %2053 = vmatprep.subr.mxu0 0.0
    %2054 = vmatpush2.msra.mxu0 0.0
    %2055 = vmatprep.subr.mxu0 0.0
    %2056 = vmatpush2.msra.mxu0 0.0
    %2057 = vmatprep.subr.mxu0 0.0
    %2058 = vmatpush2.msra.mxu0 0.0
    %2059 = vmatprep.subr.mxu0 0.0
    %2060 = vmatpush2.msra.mxu0 0.0
    %2061 = vmatprep.subr.mxu0 0.0
    %2062 = vmatpush2.msra.mxu0 0.0
    %2063 = vmatprep.subr.mxu0 0.0
    %2064 = vmatpush2.msra.mxu0 0.0
    %2065 = vmatprep.mubr.f32.mxu0 0.0
    %2066 = vmatmul.mubr.f32.gmra.mxu0 %v1929
    %v2067 = vpop.f32.mrf.mxu0
    %v2068 = vadd.f32 %v1759, %v2067
    %v2069 = vpop.f32.mrf.mxu0
    %2070 = vdwg.mxu0
    %2071 = vmatprep.subr.mxu0 0.0
    %2072 = vmatpush1.msra.mxu0 0.0
    %2073 = vmatprep.subr.mxu0 0.0
    %2074 = vmatpush1.msra.mxu0 0.0
    %2075 = vmatprep.subr.mxu0 0.0
    %2076 = vmatpush1.msra.mxu0 0.0
    %2077 = vmatprep.subr.mxu0 0.0
    %2078 = vmatpush1.msra.mxu0 0.0
    %2079 = vmatprep.subr.mxu0 0.0
    %2080 = vmatpush1.msra.mxu0 0.0
    %2081 = vmatprep.subr.mxu0 0.0
    %2082 = vmatpush1.msra.mxu0 0.0
    %2083 = vmatprep.subr.mxu0 0.0
    %2084 = vmatpush1.msra.mxu0 0.0
    %2085 = vmatprep.subr.mxu0 0.0
    %2086 = vmatpush1.msra.mxu0 0.0
    %2087 = vmatprep.subr.mxu0 0.0
    %2088 = vmatpush1.msra.mxu0 0.0
    %2089 = vmatprep.subr.mxu0 0.0
    %2090 = vmatpush1.msra.mxu0 0.0
    %2091 = vmatprep.subr.mxu0 0.0
    %2092 = vmatpush1.msra.mxu0 0.0
    %2093 = vmatprep.subr.mxu0 0.0
    %2094 = vmatpush1.msra.mxu0 0.0
    %2095 = vmatprep.subr.mxu0 0.0
    %2096 = vmatpush1.msra.mxu0 0.0
    %2097 = vmatprep.subr.mxu0 0.0
    %2098 = vmatpush1.msra.mxu0 0.0
    %2099 = vmatprep.subr.mxu0 0.0
    %2100 = vmatpush1.msra.mxu0 0.0
    %2101 = vmatprep.subr.mxu0 0.0
    %2102 = vmatpush1.msra.mxu0 %v1673
    %2103 = vmatprep.subr.mxu0 0.0
    %2104 = vmatpush2.msra.mxu0 0.0
    %2105 = vmatprep.subr.mxu0 0.0
    %2106 = vmatpush2.msra.mxu0 0.0
    %2107 = vmatprep.subr.mxu0 0.0
    %2108 = vmatpush2.msra.mxu0 0.0
    %2109 = vmatprep.subr.mxu0 0.0
    %2110 = vmatpush2.msra.mxu0 0.0
    %2111 = vmatprep.subr.mxu0 0.0
    %2112 = vmatpush2.msra.mxu0 0.0
    %2113 = vmatprep.subr.mxu0 0.0
    %2114 = vmatpush2.msra.mxu0 0.0
    %2115 = vmatprep.subr.mxu0 0.0
    %2116 = vmatpush2.msra.mxu0 0.0
    %2117 = vmatprep.subr.mxu0 0.0
    %2118 = vmatpush2.msra.mxu0 0.0
    %2119 = vmatprep.subr.mxu0 0.0
    %2120 = vmatpush2.msra.mxu0 0.0
    %2121 = vmatprep.subr.mxu0 0.0
    %2122 = vmatpush2.msra.mxu0 0.0
    %2123 = vmatprep.subr.mxu0 0.0
    %2124 = vmatpush2.msra.mxu0 0.0
    %2125 = vmatprep.subr.mxu0 0.0
    %2126 = vmatpush2.msra.mxu0 0.0
    %2127 = vmatprep.subr.mxu0 0.0
    %2128 = vmatpush2.msra.mxu0 0.0
    %2129 = vmatprep.subr.mxu0 0.0
    %2130 = vmatpush2.msra.mxu0 0.0
    %2131 = vmatprep.subr.mxu0 0.0
    %2132 = vmatpush2.msra.mxu0 0.0
    %2133 = vmatprep.subr.mxu0 0.0
    %2134 = vmatpush2.msra.mxu0 0.0
    %2135 = vmatprep.mubr.f32.mxu0 0.0
    %2136 = vmatmul.mubr.f32.gmra.mxu0 %v1929
    %v2137 = vpop.f32.mrf.mxu0
    %v2138 = vadd.f32 %v1835, %v2137
    %v2139 = vpop.f32.mrf.mxu0
    %2140 = vdwg.mxu0
    %v2141 = vadd.f32 %v1489, %v1998
    %v2142 = vxor.u32 %v2141, 2147483648
    %v2143 = vmul.f32 %v2142, 1.442695
    %v2144 = vpow.pop %v2143
    %v2145 = vadd.f32 %v2144, 1.0
    %v2146 = vrcp.pop %v2145
    %v2147 = vmul.f32 1.0, %v2146
    %v2148 = vadd.f32 %v1575, %v2068
    %v2149 = vxor.u32 %v2148, 2147483648
    %v2150 = vmul.f32 %v2149, 1.442695
    %v2151 = vpow.pop %v2150
    %v2152 = vadd.f32 %v2151, 1.0
    %v2153 = vrcp.pop %v2152
    %v2154 = vmul.f32 1.0, %v2153
    %v2155 = vmul.f32 %v2147, %v2138
    %v2156 = vadd.f32 %v1661, %v2155
    %v2157 = vtanh.pop %v2156
    %v2158 = vsub.f32 1.0, %v2154
    %v2159 = vmul.f32 %v2158, %v2157
    %v2160 = vmul.f32 %v2154, %v1927
    %v2161 = vadd.f32 %v2159, %v2160
    %v2162 = vld [vmem:[%s14] sm:$0xff]
    %v2163 = vld [vmem:[%s14 + $0x8] sm:$0xff]
    %v2165 = vsel %vm932, %v2161, 0
    %2167 = vmatprep.subr.mxu0 0.0
    %2168 = vmatpush1.msra.mxu0 0.0
    %2169 = vmatprep.subr.mxu0 0.0
    %2170 = vmatpush1.msra.mxu0 0.0
    %2171 = vmatprep.subr.mxu0 0.0
    %2172 = vmatpush1.msra.mxu0 0.0
    %2173 = vmatprep.subr.mxu0 0.0
    %2174 = vmatpush1.msra.mxu0 0.0
    %2175 = vmatprep.subr.mxu0 0.0
    %2176 = vmatpush1.msra.mxu0 0.0
    %2177 = vmatprep.subr.mxu0 0.0
    %2178 = vmatpush1.msra.mxu0 0.0
    %2179 = vmatprep.subr.mxu0 0.0
    %2180 = vmatpush1.msra.mxu0 0.0
    %2181 = vmatprep.subr.mxu0 0.0
    %2182 = vmatpush1.msra.mxu0 0.0
    %2183 = vmatprep.subr.mxu0 0.0
    %2184 = vmatpush1.msra.mxu0 0.0
    %2185 = vmatprep.subr.mxu0 0.0
    %2186 = vmatpush1.msra.mxu0 0.0
    %2187 = vmatprep.subr.mxu0 0.0
    %2188 = vmatpush1.msra.mxu0 0.0
    %2189 = vmatprep.subr.mxu0 0.0
    %2190 = vmatpush1.msra.mxu0 0.0
    %2191 = vmatprep.subr.mxu0 0.0
    %2192 = vmatpush1.msra.mxu0 0.0
    %2193 = vmatprep.subr.mxu0 0.0
    %2194 = vmatpush1.msra.mxu0 0.0
    %2195 = vmatprep.subr.mxu0 0.0
    %2196 = vmatpush1.msra.mxu0 0.0
    %2197 = vmatprep.subr.mxu0 0.0
    %2198 = vmatpush1.msra.mxu0 %v2163
    %2199 = vmatprep.subr.mxu0 0.0
    %2200 = vmatpush2.msra.mxu0 0.0
    %2201 = vmatprep.subr.mxu0 0.0
    %2202 = vmatpush2.msra.mxu0 0.0
    %2203 = vmatprep.subr.mxu0 0.0
    %2204 = vmatpush2.msra.mxu0 0.0
    %2205 = vmatprep.subr.mxu0 0.0
    %2206 = vmatpush2.msra.mxu0 0.0
    %2207 = vmatprep.subr.mxu0 0.0
    %2208 = vmatpush2.msra.mxu0 0.0
    %2209 = vmatprep.subr.mxu0 0.0
    %2210 = vmatpush2.msra.mxu0 0.0
    %2211 = vmatprep.subr.mxu0 0.0
    %2212 = vmatpush2.msra.mxu0 0.0
    %2213 = vmatprep.subr.mxu0 0.0
    %2214 = vmatpush2.msra.mxu0 0.0
    %2215 = vmatprep.subr.mxu0 0.0
    %2216 = vmatpush2.msra.mxu0 0.0
    %2217 = vmatprep.subr.mxu0 0.0
    %2218 = vmatpush2.msra.mxu0 0.0
    %2219 = vmatprep.subr.mxu0 0.0
    %2220 = vmatpush2.msra.mxu0 0.0
    %2221 = vmatprep.subr.mxu0 0.0
    %2222 = vmatpush2.msra.mxu0 0.0
    %2223 = vmatprep.subr.mxu0 0.0
    %2224 = vmatpush2.msra.mxu0 0.0
    %2225 = vmatprep.subr.mxu0 0.0
    %2226 = vmatpush2.msra.mxu0 0.0
    %2227 = vmatprep.subr.mxu0 0.0
    %2228 = vmatpush2.msra.mxu0 0.0
    %2229 = vmatprep.subr.mxu0 0.0
    %2230 = vmatpush2.msra.mxu0 0.0
    %2231 = vmatprep.mubr.f32.mxu0 0.0
    %2232 = vmatmul.mubr.f32.gmra.mxu0 %v2165
    %v2233 = vpop.f32.mrf.mxu0
    %v2234 = vadd.f32 0.0, %v2233
    %v2235 = vpop.f32.mrf.mxu0
    %2236 = vmatprep.mubr.f32.mxu0 0.0
    %2237 = vmatmul.mubr.f32.gmra.mxu0 %v1929
    %v2238 = vpop.f32.mrf.mxu0
    %v2239 = vadd.f32 0.0, %v2238
    %v2240 = vpop.f32.mrf.mxu0
    %2241 = vdwg.mxu0
    %v2243 = vsel %vm932, %v1412, 0
    %2245 = vmatprep.subr.mxu0 0.0
    %2246 = vmatpush1.msra.mxu0 0.0
    %2247 = vmatprep.subr.mxu0 0.0
    %2248 = vmatpush1.msra.mxu0 0.0
    %2249 = vmatprep.subr.mxu0 0.0
    %2250 = vmatpush1.msra.mxu0 0.0
    %2251 = vmatprep.subr.mxu0 0.0
    %2252 = vmatpush1.msra.mxu0 0.0
    %2253 = vmatprep.subr.mxu0 0.0
    %2254 = vmatpush1.msra.mxu0 0.0
    %2255 = vmatprep.subr.mxu0 0.0
    %2256 = vmatpush1.msra.mxu0 0.0
    %2257 = vmatprep.subr.mxu0 0.0
    %2258 = vmatpush1.msra.mxu0 0.0
    %2259 = vmatprep.subr.mxu0 0.0
    %2260 = vmatpush1.msra.mxu0 0.0
    %2261 = vmatprep.subr.mxu0 0.0
    %2262 = vmatpush1.msra.mxu0 0.0
    %2263 = vmatprep.subr.mxu0 0.0
    %2264 = vmatpush1.msra.mxu0 0.0
    %2265 = vmatprep.subr.mxu0 0.0
    %2266 = vmatpush1.msra.mxu0 0.0
    %2267 = vmatprep.subr.mxu0 0.0
    %2268 = vmatpush1.msra.mxu0 0.0
    %2269 = vmatprep.subr.mxu0 0.0
    %2270 = vmatpush1.msra.mxu0 0.0
    %2271 = vmatprep.subr.mxu0 0.0
    %2272 = vmatpush1.msra.mxu0 0.0
    %2273 = vmatprep.subr.mxu0 0.0
    %2274 = vmatpush1.msra.mxu0 0.0
    %2275 = vmatprep.subr.mxu0 0.0
    %2276 = vmatpush1.msra.mxu0 %v2162
    %2277 = vmatprep.subr.mxu0 0.0
    %2278 = vmatpush2.msra.mxu0 0.0
    %2279 = vmatprep.subr.mxu0 0.0
    %2280 = vmatpush2.msra.mxu0 0.0
    %2281 = vmatprep.subr.mxu0 0.0
    %2282 = vmatpush2.msra.mxu0 0.0
    %2283 = vmatprep.subr.mxu0 0.0
    %2284 = vmatpush2.msra.mxu0 0.0
    %2285 = vmatprep.subr.mxu0 0.0
    %2286 = vmatpush2.msra.mxu0 0.0
    %2287 = vmatprep.subr.mxu0 0.0
    %2288 = vmatpush2.msra.mxu0 0.0
    %2289 = vmatprep.subr.mxu0 0.0
    %2290 = vmatpush2.msra.mxu0 0.0
    %2291 = vmatprep.subr.mxu0 0.0
    %2292 = vmatpush2.msra.mxu0 0.0
    %2293 = vmatprep.subr.mxu0 0.0
    %2294 = vmatpush2.msra.mxu0 0.0
    %2295 = vmatprep.subr.mxu0 0.0
    %2296 = vmatpush2.msra.mxu0 0.0
    %2297 = vmatprep.subr.mxu0 0.0
    %2298 = vmatpush2.msra.mxu0 0.0
    %2299 = vmatprep.subr.mxu0 0.0
    %2300 = vmatpush2.msra.mxu0 0.0
    %2301 = vmatprep.subr.mxu0 0.0
    %2302 = vmatpush2.msra.mxu0 0.0
    %2303 = vmatprep.subr.mxu0 0.0
    %2304 = vmatpush2.msra.mxu0 0.0
    %2305 = vmatprep.subr.mxu0 0.0
    %2306 = vmatpush2.msra.mxu0 0.0
    %2307 = vmatprep.subr.mxu0 0.0
    %2308 = vmatpush2.msra.mxu0 0.0
    %2309 = vmatprep.mubr.f32.mxu0 0.0
    %2310 = vmatmul.mubr.f32.gmra.mxu0 %v1180
    %v2311 = vpop.f32.mrf.mxu0
    %v2312 = vadd.f32 %v2234, %v2311
    %v2313 = vpop.f32.mrf.mxu0
    %2314 = vmatprep.mubr.f32.mxu0 0.0
    %2315 = vmatmul.mubr.f32.gmra.mxu0 %v2243
    %v2316 = vpop.f32.mrf.mxu0
    %v2317 = vadd.f32 %v2239, %v2316
    %v2318 = vpop.f32.mrf.mxu0
    %2319 = vdwg.mxu0
    %v2320 = vld [vmem:[%s15] sm:$0x1]
    %v2322 = vlaneseq
    %v2323 = vshrl.u32 %v2322, 7
    %v2324 = vsub.s32 0, %v2323
    %v2325 = vrot.slane %v2320, %v2324
    %v2327 = vadd.f32 %v2312, %v2325
    %v2328 = vadd.f32 %v2317, %v2325
    %s2329 = scalar_lea.vmem %s14, 16
    %v2330 = vld [vmem:[%s2329] sm:$0xff]
    %v2331 = vld [vmem:[%s2329 + $0x8] sm:$0xff]
    %2332 = vmatprep.subr.mxu0 0.0
    %2333 = vmatpush1.msra.mxu0 0.0
    %2334 = vmatprep.subr.mxu0 0.0
    %2335 = vmatpush1.msra.mxu0 0.0
    %2336 = vmatprep.subr.mxu0 0.0
    %2337 = vmatpush1.msra.mxu0 0.0
    %2338 = vmatprep.subr.mxu0 0.0
    %2339 = vmatpush1.msra.mxu0 0.0
    %2340 = vmatprep.subr.mxu0 0.0
    %2341 = vmatpush1.msra.mxu0 0.0
    %2342 = vmatprep.subr.mxu0 0.0
    %2343 = vmatpush1.msra.mxu0 0.0
    %2344 = vmatprep.subr.mxu0 0.0
    %2345 = vmatpush1.msra.mxu0 0.0
    %2346 = vmatprep.subr.mxu0 0.0
    %2347 = vmatpush1.msra.mxu0 0.0
    %2348 = vmatprep.subr.mxu0 0.0
    %2349 = vmatpush1.msra.mxu0 0.0
    %2350 = vmatprep.subr.mxu0 0.0
    %2351 = vmatpush1.msra.mxu0 0.0
    %2352 = vmatprep.subr.mxu0 0.0
    %2353 = vmatpush1.msra.mxu0 0.0
    %2354 = vmatprep.subr.mxu0 0.0
    %2355 = vmatpush1.msra.mxu0 0.0
    %2356 = vmatprep.subr.mxu0 0.0
    %2357 = vmatpush1.msra.mxu0 0.0
    %2358 = vmatprep.subr.mxu0 0.0
    %2359 = vmatpush1.msra.mxu0 0.0
    %2360 = vmatprep.subr.mxu0 0.0
    %2361 = vmatpush1.msra.mxu0 0.0
    %2362 = vmatprep.subr.mxu0 0.0
    %2363 = vmatpush1.msra.mxu0 %v2331
    %2364 = vmatprep.subr.mxu0 0.0
    %2365 = vmatpush2.msra.mxu0 0.0
    %2366 = vmatprep.subr.mxu0 0.0
    %2367 = vmatpush2.msra.mxu0 0.0
    %2368 = vmatprep.subr.mxu0 0.0
    %2369 = vmatpush2.msra.mxu0 0.0
    %2370 = vmatprep.subr.mxu0 0.0
    %2371 = vmatpush2.msra.mxu0 0.0
    %2372 = vmatprep.subr.mxu0 0.0
    %2373 = vmatpush2.msra.mxu0 0.0
    %2374 = vmatprep.subr.mxu0 0.0
    %2375 = vmatpush2.msra.mxu0 0.0
    %2376 = vmatprep.subr.mxu0 0.0
    %2377 = vmatpush2.msra.mxu0 0.0
    %2378 = vmatprep.subr.mxu0 0.0
    %2379 = vmatpush2.msra.mxu0 0.0
    %2380 = vmatprep.subr.mxu0 0.0
    %2381 = vmatpush2.msra.mxu0 0.0
    %2382 = vmatprep.subr.mxu0 0.0
    %2383 = vmatpush2.msra.mxu0 0.0
    %2384 = vmatprep.subr.mxu0 0.0
    %2385 = vmatpush2.msra.mxu0 0.0
    %2386 = vmatprep.subr.mxu0 0.0
    %2387 = vmatpush2.msra.mxu0 0.0
    %2388 = vmatprep.subr.mxu0 0.0
    %2389 = vmatpush2.msra.mxu0 0.0
    %2390 = vmatprep.subr.mxu0 0.0
    %2391 = vmatpush2.msra.mxu0 0.0
    %2392 = vmatprep.subr.mxu0 0.0
    %2393 = vmatpush2.msra.mxu0 0.0
    %2394 = vmatprep.subr.mxu0 0.0
    %2395 = vmatpush2.msra.mxu0 0.0
    %2396 = vmatprep.mubr.f32.mxu0 0.0
    %2397 = vmatmul.mubr.f32.gmra.mxu0 %v2165
    %v2398 = vpop.f32.mrf.mxu0
    %v2399 = vadd.f32 0.0, %v2398
    %v2400 = vpop.f32.mrf.mxu0
    %2401 = vmatprep.mubr.f32.mxu0 0.0
    %2402 = vmatmul.mubr.f32.gmra.mxu0 %v1929
    %v2403 = vpop.f32.mrf.mxu0
    %v2404 = vadd.f32 0.0, %v2403
    %v2405 = vpop.f32.mrf.mxu0
    %2406 = vdwg.mxu0
    %2407 = vmatprep.subr.mxu0 0.0
    %2408 = vmatpush1.msra.mxu0 0.0
    %2409 = vmatprep.subr.mxu0 0.0
    %2410 = vmatpush1.msra.mxu0 0.0
    %2411 = vmatprep.subr.mxu0 0.0
    %2412 = vmatpush1.msra.mxu0 0.0
    %2413 = vmatprep.subr.mxu0 0.0
    %2414 = vmatpush1.msra.mxu0 0.0
    %2415 = vmatprep.subr.mxu0 0.0
    %2416 = vmatpush1.msra.mxu0 0.0
    %2417 = vmatprep.subr.mxu0 0.0
    %2418 = vmatpush1.msra.mxu0 0.0
    %2419 = vmatprep.subr.mxu0 0.0
    %2420 = vmatpush1.msra.mxu0 0.0
    %2421 = vmatprep.subr.mxu0 0.0
    %2422 = vmatpush1.msra.mxu0 0.0
    %2423 = vmatprep.subr.mxu0 0.0
    %2424 = vmatpush1.msra.mxu0 0.0
    %2425 = vmatprep.subr.mxu0 0.0
    %2426 = vmatpush1.msra.mxu0 0.0
    %2427 = vmatprep.subr.mxu0 0.0
    %2428 = vmatpush1.msra.mxu0 0.0
    %2429 = vmatprep.subr.mxu0 0.0
    %2430 = vmatpush1.msra.mxu0 0.0
    %2431 = vmatprep.subr.mxu0 0.0
    %2432 = vmatpush1.msra.mxu0 0.0
    %2433 = vmatprep.subr.mxu0 0.0
    %2434 = vmatpush1.msra.mxu0 0.0
    %2435 = vmatprep.subr.mxu0 0.0
    %2436 = vmatpush1.msra.mxu0 0.0
    %2437 = vmatprep.subr.mxu0 0.0
    %2438 = vmatpush1.msra.mxu0 %v2330
    %2439 = vmatprep.subr.mxu0 0.0
    %2440 = vmatpush2.msra.mxu0 0.0
    %2441 = vmatprep.subr.mxu0 0.0
    %2442 = vmatpush2.msra.mxu0 0.0
    %2443 = vmatprep.subr.mxu0 0.0
    %2444 = vmatpush2.msra.mxu0 0.0
    %2445 = vmatprep.subr.mxu0 0.0
    %2446 = vmatpush2.msra.mxu0 0.0
    %2447 = vmatprep.subr.mxu0 0.0
    %2448 = vmatpush2.msra.mxu0 0.0
    %2449 = vmatprep.subr.mxu0 0.0
    %2450 = vmatpush2.msra.mxu0 0.0
    %2451 = vmatprep.subr.mxu0 0.0
    %2452 = vmatpush2.msra.mxu0 0.0
    %2453 = vmatprep.subr.mxu0 0.0
    %2454 = vmatpush2.msra.mxu0 0.0
    %2455 = vmatprep.subr.mxu0 0.0
    %2456 = vmatpush2.msra.mxu0 0.0
    %2457 = vmatprep.subr.mxu0 0.0
    %2458 = vmatpush2.msra.mxu0 0.0
    %2459 = vmatprep.subr.mxu0 0.0
    %2460 = vmatpush2.msra.mxu0 0.0
    %2461 = vmatprep.subr.mxu0 0.0
    %2462 = vmatpush2.msra.mxu0 0.0
    %2463 = vmatprep.subr.mxu0 0.0
    %2464 = vmatpush2.msra.mxu0 0.0
    %2465 = vmatprep.subr.mxu0 0.0
    %2466 = vmatpush2.msra.mxu0 0.0
    %2467 = vmatprep.subr.mxu0 0.0
    %2468 = vmatpush2.msra.mxu0 0.0
    %2469 = vmatprep.subr.mxu0 0.0
    %2470 = vmatpush2.msra.mxu0 0.0
    %2471 = vmatprep.mubr.f32.mxu0 0.0
    %2472 = vmatmul.mubr.f32.gmra.mxu0 %v1180
    %v2473 = vpop.f32.mrf.mxu0
    %v2474 = vadd.f32 %v2399, %v2473
    %v2475 = vpop.f32.mrf.mxu0
    %2476 = vmatprep.mubr.f32.mxu0 0.0
    %2477 = vmatmul.mubr.f32.gmra.mxu0 %v2243
    %v2478 = vpop.f32.mrf.mxu0
    %v2479 = vadd.f32 %v2404, %v2478
    %v2480 = vpop.f32.mrf.mxu0
    %2481 = vdwg.mxu0
    %s2482 = scalar_lea.vmem %s15, 1
    %v2483 = vld [vmem:[%s2482] sm:$0x1]
    %v2485 = vlaneseq
    %v2486 = vshrl.u32 %v2485, 7
    %v2487 = vsub.s32 0, %v2486
    %v2488 = vrot.slane %v2483, %v2487
    %v2490 = vadd.f32 %v2474, %v2488
    %v2491 = vadd.f32 %v2479, %v2488
    %s2492 = scalar_lea.vmem %s14, 32
    %v2493 = vld [vmem:[%s2492] sm:$0xff]
    %v2494 = vld [vmem:[%s2492 + $0x8] sm:$0xff]
    %2495 = vmatprep.subr.mxu0 0.0
    %2496 = vmatpush1.msra.mxu0 0.0
    %2497 = vmatprep.subr.mxu0 0.0
    %2498 = vmatpush1.msra.mxu0 0.0
    %2499 = vmatprep.subr.mxu0 0.0
    %2500 = vmatpush1.msra.mxu0 0.0
    %2501 = vmatprep.subr.mxu0 0.0
    %2502 = vmatpush1.msra.mxu0 0.0
    %2503 = vmatprep.subr.mxu0 0.0
    %2504 = vmatpush1.msra.mxu0 0.0
    %2505 = vmatprep.subr.mxu0 0.0
    %2506 = vmatpush1.msra.mxu0 0.0
    %2507 = vmatprep.subr.mxu0 0.0
    %2508 = vmatpush1.msra.mxu0 0.0
    %2509 = vmatprep.subr.mxu0 0.0
    %2510 = vmatpush1.msra.mxu0 0.0
    %2511 = vmatprep.subr.mxu0 0.0
    %2512 = vmatpush1.msra.mxu0 0.0
    %2513 = vmatprep.subr.mxu0 0.0
    %2514 = vmatpush1.msra.mxu0 0.0
    %2515 = vmatprep.subr.mxu0 0.0
    %2516 = vmatpush1.msra.mxu0 0.0
    %2517 = vmatprep.subr.mxu0 0.0
    %2518 = vmatpush1.msra.mxu0 0.0
    %2519 = vmatprep.subr.mxu0 0.0
    %2520 = vmatpush1.msra.mxu0 0.0
    %2521 = vmatprep.subr.mxu0 0.0
    %2522 = vmatpush1.msra.mxu0 0.0
    %2523 = vmatprep.subr.mxu0 0.0
    %2524 = vmatpush1.msra.mxu0 0.0
    %2525 = vmatprep.subr.mxu0 0.0
    %2526 = vmatpush1.msra.mxu0 %v2494
    %2527 = vmatprep.subr.mxu0 0.0
    %2528 = vmatpush2.msra.mxu0 0.0
    %2529 = vmatprep.subr.mxu0 0.0
    %2530 = vmatpush2.msra.mxu0 0.0
    %2531 = vmatprep.subr.mxu0 0.0
    %2532 = vmatpush2.msra.mxu0 0.0
    %2533 = vmatprep.subr.mxu0 0.0
    %2534 = vmatpush2.msra.mxu0 0.0
    %2535 = vmatprep.subr.mxu0 0.0
    %2536 = vmatpush2.msra.mxu0 0.0
    %2537 = vmatprep.subr.mxu0 0.0
    %2538 = vmatpush2.msra.mxu0 0.0
    %2539 = vmatprep.subr.mxu0 0.0
    %2540 = vmatpush2.msra.mxu0 0.0
    %2541 = vmatprep.subr.mxu0 0.0
    %2542 = vmatpush2.msra.mxu0 0.0
    %2543 = vmatprep.subr.mxu0 0.0
    %2544 = vmatpush2.msra.mxu0 0.0
    %2545 = vmatprep.subr.mxu0 0.0
    %2546 = vmatpush2.msra.mxu0 0.0
    %2547 = vmatprep.subr.mxu0 0.0
    %2548 = vmatpush2.msra.mxu0 0.0
    %2549 = vmatprep.subr.mxu0 0.0
    %2550 = vmatpush2.msra.mxu0 0.0
    %2551 = vmatprep.subr.mxu0 0.0
    %2552 = vmatpush2.msra.mxu0 0.0
    %2553 = vmatprep.subr.mxu0 0.0
    %2554 = vmatpush2.msra.mxu0 0.0
    %2555 = vmatprep.subr.mxu0 0.0
    %2556 = vmatpush2.msra.mxu0 0.0
    %2557 = vmatprep.subr.mxu0 0.0
    %2558 = vmatpush2.msra.mxu0 0.0
    %2559 = vmatprep.mubr.f32.mxu0 0.0
    %2560 = vmatmul.mubr.f32.gmra.mxu0 %v2165
    %v2561 = vpop.f32.mrf.mxu0
    %v2562 = vadd.f32 0.0, %v2561
    %v2563 = vpop.f32.mrf.mxu0
    %2564 = vmatprep.mubr.f32.mxu0 0.0
    %2565 = vmatmul.mubr.f32.gmra.mxu0 %v1929
    %v2566 = vpop.f32.mrf.mxu0
    %v2567 = vadd.f32 0.0, %v2566
    %v2568 = vpop.f32.mrf.mxu0
    %2569 = vdwg.mxu0
    %2570 = vmatprep.subr.mxu0 0.0
    %2571 = vmatpush1.msra.mxu0 0.0
    %2572 = vmatprep.subr.mxu0 0.0
    %2573 = vmatpush1.msra.mxu0 0.0
    %2574 = vmatprep.subr.mxu0 0.0
    %2575 = vmatpush1.msra.mxu0 0.0
    %2576 = vmatprep.subr.mxu0 0.0
    %2577 = vmatpush1.msra.mxu0 0.0
    %2578 = vmatprep.subr.mxu0 0.0
    %2579 = vmatpush1.msra.mxu0 0.0
    %2580 = vmatprep.subr.mxu0 0.0
    %2581 = vmatpush1.msra.mxu0 0.0
    %2582 = vmatprep.subr.mxu0 0.0
    %2583 = vmatpush1.msra.mxu0 0.0
    %2584 = vmatprep.subr.mxu0 0.0
    %2585 = vmatpush1.msra.mxu0 0.0
    %2586 = vmatprep.subr.mxu0 0.0
    %2587 = vmatpush1.msra.mxu0 0.0
    %2588 = vmatprep.subr.mxu0 0.0
    %2589 = vmatpush1.msra.mxu0 0.0
    %2590 = vmatprep.subr.mxu0 0.0
    %2591 = vmatpush1.msra.mxu0 0.0
    %2592 = vmatprep.subr.mxu0 0.0
    %2593 = vmatpush1.msra.mxu0 0.0
    %2594 = vmatprep.subr.mxu0 0.0
    %2595 = vmatpush1.msra.mxu0 0.0
    %2596 = vmatprep.subr.mxu0 0.0
    %2597 = vmatpush1.msra.mxu0 0.0
    %2598 = vmatprep.subr.mxu0 0.0
    %2599 = vmatpush1.msra.mxu0 0.0
    %2600 = vmatprep.subr.mxu0 0.0
    %2601 = vmatpush1.msra.mxu0 %v2493
    %2602 = vmatprep.subr.mxu0 0.0
    %2603 = vmatpush2.msra.mxu0 0.0
    %2604 = vmatprep.subr.mxu0 0.0
    %2605 = vmatpush2.msra.mxu0 0.0
    %2606 = vmatprep.subr.mxu0 0.0
    %2607 = vmatpush2.msra.mxu0 0.0
    %2608 = vmatprep.subr.mxu0 0.0
    %2609 = vmatpush2.msra.mxu0 0.0
    %2610 = vmatprep.subr.mxu0 0.0
    %2611 = vmatpush2.msra.mxu0 0.0
    %2612 = vmatprep.subr.mxu0 0.0
    %2613 = vmatpush2.msra.mxu0 0.0
    %2614 = vmatprep.subr.mxu0 0.0
    %2615 = vmatpush2.msra.mxu0 0.0
    %2616 = vmatprep.subr.mxu0 0.0
    %2617 = vmatpush2.msra.mxu0 0.0
    %2618 = vmatprep.subr.mxu0 0.0
    %2619 = vmatpush2.msra.mxu0 0.0
    %2620 = vmatprep.subr.mxu0 0.0
    %2621 = vmatpush2.msra.mxu0 0.0
    %2622 = vmatprep.subr.mxu0 0.0
    %2623 = vmatpush2.msra.mxu0 0.0
    %2624 = vmatprep.subr.mxu0 0.0
    %2625 = vmatpush2.msra.mxu0 0.0
    %2626 = vmatprep.subr.mxu0 0.0
    %2627 = vmatpush2.msra.mxu0 0.0
    %2628 = vmatprep.subr.mxu0 0.0
    %2629 = vmatpush2.msra.mxu0 0.0
    %2630 = vmatprep.subr.mxu0 0.0
    %2631 = vmatpush2.msra.mxu0 0.0
    %2632 = vmatprep.subr.mxu0 0.0
    %2633 = vmatpush2.msra.mxu0 0.0
    %2634 = vmatprep.mubr.f32.mxu0 0.0
    %2635 = vmatmul.mubr.f32.gmra.mxu0 %v1180
    %v2636 = vpop.f32.mrf.mxu0
    %v2637 = vadd.f32 %v2562, %v2636
    %v2638 = vpop.f32.mrf.mxu0
    %2639 = vmatprep.mubr.f32.mxu0 0.0
    %2640 = vmatmul.mubr.f32.gmra.mxu0 %v2243
    %v2641 = vpop.f32.mrf.mxu0
    %v2642 = vadd.f32 %v2567, %v2641
    %v2643 = vpop.f32.mrf.mxu0
    %2644 = vdwg.mxu0
    %s2645 = scalar_lea.vmem %s15, 2
    %v2646 = vld [vmem:[%s2645] sm:$0x1]
    %v2648 = vlaneseq
    %v2649 = vshrl.u32 %v2648, 7
    %v2650 = vsub.s32 0, %v2649
    %v2651 = vrot.slane %v2646, %v2650
    %v2653 = vadd.f32 %v2637, %v2651
    %v2654 = vadd.f32 %v2642, %v2651
    %v2655 = vld [vmem:[%s16] sm:$0xff]
    %s2656 = scalar_lea.vmem %s16, 8
    %v2657 = vld [vmem:[%s2656] sm:$0xff]
    %s2658 = scalar_lea.vmem %s16, 16
    %v2659 = vld [vmem:[%s2658] sm:$0xff]
    %v2660 = vld [vmem:[%s17] sm:$0x1]
    %s2661 = scalar_lea.vmem %s17, 1
    %v2662 = vld [vmem:[%s2661] sm:$0x1]
    %s2663 = scalar_lea.vmem %s17, 2
    %v2664 = vld [vmem:[%s2663] sm:$0x1]
    %v2666 = vlaneseq
    %v2667 = vshrl.u32 %v2666, 7
    %v2668 = vsub.s32 0, %v2667
    %v2669 = vrot.slane %v2660, %v2668
    %2671 = vmatprep.subr.mxu0 0.0
    %2672 = vmatpush1.msra.mxu0 0.0
    %2673 = vmatprep.subr.mxu0 0.0
    %2674 = vmatpush1.msra.mxu0 0.0
    %2675 = vmatprep.subr.mxu0 0.0
    %2676 = vmatpush1.msra.mxu0 0.0
    %2677 = vmatprep.subr.mxu0 0.0
    %2678 = vmatpush1.msra.mxu0 0.0
    %2679 = vmatprep.subr.mxu0 0.0
    %2680 = vmatpush1.msra.mxu0 0.0
    %2681 = vmatprep.subr.mxu0 0.0
    %2682 = vmatpush1.msra.mxu0 0.0
    %2683 = vmatprep.subr.mxu0 0.0
    %2684 = vmatpush1.msra.mxu0 0.0
    %2685 = vmatprep.subr.mxu0 0.0
    %2686 = vmatpush1.msra.mxu0 0.0
    %2687 = vmatprep.subr.mxu0 0.0
    %2688 = vmatpush1.msra.mxu0 0.0
    %2689 = vmatprep.subr.mxu0 0.0
    %2690 = vmatpush1.msra.mxu0 0.0
    %2691 = vmatprep.subr.mxu0 0.0
    %2692 = vmatpush1.msra.mxu0 0.0
    %2693 = vmatprep.subr.mxu0 0.0
    %2694 = vmatpush1.msra.mxu0 0.0
    %2695 = vmatprep.subr.mxu0 0.0
    %2696 = vmatpush1.msra.mxu0 0.0
    %2697 = vmatprep.subr.mxu0 0.0
    %2698 = vmatpush1.msra.mxu0 0.0
    %2699 = vmatprep.subr.mxu0 0.0
    %2700 = vmatpush1.msra.mxu0 0.0
    %2701 = vmatprep.subr.mxu0 0.0
    %2702 = vmatpush1.msra.mxu0 %v2655
    %2703 = vmatprep.subr.mxu0 0.0
    %2704 = vmatpush2.msra.mxu0 0.0
    %2705 = vmatprep.subr.mxu0 0.0
    %2706 = vmatpush2.msra.mxu0 0.0
    %2707 = vmatprep.subr.mxu0 0.0
    %2708 = vmatpush2.msra.mxu0 0.0
    %2709 = vmatprep.subr.mxu0 0.0
    %2710 = vmatpush2.msra.mxu0 0.0
    %2711 = vmatprep.subr.mxu0 0.0
    %2712 = vmatpush2.msra.mxu0 0.0
    %2713 = vmatprep.subr.mxu0 0.0
    %2714 = vmatpush2.msra.mxu0 0.0
    %2715 = vmatprep.subr.mxu0 0.0
    %2716 = vmatpush2.msra.mxu0 0.0
    %2717 = vmatprep.subr.mxu0 0.0
    %2718 = vmatpush2.msra.mxu0 0.0
    %2719 = vmatprep.subr.mxu0 0.0
    %2720 = vmatpush2.msra.mxu0 0.0
    %2721 = vmatprep.subr.mxu0 0.0
    %2722 = vmatpush2.msra.mxu0 0.0
    %2723 = vmatprep.subr.mxu0 0.0
    %2724 = vmatpush2.msra.mxu0 0.0
    %2725 = vmatprep.subr.mxu0 0.0
    %2726 = vmatpush2.msra.mxu0 0.0
    %2727 = vmatprep.subr.mxu0 0.0
    %2728 = vmatpush2.msra.mxu0 0.0
    %2729 = vmatprep.subr.mxu0 0.0
    %2730 = vmatpush2.msra.mxu0 0.0
    %2731 = vmatprep.subr.mxu0 0.0
    %2732 = vmatpush2.msra.mxu0 0.0
    %2733 = vmatprep.subr.mxu0 0.0
    %2734 = vmatpush2.msra.mxu0 0.0
    %2735 = vmatprep.mubr.f32.mxu0 0.0
    %2736 = vmatmul.mubr.f32.gmra.mxu0 %v934
    %v2737 = vpop.f32.mrf.mxu0
    %v2738 = vadd.f32 %v2669, %v2737
    %v2739 = vpop.f32.mrf.mxu0
    %2740 = vdwg.mxu0
    %v2742 = vlaneseq
    %v2743 = vshrl.u32 %v2742, 7
    %v2744 = vsub.s32 0, %v2743
    %v2745 = vrot.slane %v2662, %v2744
    %2747 = vmatprep.subr.mxu0 0.0
    %2748 = vmatpush1.msra.mxu0 0.0
    %2749 = vmatprep.subr.mxu0 0.0
    %2750 = vmatpush1.msra.mxu0 0.0
    %2751 = vmatprep.subr.mxu0 0.0
    %2752 = vmatpush1.msra.mxu0 0.0
    %2753 = vmatprep.subr.mxu0 0.0
    %2754 = vmatpush1.msra.mxu0 0.0
    %2755 = vmatprep.subr.mxu0 0.0
    %2756 = vmatpush1.msra.mxu0 0.0
    %2757 = vmatprep.subr.mxu0 0.0
    %2758 = vmatpush1.msra.mxu0 0.0
    %2759 = vmatprep.subr.mxu0 0.0
    %2760 = vmatpush1.msra.mxu0 0.0
    %2761 = vmatprep.subr.mxu0 0.0
    %2762 = vmatpush1.msra.mxu0 0.0
    %2763 = vmatprep.subr.mxu0 0.0
    %2764 = vmatpush1.msra.mxu0 0.0
    %2765 = vmatprep.subr.mxu0 0.0
    %2766 = vmatpush1.msra.mxu0 0.0
    %2767 = vmatprep.subr.mxu0 0.0
    %2768 = vmatpush1.msra.mxu0 0.0
    %2769 = vmatprep.subr.mxu0 0.0
    %2770 = vmatpush1.msra.mxu0 0.0
    %2771 = vmatprep.subr.mxu0 0.0
    %2772 = vmatpush1.msra.mxu0 0.0
    %2773 = vmatprep.subr.mxu0 0.0
    %2774 = vmatpush1.msra.mxu0 0.0
    %2775 = vmatprep.subr.mxu0 0.0
    %2776 = vmatpush1.msra.mxu0 0.0
    %2777 = vmatprep.subr.mxu0 0.0
    %2778 = vmatpush1.msra.mxu0 %v2657
    %2779 = vmatprep.subr.mxu0 0.0
    %2780 = vmatpush2.msra.mxu0 0.0
    %2781 = vmatprep.subr.mxu0 0.0
    %2782 = vmatpush2.msra.mxu0 0.0
    %2783 = vmatprep.subr.mxu0 0.0
    %2784 = vmatpush2.msra.mxu0 0.0
    %2785 = vmatprep.subr.mxu0 0.0
    %2786 = vmatpush2.msra.mxu0 0.0
    %2787 = vmatprep.subr.mxu0 0.0
    %2788 = vmatpush2.msra.mxu0 0.0
    %2789 = vmatprep.subr.mxu0 0.0
    %2790 = vmatpush2.msra.mxu0 0.0
    %2791 = vmatprep.subr.mxu0 0.0
    %2792 = vmatpush2.msra.mxu0 0.0
    %2793 = vmatprep.subr.mxu0 0.0
    %2794 = vmatpush2.msra.mxu0 0.0
    %2795 = vmatprep.subr.mxu0 0.0
    %2796 = vmatpush2.msra.mxu0 0.0
    %2797 = vmatprep.subr.mxu0 0.0
    %2798 = vmatpush2.msra.mxu0 0.0
    %2799 = vmatprep.subr.mxu0 0.0
    %2800 = vmatpush2.msra.mxu0 0.0
    %2801 = vmatprep.subr.mxu0 0.0
    %2802 = vmatpush2.msra.mxu0 0.0
    %2803 = vmatprep.subr.mxu0 0.0
    %2804 = vmatpush2.msra.mxu0 0.0
    %2805 = vmatprep.subr.mxu0 0.0
    %2806 = vmatpush2.msra.mxu0 0.0
    %2807 = vmatprep.subr.mxu0 0.0
    %2808 = vmatpush2.msra.mxu0 0.0
    %2809 = vmatprep.subr.mxu0 0.0
    %2810 = vmatpush2.msra.mxu0 0.0
    %2811 = vmatprep.mubr.f32.mxu0 0.0
    %2812 = vmatmul.mubr.f32.gmra.mxu0 %v934
    %v2813 = vpop.f32.mrf.mxu0
    %v2814 = vadd.f32 %v2745, %v2813
    %v2815 = vpop.f32.mrf.mxu0
    %2816 = vdwg.mxu0
    %v2818 = vlaneseq
    %v2819 = vshrl.u32 %v2818, 7
    %v2820 = vsub.s32 0, %v2819
    %v2821 = vrot.slane %v2664, %v2820
    %2823 = vmatprep.subr.mxu0 0.0
    %2824 = vmatpush1.msra.mxu0 0.0
    %2825 = vmatprep.subr.mxu0 0.0
    %2826 = vmatpush1.msra.mxu0 0.0
    %2827 = vmatprep.subr.mxu0 0.0
    %2828 = vmatpush1.msra.mxu0 0.0
    %2829 = vmatprep.subr.mxu0 0.0
    %2830 = vmatpush1.msra.mxu0 0.0
    %2831 = vmatprep.subr.mxu0 0.0
    %2832 = vmatpush1.msra.mxu0 0.0
    %2833 = vmatprep.subr.mxu0 0.0
    %2834 = vmatpush1.msra.mxu0 0.0
    %2835 = vmatprep.subr.mxu0 0.0
    %2836 = vmatpush1.msra.mxu0 0.0
    %2837 = vmatprep.subr.mxu0 0.0
    %2838 = vmatpush1.msra.mxu0 0.0
    %2839 = vmatprep.subr.mxu0 0.0
    %2840 = vmatpush1.msra.mxu0 0.0
    %2841 = vmatprep.subr.mxu0 0.0
    %2842 = vmatpush1.msra.mxu0 0.0
    %2843 = vmatprep.subr.mxu0 0.0
    %2844 = vmatpush1.msra.mxu0 0.0
    %2845 = vmatprep.subr.mxu0 0.0
    %2846 = vmatpush1.msra.mxu0 0.0
    %2847 = vmatprep.subr.mxu0 0.0
    %2848 = vmatpush1.msra.mxu0 0.0
    %2849 = vmatprep.subr.mxu0 0.0
    %2850 = vmatpush1.msra.mxu0 0.0
    %2851 = vmatprep.subr.mxu0 0.0
    %2852 = vmatpush1.msra.mxu0 0.0
    %2853 = vmatprep.subr.mxu0 0.0
    %2854 = vmatpush1.msra.mxu0 %v2659
    %2855 = vmatprep.subr.mxu0 0.0
    %2856 = vmatpush2.msra.mxu0 0.0
    %2857 = vmatprep.subr.mxu0 0.0
    %2858 = vmatpush2.msra.mxu0 0.0
    %2859 = vmatprep.subr.mxu0 0.0
    %2860 = vmatpush2.msra.mxu0 0.0
    %2861 = vmatprep.subr.mxu0 0.0
    %2862 = vmatpush2.msra.mxu0 0.0
    %2863 = vmatprep.subr.mxu0 0.0
    %2864 = vmatpush2.msra.mxu0 0.0
    %2865 = vmatprep.subr.mxu0 0.0
    %2866 = vmatpush2.msra.mxu0 0.0
    %2867 = vmatprep.subr.mxu0 0.0
    %2868 = vmatpush2.msra.mxu0 0.0
    %2869 = vmatprep.subr.mxu0 0.0
    %2870 = vmatpush2.msra.mxu0 0.0
    %2871 = vmatprep.subr.mxu0 0.0
    %2872 = vmatpush2.msra.mxu0 0.0
    %2873 = vmatprep.subr.mxu0 0.0
    %2874 = vmatpush2.msra.mxu0 0.0
    %2875 = vmatprep.subr.mxu0 0.0
    %2876 = vmatpush2.msra.mxu0 0.0
    %2877 = vmatprep.subr.mxu0 0.0
    %2878 = vmatpush2.msra.mxu0 0.0
    %2879 = vmatprep.subr.mxu0 0.0
    %2880 = vmatpush2.msra.mxu0 0.0
    %2881 = vmatprep.subr.mxu0 0.0
    %2882 = vmatpush2.msra.mxu0 0.0
    %2883 = vmatprep.subr.mxu0 0.0
    %2884 = vmatpush2.msra.mxu0 0.0
    %2885 = vmatprep.subr.mxu0 0.0
    %2886 = vmatpush2.msra.mxu0 0.0
    %2887 = vmatprep.mubr.f32.mxu0 0.0
    %2888 = vmatmul.mubr.f32.gmra.mxu0 %v934
    %v2889 = vpop.f32.mrf.mxu0
    %v2890 = vadd.f32 %v2821, %v2889
    %v2891 = vpop.f32.mrf.mxu0
    %2892 = vdwg.mxu0
    %v2893 = vadd.f32 %v2327, %v2738
    %v2894 = vxor.u32 %v2893, 2147483648
    %v2895 = vmul.f32 %v2894, 1.442695
    %v2896 = vpow.pop %v2895
    %v2897 = vadd.f32 %v2896, 1.0
    %v2898 = vrcp.pop %v2897
    %v2899 = vmul.f32 1.0, %v2898
    %v2900 = vadd.f32 %v2490, %v2814
    %v2901 = vxor.u32 %v2900, 2147483648
    %v2902 = vmul.f32 %v2901, 1.442695
    %v2903 = vpow.pop %v2902
    %v2904 = vadd.f32 %v2903, 1.0
    %v2905 = vrcp.pop %v2904
    %v2906 = vmul.f32 1.0, %v2905
    %v2907 = vmul.f32 %v2899, %v2890
    %v2908 = vadd.f32 %v2653, %v2907
    %v2909 = vtanh.pop %v2908
    %v2910 = vsub.f32 1.0, %v2906
    %v2911 = vmul.f32 %v2910, %v2909
    %v2912 = vmul.f32 %v2906, 0.0
    %v2913 = vadd.f32 %v2911, %v2912
    %v2915 = vsel %vm932, %v2913, 0
    %2917 = vmatprep.subr.mxu0 0.0
    %2918 = vmatpush1.msra.mxu0 0.0
    %2919 = vmatprep.subr.mxu0 0.0
    %2920 = vmatpush1.msra.mxu0 0.0
    %2921 = vmatprep.subr.mxu0 0.0
    %2922 = vmatpush1.msra.mxu0 0.0
    %2923 = vmatprep.subr.mxu0 0.0
    %2924 = vmatpush1.msra.mxu0 0.0
    %2925 = vmatprep.subr.mxu0 0.0
    %2926 = vmatpush1.msra.mxu0 0.0
    %2927 = vmatprep.subr.mxu0 0.0
    %2928 = vmatpush1.msra.mxu0 0.0
    %2929 = vmatprep.subr.mxu0 0.0
    %2930 = vmatpush1.msra.mxu0 0.0
    %2931 = vmatprep.subr.mxu0 0.0
    %2932 = vmatpush1.msra.mxu0 0.0
    %2933 = vmatprep.subr.mxu0 0.0
    %2934 = vmatpush1.msra.mxu0 0.0
    %2935 = vmatprep.subr.mxu0 0.0
    %2936 = vmatpush1.msra.mxu0 0.0
    %2937 = vmatprep.subr.mxu0 0.0
    %2938 = vmatpush1.msra.mxu0 0.0
    %2939 = vmatprep.subr.mxu0 0.0
    %2940 = vmatpush1.msra.mxu0 0.0
    %2941 = vmatprep.subr.mxu0 0.0
    %2942 = vmatpush1.msra.mxu0 0.0
    %2943 = vmatprep.subr.mxu0 0.0
    %2944 = vmatpush1.msra.mxu0 0.0
    %2945 = vmatprep.subr.mxu0 0.0
    %2946 = vmatpush1.msra.mxu0 0.0
    %2947 = vmatprep.subr.mxu0 0.0
    %2948 = vmatpush1.msra.mxu0 %v2655
    %2949 = vmatprep.subr.mxu0 0.0
    %2950 = vmatpush2.msra.mxu0 0.0
    %2951 = vmatprep.subr.mxu0 0.0
    %2952 = vmatpush2.msra.mxu0 0.0
    %2953 = vmatprep.subr.mxu0 0.0
    %2954 = vmatpush2.msra.mxu0 0.0
    %2955 = vmatprep.subr.mxu0 0.0
    %2956 = vmatpush2.msra.mxu0 0.0
    %2957 = vmatprep.subr.mxu0 0.0
    %2958 = vmatpush2.msra.mxu0 0.0
    %2959 = vmatprep.subr.mxu0 0.0
    %2960 = vmatpush2.msra.mxu0 0.0
    %2961 = vmatprep.subr.mxu0 0.0
    %2962 = vmatpush2.msra.mxu0 0.0
    %2963 = vmatprep.subr.mxu0 0.0
    %2964 = vmatpush2.msra.mxu0 0.0
    %2965 = vmatprep.subr.mxu0 0.0
    %2966 = vmatpush2.msra.mxu0 0.0
    %2967 = vmatprep.subr.mxu0 0.0
    %2968 = vmatpush2.msra.mxu0 0.0
    %2969 = vmatprep.subr.mxu0 0.0
    %2970 = vmatpush2.msra.mxu0 0.0
    %2971 = vmatprep.subr.mxu0 0.0
    %2972 = vmatpush2.msra.mxu0 0.0
    %2973 = vmatprep.subr.mxu0 0.0
    %2974 = vmatpush2.msra.mxu0 0.0
    %2975 = vmatprep.subr.mxu0 0.0
    %2976 = vmatpush2.msra.mxu0 0.0
    %2977 = vmatprep.subr.mxu0 0.0
    %2978 = vmatpush2.msra.mxu0 0.0
    %2979 = vmatprep.subr.mxu0 0.0
    %2980 = vmatpush2.msra.mxu0 0.0
    %2981 = vmatprep.mubr.f32.mxu0 0.0
    %2982 = vmatmul.mubr.f32.gmra.mxu0 %v2915
    %v2983 = vpop.f32.mrf.mxu0
    %v2984 = vadd.f32 %v2669, %v2983
    %v2985 = vpop.f32.mrf.mxu0
    %2986 = vdwg.mxu0
    %2987 = vmatprep.subr.mxu0 0.0
    %2988 = vmatpush1.msra.mxu0 0.0
    %2989 = vmatprep.subr.mxu0 0.0
    %2990 = vmatpush1.msra.mxu0 0.0
    %2991 = vmatprep.subr.mxu0 0.0
    %2992 = vmatpush1.msra.mxu0 0.0
    %2993 = vmatprep.subr.mxu0 0.0
    %2994 = vmatpush1.msra.mxu0 0.0
    %2995 = vmatprep.subr.mxu0 0.0
    %2996 = vmatpush1.msra.mxu0 0.0
    %2997 = vmatprep.subr.mxu0 0.0
    %2998 = vmatpush1.msra.mxu0 0.0
    %2999 = vmatprep.subr.mxu0 0.0
    %3000 = vmatpush1.msra.mxu0 0.0
    %3001 = vmatprep.subr.mxu0 0.0
    %3002 = vmatpush1.msra.mxu0 0.0
    %3003 = vmatprep.subr.mxu0 0.0
    %3004 = vmatpush1.msra.mxu0 0.0
    %3005 = vmatprep.subr.mxu0 0.0
    %3006 = vmatpush1.msra.mxu0 0.0
    %3007 = vmatprep.subr.mxu0 0.0
    %3008 = vmatpush1.msra.mxu0 0.0
    %3009 = vmatprep.subr.mxu0 0.0
    %3010 = vmatpush1.msra.mxu0 0.0
    %3011 = vmatprep.subr.mxu0 0.0
    %3012 = vmatpush1.msra.mxu0 0.0
    %3013 = vmatprep.subr.mxu0 0.0
    %3014 = vmatpush1.msra.mxu0 0.0
    %3015 = vmatprep.subr.mxu0 0.0
    %3016 = vmatpush1.msra.mxu0 0.0
    %3017 = vmatprep.subr.mxu0 0.0
    %3018 = vmatpush1.msra.mxu0 %v2657
    %3019 = vmatprep.subr.mxu0 0.0
    %3020 = vmatpush2.msra.mxu0 0.0
    %3021 = vmatprep.subr.mxu0 0.0
    %3022 = vmatpush2.msra.mxu0 0.0
    %3023 = vmatprep.subr.mxu0 0.0
    %3024 = vmatpush2.msra.mxu0 0.0
    %3025 = vmatprep.subr.mxu0 0.0
    %3026 = vmatpush2.msra.mxu0 0.0
    %3027 = vmatprep.subr.mxu0 0.0
    %3028 = vmatpush2.msra.mxu0 0.0
    %3029 = vmatprep.subr.mxu0 0.0
    %3030 = vmatpush2.msra.mxu0 0.0
    %3031 = vmatprep.subr.mxu0 0.0
    %3032 = vmatpush2.msra.mxu0 0.0
    %3033 = vmatprep.subr.mxu0 0.0
    %3034 = vmatpush2.msra.mxu0 0.0
    %3035 = vmatprep.subr.mxu0 0.0
    %3036 = vmatpush2.msra.mxu0 0.0
    %3037 = vmatprep.subr.mxu0 0.0
    %3038 = vmatpush2.msra.mxu0 0.0
    %3039 = vmatprep.subr.mxu0 0.0
    %3040 = vmatpush2.msra.mxu0 0.0
    %3041 = vmatprep.subr.mxu0 0.0
    %3042 = vmatpush2.msra.mxu0 0.0
    %3043 = vmatprep.subr.mxu0 0.0
    %3044 = vmatpush2.msra.mxu0 0.0
    %3045 = vmatprep.subr.mxu0 0.0
    %3046 = vmatpush2.msra.mxu0 0.0
    %3047 = vmatprep.subr.mxu0 0.0
    %3048 = vmatpush2.msra.mxu0 0.0
    %3049 = vmatprep.subr.mxu0 0.0
    %3050 = vmatpush2.msra.mxu0 0.0
    %3051 = vmatprep.mubr.f32.mxu0 0.0
    %3052 = vmatmul.mubr.f32.gmra.mxu0 %v2915
    %v3053 = vpop.f32.mrf.mxu0
    %v3054 = vadd.f32 %v2745, %v3053
    %v3055 = vpop.f32.mrf.mxu0
    %3056 = vdwg.mxu0
    %3057 = vmatprep.subr.mxu0 0.0
    %3058 = vmatpush1.msra.mxu0 0.0
    %3059 = vmatprep.subr.mxu0 0.0
    %3060 = vmatpush1.msra.mxu0 0.0
    %3061 = vmatprep.subr.mxu0 0.0
    %3062 = vmatpush1.msra.mxu0 0.0
    %3063 = vmatprep.subr.mxu0 0.0
    %3064 = vmatpush1.msra.mxu0 0.0
    %3065 = vmatprep.subr.mxu0 0.0
    %3066 = vmatpush1.msra.mxu0 0.0
    %3067 = vmatprep.subr.mxu0 0.0
    %3068 = vmatpush1.msra.mxu0 0.0
    %3069 = vmatprep.subr.mxu0 0.0
    %3070 = vmatpush1.msra.mxu0 0.0
    %3071 = vmatprep.subr.mxu0 0.0
    %3072 = vmatpush1.msra.mxu0 0.0
    %3073 = vmatprep.subr.mxu0 0.0
    %3074 = vmatpush1.msra.mxu0 0.0
    %3075 = vmatprep.subr.mxu0 0.0
    %3076 = vmatpush1.msra.mxu0 0.0
    %3077 = vmatprep.subr.mxu0 0.0
    %3078 = vmatpush1.msra.mxu0 0.0
    %3079 = vmatprep.subr.mxu0 0.0
    %3080 = vmatpush1.msra.mxu0 0.0
    %3081 = vmatprep.subr.mxu0 0.0
    %3082 = vmatpush1.msra.mxu0 0.0
    %3083 = vmatprep.subr.mxu0 0.0
    %3084 = vmatpush1.msra.mxu0 0.0
    %3085 = vmatprep.subr.mxu0 0.0
    %3086 = vmatpush1.msra.mxu0 0.0
    %3087 = vmatprep.subr.mxu0 0.0
    %3088 = vmatpush1.msra.mxu0 %v2659
    %3089 = vmatprep.subr.mxu0 0.0
    %3090 = vmatpush2.msra.mxu0 0.0
    %3091 = vmatprep.subr.mxu0 0.0
    %3092 = vmatpush2.msra.mxu0 0.0
    %3093 = vmatprep.subr.mxu0 0.0
    %3094 = vmatpush2.msra.mxu0 0.0
    %3095 = vmatprep.subr.mxu0 0.0
    %3096 = vmatpush2.msra.mxu0 0.0
    %3097 = vmatprep.subr.mxu0 0.0
    %3098 = vmatpush2.msra.mxu0 0.0
    %3099 = vmatprep.subr.mxu0 0.0
    %3100 = vmatpush2.msra.mxu0 0.0
    %3101 = vmatprep.subr.mxu0 0.0
    %3102 = vmatpush2.msra.mxu0 0.0
    %3103 = vmatprep.subr.mxu0 0.0
    %3104 = vmatpush2.msra.mxu0 0.0
    %3105 = vmatprep.subr.mxu0 0.0
    %3106 = vmatpush2.msra.mxu0 0.0
    %3107 = vmatprep.subr.mxu0 0.0
    %3108 = vmatpush2.msra.mxu0 0.0
    %3109 = vmatprep.subr.mxu0 0.0
    %3110 = vmatpush2.msra.mxu0 0.0
    %3111 = vmatprep.subr.mxu0 0.0
    %3112 = vmatpush2.msra.mxu0 0.0
    %3113 = vmatprep.subr.mxu0 0.0
    %3114 = vmatpush2.msra.mxu0 0.0
    %3115 = vmatprep.subr.mxu0 0.0
    %3116 = vmatpush2.msra.mxu0 0.0
    %3117 = vmatprep.subr.mxu0 0.0
    %3118 = vmatpush2.msra.mxu0 0.0
    %3119 = vmatprep.subr.mxu0 0.0
    %3120 = vmatpush2.msra.mxu0 0.0
    %3121 = vmatprep.mubr.f32.mxu0 0.0
    %3122 = vmatmul.mubr.f32.gmra.mxu0 %v2915
    %v3123 = vpop.f32.mrf.mxu0
    %v3124 = vadd.f32 %v2821, %v3123
    %v3125 = vpop.f32.mrf.mxu0
    %3126 = vdwg.mxu0
    %v3127 = vadd.f32 %v2328, %v2984
    %v3128 = vxor.u32 %v3127, 2147483648
    %v3129 = vmul.f32 %v3128, 1.442695
    %v3130 = vpow.pop %v3129
    %v3131 = vadd.f32 %v3130, 1.0
    %v3132 = vrcp.pop %v3131
    %v3133 = vmul.f32 1.0, %v3132
    %v3134 = vadd.f32 %v2491, %v3054
    %v3135 = vxor.u32 %v3134, 2147483648
    %v3136 = vmul.f32 %v3135, 1.442695
    %v3137 = vpow.pop %v3136
    %v3138 = vadd.f32 %v3137, 1.0
    %v3139 = vrcp.pop %v3138
    %v3140 = vmul.f32 1.0, %v3139
    %v3141 = vmul.f32 %v3133, %v3124
    %v3142 = vadd.f32 %v2654, %v3141
    %v3143 = vtanh.pop %v3142
    %v3144 = vsub.f32 1.0, %v3140
    %v3145 = vmul.f32 %v3144, %v3143
    %v3146 = vmul.f32 %v3140, %v2913
    %v3147 = vadd.f32 %v3145, %v3146
    %v3148 = vld [vmem:[%s18] sm:$0xff]
    %v3149 = vld [vmem:[%s18 + $0x8] sm:$0xff]
    %3150 = vmatprep.subr.mxu0 0.0
    %3151 = vmatpush1.msra.mxu0 0.0
    %3152 = vmatprep.subr.mxu0 0.0
    %3153 = vmatpush1.msra.mxu0 0.0
    %3154 = vmatprep.subr.mxu0 0.0
    %3155 = vmatpush1.msra.mxu0 0.0
    %3156 = vmatprep.subr.mxu0 0.0
    %3157 = vmatpush1.msra.mxu0 0.0
    %3158 = vmatprep.subr.mxu0 0.0
    %3159 = vmatpush1.msra.mxu0 0.0
    %3160 = vmatprep.subr.mxu0 0.0
    %3161 = vmatpush1.msra.mxu0 0.0
    %3162 = vmatprep.subr.mxu0 0.0
    %3163 = vmatpush1.msra.mxu0 0.0
    %3164 = vmatprep.subr.mxu0 0.0
    %3165 = vmatpush1.msra.mxu0 0.0
    %3166 = vmatprep.subr.mxu0 0.0
    %3167 = vmatpush1.msra.mxu0 0.0
    %3168 = vmatprep.subr.mxu0 0.0
    %3169 = vmatpush1.msra.mxu0 0.0
    %3170 = vmatprep.subr.mxu0 0.0
    %3171 = vmatpush1.msra.mxu0 0.0
    %3172 = vmatprep.subr.mxu0 0.0
    %3173 = vmatpush1.msra.mxu0 0.0
    %3174 = vmatprep.subr.mxu0 0.0
    %3175 = vmatpush1.msra.mxu0 0.0
    %3176 = vmatprep.subr.mxu0 0.0
    %3177 = vmatpush1.msra.mxu0 0.0
    %3178 = vmatprep.subr.mxu0 0.0
    %3179 = vmatpush1.msra.mxu0 0.0
    %3180 = vmatprep.subr.mxu0 0.0
    %3181 = vmatpush1.msra.mxu0 %v3149
    %3182 = vmatprep.subr.mxu0 0.0
    %3183 = vmatpush2.msra.mxu0 0.0
    %3184 = vmatprep.subr.mxu0 0.0
    %3185 = vmatpush2.msra.mxu0 0.0
    %3186 = vmatprep.subr.mxu0 0.0
    %3187 = vmatpush2.msra.mxu0 0.0
    %3188 = vmatprep.subr.mxu0 0.0
    %3189 = vmatpush2.msra.mxu0 0.0
    %3190 = vmatprep.subr.mxu0 0.0
    %3191 = vmatpush2.msra.mxu0 0.0
    %3192 = vmatprep.subr.mxu0 0.0
    %3193 = vmatpush2.msra.mxu0 0.0
    %3194 = vmatprep.subr.mxu0 0.0
    %3195 = vmatpush2.msra.mxu0 0.0
    %3196 = vmatprep.subr.mxu0 0.0
    %3197 = vmatpush2.msra.mxu0 0.0
    %3198 = vmatprep.subr.mxu0 0.0
    %3199 = vmatpush2.msra.mxu0 0.0
    %3200 = vmatprep.subr.mxu0 0.0
    %3201 = vmatpush2.msra.mxu0 0.0
    %3202 = vmatprep.subr.mxu0 0.0
    %3203 = vmatpush2.msra.mxu0 0.0
    %3204 = vmatprep.subr.mxu0 0.0
    %3205 = vmatpush2.msra.mxu0 0.0
    %3206 = vmatprep.subr.mxu0 0.0
    %3207 = vmatpush2.msra.mxu0 0.0
    %3208 = vmatprep.subr.mxu0 0.0
    %3209 = vmatpush2.msra.mxu0 0.0
    %3210 = vmatprep.subr.mxu0 0.0
    %3211 = vmatpush2.msra.mxu0 0.0
    %3212 = vmatprep.subr.mxu0 0.0
    %3213 = vmatpush2.msra.mxu0 0.0
    %3214 = vmatprep.mubr.f32.mxu0 0.0
    %3215 = vmatmul.mubr.f32.gmra.mxu0 %v2165
    %v3216 = vpop.f32.mrf.mxu0
    %v3217 = vadd.f32 0.0, %v3216
    %v3218 = vpop.f32.mrf.mxu0
    %3219 = vmatprep.mubr.f32.mxu0 0.0
    %3220 = vmatmul.mubr.f32.gmra.mxu0 %v1929
    %v3221 = vpop.f32.mrf.mxu0
    %v3222 = vadd.f32 0.0, %v3221
    %v3223 = vpop.f32.mrf.mxu0
    %3224 = vdwg.mxu0
    %3225 = vmatprep.subr.mxu0 0.0
    %3226 = vmatpush1.msra.mxu0 0.0
    %3227 = vmatprep.subr.mxu0 0.0
    %3228 = vmatpush1.msra.mxu0 0.0
    %3229 = vmatprep.subr.mxu0 0.0
    %3230 = vmatpush1.msra.mxu0 0.0
    %3231 = vmatprep.subr.mxu0 0.0
    %3232 = vmatpush1.msra.mxu0 0.0
    %3233 = vmatprep.subr.mxu0 0.0
    %3234 = vmatpush1.msra.mxu0 0.0
    %3235 = vmatprep.subr.mxu0 0.0
    %3236 = vmatpush1.msra.mxu0 0.0
    %3237 = vmatprep.subr.mxu0 0.0
    %3238 = vmatpush1.msra.mxu0 0.0
    %3239 = vmatprep.subr.mxu0 0.0
    %3240 = vmatpush1.msra.mxu0 0.0
    %3241 = vmatprep.subr.mxu0 0.0
    %3242 = vmatpush1.msra.mxu0 0.0
    %3243 = vmatprep.subr.mxu0 0.0
    %3244 = vmatpush1.msra.mxu0 0.0
    %3245 = vmatprep.subr.mxu0 0.0
    %3246 = vmatpush1.msra.mxu0 0.0
    %3247 = vmatprep.subr.mxu0 0.0
    %3248 = vmatpush1.msra.mxu0 0.0
    %3249 = vmatprep.subr.mxu0 0.0
    %3250 = vmatpush1.msra.mxu0 0.0
    %3251 = vmatprep.subr.mxu0 0.0
    %3252 = vmatpush1.msra.mxu0 0.0
    %3253 = vmatprep.subr.mxu0 0.0
    %3254 = vmatpush1.msra.mxu0 0.0
    %3255 = vmatprep.subr.mxu0 0.0
    %3256 = vmatpush1.msra.mxu0 %v3148
    %3257 = vmatprep.subr.mxu0 0.0
    %3258 = vmatpush2.msra.mxu0 0.0
    %3259 = vmatprep.subr.mxu0 0.0
    %3260 = vmatpush2.msra.mxu0 0.0
    %3261 = vmatprep.subr.mxu0 0.0
    %3262 = vmatpush2.msra.mxu0 0.0
    %3263 = vmatprep.subr.mxu0 0.0
    %3264 = vmatpush2.msra.mxu0 0.0
    %3265 = vmatprep.subr.mxu0 0.0
    %3266 = vmatpush2.msra.mxu0 0.0
    %3267 = vmatprep.subr.mxu0 0.0
    %3268 = vmatpush2.msra.mxu0 0.0
    %3269 = vmatprep.subr.mxu0 0.0
    %3270 = vmatpush2.msra.mxu0 0.0
    %3271 = vmatprep.subr.mxu0 0.0
    %3272 = vmatpush2.msra.mxu0 0.0
    %3273 = vmatprep.subr.mxu0 0.0
    %3274 = vmatpush2.msra.mxu0 0.0
    %3275 = vmatprep.subr.mxu0 0.0
    %3276 = vmatpush2.msra.mxu0 0.0
    %3277 = vmatprep.subr.mxu0 0.0
    %3278 = vmatpush2.msra.mxu0 0.0
    %3279 = vmatprep.subr.mxu0 0.0
    %3280 = vmatpush2.msra.mxu0 0.0
    %3281 = vmatprep.subr.mxu0 0.0
    %3282 = vmatpush2.msra.mxu0 0.0
    %3283 = vmatprep.subr.mxu0 0.0
    %3284 = vmatpush2.msra.mxu0 0.0
    %3285 = vmatprep.subr.mxu0 0.0
    %3286 = vmatpush2.msra.mxu0 0.0
    %3287 = vmatprep.subr.mxu0 0.0
    %3288 = vmatpush2.msra.mxu0 0.0
    %3289 = vmatprep.mubr.f32.mxu0 0.0
    %3290 = vmatmul.mubr.f32.gmra.mxu0 %v1180
    %v3291 = vpop.f32.mrf.mxu0
    %v3292 = vadd.f32 %v3217, %v3291
    %v3293 = vpop.f32.mrf.mxu0
    %3294 = vmatprep.mubr.f32.mxu0 0.0
    %3295 = vmatmul.mubr.f32.gmra.mxu0 %v2243
    %v3296 = vpop.f32.mrf.mxu0
    %v3297 = vadd.f32 %v3222, %v3296
    %v3298 = vpop.f32.mrf.mxu0
    %3299 = vdwg.mxu0
    %v3300 = vld [vmem:[%s19] sm:$0x1]
    %v3302 = vlaneseq
    %v3303 = vshrl.u32 %v3302, 7
    %v3304 = vsub.s32 0, %v3303
    %v3305 = vrot.slane %v3300, %v3304
    %v3307 = vadd.f32 %v3292, %v3305
    %v3308 = vadd.f32 %v3297, %v3305
    %s3309 = scalar_lea.vmem %s18, 16
    %v3310 = vld [vmem:[%s3309] sm:$0xff]
    %v3311 = vld [vmem:[%s3309 + $0x8] sm:$0xff]
    %3312 = vmatprep.subr.mxu0 0.0
    %3313 = vmatpush1.msra.mxu0 0.0
    %3314 = vmatprep.subr.mxu0 0.0
    %3315 = vmatpush1.msra.mxu0 0.0
    %3316 = vmatprep.subr.mxu0 0.0
    %3317 = vmatpush1.msra.mxu0 0.0
    %3318 = vmatprep.subr.mxu0 0.0
    %3319 = vmatpush1.msra.mxu0 0.0
    %3320 = vmatprep.subr.mxu0 0.0
    %3321 = vmatpush1.msra.mxu0 0.0
    %3322 = vmatprep.subr.mxu0 0.0
    %3323 = vmatpush1.msra.mxu0 0.0
    %3324 = vmatprep.subr.mxu0 0.0
    %3325 = vmatpush1.msra.mxu0 0.0
    %3326 = vmatprep.subr.mxu0 0.0
    %3327 = vmatpush1.msra.mxu0 0.0
    %3328 = vmatprep.subr.mxu0 0.0
    %3329 = vmatpush1.msra.mxu0 0.0
    %3330 = vmatprep.subr.mxu0 0.0
    %3331 = vmatpush1.msra.mxu0 0.0
    %3332 = vmatprep.subr.mxu0 0.0
    %3333 = vmatpush1.msra.mxu0 0.0
    %3334 = vmatprep.subr.mxu0 0.0
    %3335 = vmatpush1.msra.mxu0 0.0
    %3336 = vmatprep.subr.mxu0 0.0
    %3337 = vmatpush1.msra.mxu0 0.0
    %3338 = vmatprep.subr.mxu0 0.0
    %3339 = vmatpush1.msra.mxu0 0.0
    %3340 = vmatprep.subr.mxu0 0.0
    %3341 = vmatpush1.msra.mxu0 0.0
    %3342 = vmatprep.subr.mxu0 0.0
    %3343 = vmatpush1.msra.mxu0 %v3311
    %3344 = vmatprep.subr.mxu0 0.0
    %3345 = vmatpush2.msra.mxu0 0.0
    %3346 = vmatprep.subr.mxu0 0.0
    %3347 = vmatpush2.msra.mxu0 0.0
    %3348 = vmatprep.subr.mxu0 0.0
    %3349 = vmatpush2.msra.mxu0 0.0
    %3350 = vmatprep.subr.mxu0 0.0
    %3351 = vmatpush2.msra.mxu0 0.0
    %3352 = vmatprep.subr.mxu0 0.0
    %3353 = vmatpush2.msra.mxu0 0.0
    %3354 = vmatprep.subr.mxu0 0.0
    %3355 = vmatpush2.msra.mxu0 0.0
    %3356 = vmatprep.subr.mxu0 0.0
    %3357 = vmatpush2.msra.mxu0 0.0
    %3358 = vmatprep.subr.mxu0 0.0
    %3359 = vmatpush2.msra.mxu0 0.0
    %3360 = vmatprep.subr.mxu0 0.0
    %3361 = vmatpush2.msra.mxu0 0.0
    %3362 = vmatprep.subr.mxu0 0.0
    %3363 = vmatpush2.msra.mxu0 0.0
    %3364 = vmatprep.subr.mxu0 0.0
    %3365 = vmatpush2.msra.mxu0 0.0
    %3366 = vmatprep.subr.mxu0 0.0
    %3367 = vmatpush2.msra.mxu0 0.0
    %3368 = vmatprep.subr.mxu0 0.0
    %3369 = vmatpush2.msra.mxu0 0.0
    %3370 = vmatprep.subr.mxu0 0.0
    %3371 = vmatpush2.msra.mxu0 0.0
    %3372 = vmatprep.subr.mxu0 0.0
    %3373 = vmatpush2.msra.mxu0 0.0
    %3374 = vmatprep.subr.mxu0 0.0
    %3375 = vmatpush2.msra.mxu0 0.0
    %3376 = vmatprep.mubr.f32.mxu0 0.0
    %3377 = vmatmul.mubr.f32.gmra.mxu0 %v2165
    %v3378 = vpop.f32.mrf.mxu0
    %v3379 = vadd.f32 0.0, %v3378
    %v3380 = vpop.f32.mrf.mxu0
    %3381 = vmatprep.mubr.f32.mxu0 0.0
    %3382 = vmatmul.mubr.f32.gmra.mxu0 %v1929
    %v3383 = vpop.f32.mrf.mxu0
    %v3384 = vadd.f32 0.0, %v3383
    %v3385 = vpop.f32.mrf.mxu0
    %3386 = vdwg.mxu0
    %3387 = vmatprep.subr.mxu0 0.0
    %3388 = vmatpush1.msra.mxu0 0.0
    %3389 = vmatprep.subr.mxu0 0.0
    %3390 = vmatpush1.msra.mxu0 0.0
    %3391 = vmatprep.subr.mxu0 0.0
    %3392 = vmatpush1.msra.mxu0 0.0
    %3393 = vmatprep.subr.mxu0 0.0
    %3394 = vmatpush1.msra.mxu0 0.0
    %3395 = vmatprep.subr.mxu0 0.0
    %3396 = vmatpush1.msra.mxu0 0.0
    %3397 = vmatprep.subr.mxu0 0.0
    %3398 = vmatpush1.msra.mxu0 0.0
    %3399 = vmatprep.subr.mxu0 0.0
    %3400 = vmatpush1.msra.mxu0 0.0
    %3401 = vmatprep.subr.mxu0 0.0
    %3402 = vmatpush1.msra.mxu0 0.0
    %3403 = vmatprep.subr.mxu0 0.0
    %3404 = vmatpush1.msra.mxu0 0.0
    %3405 = vmatprep.subr.mxu0 0.0
    %3406 = vmatpush1.msra.mxu0 0.0
    %3407 = vmatprep.subr.mxu0 0.0
    %3408 = vmatpush1.msra.mxu0 0.0
    %3409 = vmatprep.subr.mxu0 0.0
    %3410 = vmatpush1.msra.mxu0 0.0
    %3411 = vmatprep.subr.mxu0 0.0
    %3412 = vmatpush1.msra.mxu0 0.0
    %3413 = vmatprep.subr.mxu0 0.0
    %3414 = vmatpush1.msra.mxu0 0.0
    %3415 = vmatprep.subr.mxu0 0.0
    %3416 = vmatpush1.msra.mxu0 0.0
    %3417 = vmatprep.subr.mxu0 0.0
    %3418 = vmatpush1.msra.mxu0 %v3310
    %3419 = vmatprep.subr.mxu0 0.0
    %3420 = vmatpush2.msra.mxu0 0.0
    %3421 = vmatprep.subr.mxu0 0.0
    %3422 = vmatpush2.msra.mxu0 0.0
    %3423 = vmatprep.subr.mxu0 0.0
    %3424 = vmatpush2.msra.mxu0 0.0
    %3425 = vmatprep.subr.mxu0 0.0
    %3426 = vmatpush2.msra.mxu0 0.0
    %3427 = vmatprep.subr.mxu0 0.0
    %3428 = vmatpush2.msra.mxu0 0.0
    %3429 = vmatprep.subr.mxu0 0.0
    %3430 = vmatpush2.msra.mxu0 0.0
    %3431 = vmatprep.subr.mxu0 0.0
    %3432 = vmatpush2.msra.mxu0 0.0
    %3433 = vmatprep.subr.mxu0 0.0
    %3434 = vmatpush2.msra.mxu0 0.0
    %3435 = vmatprep.subr.mxu0 0.0
    %3436 = vmatpush2.msra.mxu0 0.0
    %3437 = vmatprep.subr.mxu0 0.0
    %3438 = vmatpush2.msra.mxu0 0.0
    %3439 = vmatprep.subr.mxu0 0.0
    %3440 = vmatpush2.msra.mxu0 0.0
    %3441 = vmatprep.subr.mxu0 0.0
    %3442 = vmatpush2.msra.mxu0 0.0
    %3443 = vmatprep.subr.mxu0 0.0
    %3444 = vmatpush2.msra.mxu0 0.0
    %3445 = vmatprep.subr.mxu0 0.0
    %3446 = vmatpush2.msra.mxu0 0.0
    %3447 = vmatprep.subr.mxu0 0.0
    %3448 = vmatpush2.msra.mxu0 0.0
    %3449 = vmatprep.subr.mxu0 0.0
    %3450 = vmatpush2.msra.mxu0 0.0
    %3451 = vmatprep.mubr.f32.mxu0 0.0
    %3452 = vmatmul.mubr.f32.gmra.mxu0 %v1180
    %v3453 = vpop.f32.mrf.mxu0
    %v3454 = vadd.f32 %v3379, %v3453
    %v3455 = vpop.f32.mrf.mxu0
    %3456 = vmatprep.mubr.f32.mxu0 0.0
    %3457 = vmatmul.mubr.f32.gmra.mxu0 %v2243
    %v3458 = vpop.f32.mrf.mxu0
    %v3459 = vadd.f32 %v3384, %v3458
    %v3460 = vpop.f32.mrf.mxu0
    %3461 = vdwg.mxu0
    %s3462 = scalar_lea.vmem %s19, 1
    %v3463 = vld [vmem:[%s3462] sm:$0x1]
    %v3465 = vlaneseq
    %v3466 = vshrl.u32 %v3465, 7
    %v3467 = vsub.s32 0, %v3466
    %v3468 = vrot.slane %v3463, %v3467
    %v3470 = vadd.f32 %v3454, %v3468
    %v3471 = vadd.f32 %v3459, %v3468
    %s3472 = scalar_lea.vmem %s18, 32
    %v3473 = vld [vmem:[%s3472] sm:$0xff]
    %v3474 = vld [vmem:[%s3472 + $0x8] sm:$0xff]
    %3475 = vmatprep.subr.mxu0 0.0
    %3476 = vmatpush1.msra.mxu0 0.0
    %3477 = vmatprep.subr.mxu0 0.0
    %3478 = vmatpush1.msra.mxu0 0.0
    %3479 = vmatprep.subr.mxu0 0.0
    %3480 = vmatpush1.msra.mxu0 0.0
    %3481 = vmatprep.subr.mxu0 0.0
    %3482 = vmatpush1.msra.mxu0 0.0
    %3483 = vmatprep.subr.mxu0 0.0
    %3484 = vmatpush1.msra.mxu0 0.0
    %3485 = vmatprep.subr.mxu0 0.0
    %3486 = vmatpush1.msra.mxu0 0.0
    %3487 = vmatprep.subr.mxu0 0.0
    %3488 = vmatpush1.msra.mxu0 0.0
    %3489 = vmatprep.subr.mxu0 0.0
    %3490 = vmatpush1.msra.mxu0 0.0
    %3491 = vmatprep.subr.mxu0 0.0
    %3492 = vmatpush1.msra.mxu0 0.0
    %3493 = vmatprep.subr.mxu0 0.0
    %3494 = vmatpush1.msra.mxu0 0.0
    %3495 = vmatprep.subr.mxu0 0.0
    %3496 = vmatpush1.msra.mxu0 0.0
    %3497 = vmatprep.subr.mxu0 0.0
    %3498 = vmatpush1.msra.mxu0 0.0
    %3499 = vmatprep.subr.mxu0 0.0
    %3500 = vmatpush1.msra.mxu0 0.0
    %3501 = vmatprep.subr.mxu0 0.0
    %3502 = vmatpush1.msra.mxu0 0.0
    %3503 = vmatprep.subr.mxu0 0.0
    %3504 = vmatpush1.msra.mxu0 0.0
    %3505 = vmatprep.subr.mxu0 0.0
    %3506 = vmatpush1.msra.mxu0 %v3474
    %3507 = vmatprep.subr.mxu0 0.0
    %3508 = vmatpush2.msra.mxu0 0.0
    %3509 = vmatprep.subr.mxu0 0.0
    %3510 = vmatpush2.msra.mxu0 0.0
    %3511 = vmatprep.subr.mxu0 0.0
    %3512 = vmatpush2.msra.mxu0 0.0
    %3513 = vmatprep.subr.mxu0 0.0
    %3514 = vmatpush2.msra.mxu0 0.0
    %3515 = vmatprep.subr.mxu0 0.0
    %3516 = vmatpush2.msra.mxu0 0.0
    %3517 = vmatprep.subr.mxu0 0.0
    %3518 = vmatpush2.msra.mxu0 0.0
    %3519 = vmatprep.subr.mxu0 0.0
    %3520 = vmatpush2.msra.mxu0 0.0
    %3521 = vmatprep.subr.mxu0 0.0
    %3522 = vmatpush2.msra.mxu0 0.0
    %3523 = vmatprep.subr.mxu0 0.0
    %3524 = vmatpush2.msra.mxu0 0.0
    %3525 = vmatprep.subr.mxu0 0.0
    %3526 = vmatpush2.msra.mxu0 0.0
    %3527 = vmatprep.subr.mxu0 0.0
    %3528 = vmatpush2.msra.mxu0 0.0
    %3529 = vmatprep.subr.mxu0 0.0
    %3530 = vmatpush2.msra.mxu0 0.0
    %3531 = vmatprep.subr.mxu0 0.0
    %3532 = vmatpush2.msra.mxu0 0.0
    %3533 = vmatprep.subr.mxu0 0.0
    %3534 = vmatpush2.msra.mxu0 0.0
    %3535 = vmatprep.subr.mxu0 0.0
    %3536 = vmatpush2.msra.mxu0 0.0
    %3537 = vmatprep.subr.mxu0 0.0
    %3538 = vmatpush2.msra.mxu0 0.0
    %3539 = vmatprep.mubr.f32.mxu0 0.0
    %3540 = vmatmul.mubr.f32.gmra.mxu0 %v2165
    %v3541 = vpop.f32.mrf.mxu0
    %v3542 = vadd.f32 0.0, %v3541
    %v3543 = vpop.f32.mrf.mxu0
    %3544 = vmatprep.mubr.f32.mxu0 0.0
    %3545 = vmatmul.mubr.f32.gmra.mxu0 %v1929
    %v3546 = vpop.f32.mrf.mxu0
    %v3547 = vadd.f32 0.0, %v3546
    %v3548 = vpop.f32.mrf.mxu0
    %3549 = vdwg.mxu0
    %3550 = vmatprep.subr.mxu0 0.0
    %3551 = vmatpush1.msra.mxu0 0.0
    %3552 = vmatprep.subr.mxu0 0.0
    %3553 = vmatpush1.msra.mxu0 0.0
    %3554 = vmatprep.subr.mxu0 0.0
    %3555 = vmatpush1.msra.mxu0 0.0
    %3556 = vmatprep.subr.mxu0 0.0
    %3557 = vmatpush1.msra.mxu0 0.0
    %3558 = vmatprep.subr.mxu0 0.0
    %3559 = vmatpush1.msra.mxu0 0.0
    %3560 = vmatprep.subr.mxu0 0.0
    %3561 = vmatpush1.msra.mxu0 0.0
    %3562 = vmatprep.subr.mxu0 0.0
    %3563 = vmatpush1.msra.mxu0 0.0
    %3564 = vmatprep.subr.mxu0 0.0
    %3565 = vmatpush1.msra.mxu0 0.0
    %3566 = vmatprep.subr.mxu0 0.0
    %3567 = vmatpush1.msra.mxu0 0.0
    %3568 = vmatprep.subr.mxu0 0.0
    %3569 = vmatpush1.msra.mxu0 0.0
    %3570 = vmatprep.subr.mxu0 0.0
    %3571 = vmatpush1.msra.mxu0 0.0
    %3572 = vmatprep.subr.mxu0 0.0
    %3573 = vmatpush1.msra.mxu0 0.0
    %3574 = vmatprep.subr.mxu0 0.0
    %3575 = vmatpush1.msra.mxu0 0.0
    %3576 = vmatprep.subr.mxu0 0.0
    %3577 = vmatpush1.msra.mxu0 0.0
    %3578 = vmatprep.subr.mxu0 0.0
    %3579 = vmatpush1.msra.mxu0 0.0
    %3580 = vmatprep.subr.mxu0 0.0
    %3581 = vmatpush1.msra.mxu0 %v3473
    %3582 = vmatprep.subr.mxu0 0.0
    %3583 = vmatpush2.msra.mxu0 0.0
    %3584 = vmatprep.subr.mxu0 0.0
    %3585 = vmatpush2.msra.mxu0 0.0
    %3586 = vmatprep.subr.mxu0 0.0
    %3587 = vmatpush2.msra.mxu0 0.0
    %3588 = vmatprep.subr.mxu0 0.0
    %3589 = vmatpush2.msra.mxu0 0.0
    %3590 = vmatprep.subr.mxu0 0.0
    %3591 = vmatpush2.msra.mxu0 0.0
    %3592 = vmatprep.subr.mxu0 0.0
    %3593 = vmatpush2.msra.mxu0 0.0
    %3594 = vmatprep.subr.mxu0 0.0
    %3595 = vmatpush2.msra.mxu0 0.0
    %3596 = vmatprep.subr.mxu0 0.0
    %3597 = vmatpush2.msra.mxu0 0.0
    %3598 = vmatprep.subr.mxu0 0.0
    %3599 = vmatpush2.msra.mxu0 0.0
    %3600 = vmatprep.subr.mxu0 0.0
    %3601 = vmatpush2.msra.mxu0 0.0
    %3602 = vmatprep.subr.mxu0 0.0
    %3603 = vmatpush2.msra.mxu0 0.0
    %3604 = vmatprep.subr.mxu0 0.0
    %3605 = vmatpush2.msra.mxu0 0.0
    %3606 = vmatprep.subr.mxu0 0.0
    %3607 = vmatpush2.msra.mxu0 0.0
    %3608 = vmatprep.subr.mxu0 0.0
    %3609 = vmatpush2.msra.mxu0 0.0
    %3610 = vmatprep.subr.mxu0 0.0
    %3611 = vmatpush2.msra.mxu0 0.0
    %3612 = vmatprep.subr.mxu0 0.0
    %3613 = vmatpush2.msra.mxu0 0.0
    %3614 = vmatprep.mubr.f32.mxu0 0.0
    %3615 = vmatmul.mubr.f32.gmra.mxu0 %v1180
    %v3616 = vpop.f32.mrf.mxu0
    %v3617 = vadd.f32 %v3542, %v3616
    %v3618 = vpop.f32.mrf.mxu0
    %3619 = vmatprep.mubr.f32.mxu0 0.0
    %3620 = vmatmul.mubr.f32.gmra.mxu0 %v2243
    %v3621 = vpop.f32.mrf.mxu0
    %v3622 = vadd.f32 %v3547, %v3621
    %v3623 = vpop.f32.mrf.mxu0
    %3624 = vdwg.mxu0
    %s3625 = scalar_lea.vmem %s19, 2
    %v3626 = vld [vmem:[%s3625] sm:$0x1]
    %v3628 = vlaneseq
    %v3629 = vshrl.u32 %v3628, 7
    %v3630 = vsub.s32 0, %v3629
    %v3631 = vrot.slane %v3626, %v3630
    %v3633 = vadd.f32 %v3617, %v3631
    %v3634 = vadd.f32 %v3622, %v3631
    %v3635 = vld [vmem:[%s20] sm:$0xff]
    %s3636 = scalar_lea.vmem %s20, 8
    %v3637 = vld [vmem:[%s3636] sm:$0xff]
    %s3638 = scalar_lea.vmem %s20, 16
    %v3639 = vld [vmem:[%s3638] sm:$0xff]
    %v3640 = vld [vmem:[%s21] sm:$0x1]
    %s3641 = scalar_lea.vmem %s21, 1
    %v3642 = vld [vmem:[%s3641] sm:$0x1]
    %s3643 = scalar_lea.vmem %s21, 2
    %v3644 = vld [vmem:[%s3643] sm:$0x1]
    %v3646 = vlaneseq
    %v3647 = vshrl.u32 %v3646, 7
    %v3648 = vsub.s32 0, %v3647
    %v3649 = vrot.slane %v3640, %v3648
    %3651 = vmatprep.subr.mxu0 0.0
    %3652 = vmatpush1.msra.mxu0 0.0
    %3653 = vmatprep.subr.mxu0 0.0
    %3654 = vmatpush1.msra.mxu0 0.0
    %3655 = vmatprep.subr.mxu0 0.0
    %3656 = vmatpush1.msra.mxu0 0.0
    %3657 = vmatprep.subr.mxu0 0.0
    %3658 = vmatpush1.msra.mxu0 0.0
    %3659 = vmatprep.subr.mxu0 0.0
    %3660 = vmatpush1.msra.mxu0 0.0
    %3661 = vmatprep.subr.mxu0 0.0
    %3662 = vmatpush1.msra.mxu0 0.0
    %3663 = vmatprep.subr.mxu0 0.0
    %3664 = vmatpush1.msra.mxu0 0.0
    %3665 = vmatprep.subr.mxu0 0.0
    %3666 = vmatpush1.msra.mxu0 0.0
    %3667 = vmatprep.subr.mxu0 0.0
    %3668 = vmatpush1.msra.mxu0 0.0
    %3669 = vmatprep.subr.mxu0 0.0
    %3670 = vmatpush1.msra.mxu0 0.0
    %3671 = vmatprep.subr.mxu0 0.0
    %3672 = vmatpush1.msra.mxu0 0.0
    %3673 = vmatprep.subr.mxu0 0.0
    %3674 = vmatpush1.msra.mxu0 0.0
    %3675 = vmatprep.subr.mxu0 0.0
    %3676 = vmatpush1.msra.mxu0 0.0
    %3677 = vmatprep.subr.mxu0 0.0
    %3678 = vmatpush1.msra.mxu0 0.0
    %3679 = vmatprep.subr.mxu0 0.0
    %3680 = vmatpush1.msra.mxu0 0.0
    %3681 = vmatprep.subr.mxu0 0.0
    %3682 = vmatpush1.msra.mxu0 %v3635
    %3683 = vmatprep.subr.mxu0 0.0
    %3684 = vmatpush2.msra.mxu0 0.0
    %3685 = vmatprep.subr.mxu0 0.0
    %3686 = vmatpush2.msra.mxu0 0.0
    %3687 = vmatprep.subr.mxu0 0.0
    %3688 = vmatpush2.msra.mxu0 0.0
    %3689 = vmatprep.subr.mxu0 0.0
    %3690 = vmatpush2.msra.mxu0 0.0
    %3691 = vmatprep.subr.mxu0 0.0
    %3692 = vmatpush2.msra.mxu0 0.0
    %3693 = vmatprep.subr.mxu0 0.0
    %3694 = vmatpush2.msra.mxu0 0.0
    %3695 = vmatprep.subr.mxu0 0.0
    %3696 = vmatpush2.msra.mxu0 0.0
    %3697 = vmatprep.subr.mxu0 0.0
    %3698 = vmatpush2.msra.mxu0 0.0
    %3699 = vmatprep.subr.mxu0 0.0
    %3700 = vmatpush2.msra.mxu0 0.0
    %3701 = vmatprep.subr.mxu0 0.0
    %3702 = vmatpush2.msra.mxu0 0.0
    %3703 = vmatprep.subr.mxu0 0.0
    %3704 = vmatpush2.msra.mxu0 0.0
    %3705 = vmatprep.subr.mxu0 0.0
    %3706 = vmatpush2.msra.mxu0 0.0
    %3707 = vmatprep.subr.mxu0 0.0
    %3708 = vmatpush2.msra.mxu0 0.0
    %3709 = vmatprep.subr.mxu0 0.0
    %3710 = vmatpush2.msra.mxu0 0.0
    %3711 = vmatprep.subr.mxu0 0.0
    %3712 = vmatpush2.msra.mxu0 0.0
    %3713 = vmatprep.subr.mxu0 0.0
    %3714 = vmatpush2.msra.mxu0 0.0
    %3715 = vmatprep.mubr.f32.mxu0 0.0
    %3716 = vmatmul.mubr.f32.gmra.mxu0 %v934
    %v3717 = vpop.f32.mrf.mxu0
    %v3718 = vadd.f32 %v3649, %v3717
    %v3719 = vpop.f32.mrf.mxu0
    %3720 = vdwg.mxu0
    %v3722 = vlaneseq
    %v3723 = vshrl.u32 %v3722, 7
    %v3724 = vsub.s32 0, %v3723
    %v3725 = vrot.slane %v3642, %v3724
    %3727 = vmatprep.subr.mxu0 0.0
    %3728 = vmatpush1.msra.mxu0 0.0
    %3729 = vmatprep.subr.mxu0 0.0
    %3730 = vmatpush1.msra.mxu0 0.0
    %3731 = vmatprep.subr.mxu0 0.0
    %3732 = vmatpush1.msra.mxu0 0.0
    %3733 = vmatprep.subr.mxu0 0.0
    %3734 = vmatpush1.msra.mxu0 0.0
    %3735 = vmatprep.subr.mxu0 0.0
    %3736 = vmatpush1.msra.mxu0 0.0
    %3737 = vmatprep.subr.mxu0 0.0
    %3738 = vmatpush1.msra.mxu0 0.0
    %3739 = vmatprep.subr.mxu0 0.0
    %3740 = vmatpush1.msra.mxu0 0.0
    %3741 = vmatprep.subr.mxu0 0.0
    %3742 = vmatpush1.msra.mxu0 0.0
    %3743 = vmatprep.subr.mxu0 0.0
    %3744 = vmatpush1.msra.mxu0 0.0
    %3745 = vmatprep.subr.mxu0 0.0
    %3746 = vmatpush1.msra.mxu0 0.0
    %3747 = vmatprep.subr.mxu0 0.0
    %3748 = vmatpush1.msra.mxu0 0.0
    %3749 = vmatprep.subr.mxu0 0.0
    %3750 = vmatpush1.msra.mxu0 0.0
    %3751 = vmatprep.subr.mxu0 0.0
    %3752 = vmatpush1.msra.mxu0 0.0
    %3753 = vmatprep.subr.mxu0 0.0
    %3754 = vmatpush1.msra.mxu0 0.0
    %3755 = vmatprep.subr.mxu0 0.0
    %3756 = vmatpush1.msra.mxu0 0.0
    %3757 = vmatprep.subr.mxu0 0.0
    %3758 = vmatpush1.msra.mxu0 %v3637
    %3759 = vmatprep.subr.mxu0 0.0
    %3760 = vmatpush2.msra.mxu0 0.0
    %3761 = vmatprep.subr.mxu0 0.0
    %3762 = vmatpush2.msra.mxu0 0.0
    %3763 = vmatprep.subr.mxu0 0.0
    %3764 = vmatpush2.msra.mxu0 0.0
    %3765 = vmatprep.subr.mxu0 0.0
    %3766 = vmatpush2.msra.mxu0 0.0
    %3767 = vmatprep.subr.mxu0 0.0
    %3768 = vmatpush2.msra.mxu0 0.0
    %3769 = vmatprep.subr.mxu0 0.0
    %3770 = vmatpush2.msra.mxu0 0.0
    %3771 = vmatprep.subr.mxu0 0.0
    %3772 = vmatpush2.msra.mxu0 0.0
    %3773 = vmatprep.subr.mxu0 0.0
    %3774 = vmatpush2.msra.mxu0 0.0
    %3775 = vmatprep.subr.mxu0 0.0
    %3776 = vmatpush2.msra.mxu0 0.0
    %3777 = vmatprep.subr.mxu0 0.0
    %3778 = vmatpush2.msra.mxu0 0.0
    %3779 = vmatprep.subr.mxu0 0.0
    %3780 = vmatpush2.msra.mxu0 0.0
    %3781 = vmatprep.subr.mxu0 0.0
    %3782 = vmatpush2.msra.mxu0 0.0
    %3783 = vmatprep.subr.mxu0 0.0
    %3784 = vmatpush2.msra.mxu0 0.0
    %3785 = vmatprep.subr.mxu0 0.0
    %3786 = vmatpush2.msra.mxu0 0.0
    %3787 = vmatprep.subr.mxu0 0.0
    %3788 = vmatpush2.msra.mxu0 0.0
    %3789 = vmatprep.subr.mxu0 0.0
    %3790 = vmatpush2.msra.mxu0 0.0
    %3791 = vmatprep.mubr.f32.mxu0 0.0
    %3792 = vmatmul.mubr.f32.gmra.mxu0 %v934
    %v3793 = vpop.f32.mrf.mxu0
    %v3794 = vadd.f32 %v3725, %v3793
    %v3795 = vpop.f32.mrf.mxu0
    %3796 = vdwg.mxu0
    %v3798 = vlaneseq
    %v3799 = vshrl.u32 %v3798, 7
    %v3800 = vsub.s32 0, %v3799
    %v3801 = vrot.slane %v3644, %v3800
    %3803 = vmatprep.subr.mxu0 0.0
    %3804 = vmatpush1.msra.mxu0 0.0
    %3805 = vmatprep.subr.mxu0 0.0
    %3806 = vmatpush1.msra.mxu0 0.0
    %3807 = vmatprep.subr.mxu0 0.0
    %3808 = vmatpush1.msra.mxu0 0.0
    %3809 = vmatprep.subr.mxu0 0.0
    %3810 = vmatpush1.msra.mxu0 0.0
    %3811 = vmatprep.subr.mxu0 0.0
    %3812 = vmatpush1.msra.mxu0 0.0
    %3813 = vmatprep.subr.mxu0 0.0
    %3814 = vmatpush1.msra.mxu0 0.0
    %3815 = vmatprep.subr.mxu0 0.0
    %3816 = vmatpush1.msra.mxu0 0.0
    %3817 = vmatprep.subr.mxu0 0.0
    %3818 = vmatpush1.msra.mxu0 0.0
    %3819 = vmatprep.subr.mxu0 0.0
    %3820 = vmatpush1.msra.mxu0 0.0
    %3821 = vmatprep.subr.mxu0 0.0
    %3822 = vmatpush1.msra.mxu0 0.0
    %3823 = vmatprep.subr.mxu0 0.0
    %3824 = vmatpush1.msra.mxu0 0.0
    %3825 = vmatprep.subr.mxu0 0.0
    %3826 = vmatpush1.msra.mxu0 0.0
    %3827 = vmatprep.subr.mxu0 0.0
    %3828 = vmatpush1.msra.mxu0 0.0
    %3829 = vmatprep.subr.mxu0 0.0
    %3830 = vmatpush1.msra.mxu0 0.0
    %3831 = vmatprep.subr.mxu0 0.0
    %3832 = vmatpush1.msra.mxu0 0.0
    %3833 = vmatprep.subr.mxu0 0.0
    %3834 = vmatpush1.msra.mxu0 %v3639
    %3835 = vmatprep.subr.mxu0 0.0
    %3836 = vmatpush2.msra.mxu0 0.0
    %3837 = vmatprep.subr.mxu0 0.0
    %3838 = vmatpush2.msra.mxu0 0.0
    %3839 = vmatprep.subr.mxu0 0.0
    %3840 = vmatpush2.msra.mxu0 0.0
    %3841 = vmatprep.subr.mxu0 0.0
    %3842 = vmatpush2.msra.mxu0 0.0
    %3843 = vmatprep.subr.mxu0 0.0
    %3844 = vmatpush2.msra.mxu0 0.0
    %3845 = vmatprep.subr.mxu0 0.0
    %3846 = vmatpush2.msra.mxu0 0.0
    %3847 = vmatprep.subr.mxu0 0.0
    %3848 = vmatpush2.msra.mxu0 0.0
    %3849 = vmatprep.subr.mxu0 0.0
    %3850 = vmatpush2.msra.mxu0 0.0
    %3851 = vmatprep.subr.mxu0 0.0
    %3852 = vmatpush2.msra.mxu0 0.0
    %3853 = vmatprep.subr.mxu0 0.0
    %3854 = vmatpush2.msra.mxu0 0.0
    %3855 = vmatprep.subr.mxu0 0.0
    %3856 = vmatpush2.msra.mxu0 0.0
    %3857 = vmatprep.subr.mxu0 0.0
    %3858 = vmatpush2.msra.mxu0 0.0
    %3859 = vmatprep.subr.mxu0 0.0
    %3860 = vmatpush2.msra.mxu0 0.0
    %3861 = vmatprep.subr.mxu0 0.0
    %3862 = vmatpush2.msra.mxu0 0.0
    %3863 = vmatprep.subr.mxu0 0.0
    %3864 = vmatpush2.msra.mxu0 0.0
    %3865 = vmatprep.subr.mxu0 0.0
    %3866 = vmatpush2.msra.mxu0 0.0
    %3867 = vmatprep.mubr.f32.mxu0 0.0
    %3868 = vmatmul.mubr.f32.gmra.mxu0 %v934
    %v3869 = vpop.f32.mrf.mxu0
    %v3870 = vadd.f32 %v3801, %v3869
    %v3871 = vpop.f32.mrf.mxu0
    %3872 = vdwg.mxu0
    %v3873 = vadd.f32 %v3308, %v3718
    %v3874 = vxor.u32 %v3873, 2147483648
    %v3875 = vmul.f32 %v3874, 1.442695
    %v3876 = vpow.pop %v3875
    %v3877 = vadd.f32 %v3876, 1.0
    %v3878 = vrcp.pop %v3877
    %v3879 = vmul.f32 1.0, %v3878
    %v3880 = vadd.f32 %v3471, %v3794
    %v3881 = vxor.u32 %v3880, 2147483648
    %v3882 = vmul.f32 %v3881, 1.442695
    %v3883 = vpow.pop %v3882
    %v3884 = vadd.f32 %v3883, 1.0
    %v3885 = vrcp.pop %v3884
    %v3886 = vmul.f32 1.0, %v3885
    %v3887 = vmul.f32 %v3879, %v3870
    %v3888 = vadd.f32 %v3634, %v3887
    %v3889 = vtanh.pop %v3888
    %v3890 = vsub.f32 1.0, %v3886
    %v3891 = vmul.f32 %v3890, %v3889
    %v3892 = vmul.f32 %v3886, 0.0
    %v3893 = vadd.f32 %v3891, %v3892
    %v3895 = vsel %vm932, %v3893, 0
    %3897 = vmatprep.subr.mxu0 0.0
    %3898 = vmatpush1.msra.mxu0 0.0
    %3899 = vmatprep.subr.mxu0 0.0
    %3900 = vmatpush1.msra.mxu0 0.0
    %3901 = vmatprep.subr.mxu0 0.0
    %3902 = vmatpush1.msra.mxu0 0.0
    %3903 = vmatprep.subr.mxu0 0.0
    %3904 = vmatpush1.msra.mxu0 0.0
    %3905 = vmatprep.subr.mxu0 0.0
    %3906 = vmatpush1.msra.mxu0 0.0
    %3907 = vmatprep.subr.mxu0 0.0
    %3908 = vmatpush1.msra.mxu0 0.0
    %3909 = vmatprep.subr.mxu0 0.0
    %3910 = vmatpush1.msra.mxu0 0.0
    %3911 = vmatprep.subr.mxu0 0.0
    %3912 = vmatpush1.msra.mxu0 0.0
    %3913 = vmatprep.subr.mxu0 0.0
    %3914 = vmatpush1.msra.mxu0 0.0
    %3915 = vmatprep.subr.mxu0 0.0
    %3916 = vmatpush1.msra.mxu0 0.0
    %3917 = vmatprep.subr.mxu0 0.0
    %3918 = vmatpush1.msra.mxu0 0.0
    %3919 = vmatprep.subr.mxu0 0.0
    %3920 = vmatpush1.msra.mxu0 0.0
    %3921 = vmatprep.subr.mxu0 0.0
    %3922 = vmatpush1.msra.mxu0 0.0
    %3923 = vmatprep.subr.mxu0 0.0
    %3924 = vmatpush1.msra.mxu0 0.0
    %3925 = vmatprep.subr.mxu0 0.0
    %3926 = vmatpush1.msra.mxu0 0.0
    %3927 = vmatprep.subr.mxu0 0.0
    %3928 = vmatpush1.msra.mxu0 %v3635
    %3929 = vmatprep.subr.mxu0 0.0
    %3930 = vmatpush2.msra.mxu0 0.0
    %3931 = vmatprep.subr.mxu0 0.0
    %3932 = vmatpush2.msra.mxu0 0.0
    %3933 = vmatprep.subr.mxu0 0.0
    %3934 = vmatpush2.msra.mxu0 0.0
    %3935 = vmatprep.subr.mxu0 0.0
    %3936 = vmatpush2.msra.mxu0 0.0
    %3937 = vmatprep.subr.mxu0 0.0
    %3938 = vmatpush2.msra.mxu0 0.0
    %3939 = vmatprep.subr.mxu0 0.0
    %3940 = vmatpush2.msra.mxu0 0.0
    %3941 = vmatprep.subr.mxu0 0.0
    %3942 = vmatpush2.msra.mxu0 0.0
    %3943 = vmatprep.subr.mxu0 0.0
    %3944 = vmatpush2.msra.mxu0 0.0
    %3945 = vmatprep.subr.mxu0 0.0
    %3946 = vmatpush2.msra.mxu0 0.0
    %3947 = vmatprep.subr.mxu0 0.0
    %3948 = vmatpush2.msra.mxu0 0.0
    %3949 = vmatprep.subr.mxu0 0.0
    %3950 = vmatpush2.msra.mxu0 0.0
    %3951 = vmatprep.subr.mxu0 0.0
    %3952 = vmatpush2.msra.mxu0 0.0
    %3953 = vmatprep.subr.mxu0 0.0
    %3954 = vmatpush2.msra.mxu0 0.0
    %3955 = vmatprep.subr.mxu0 0.0
    %3956 = vmatpush2.msra.mxu0 0.0
    %3957 = vmatprep.subr.mxu0 0.0
    %3958 = vmatpush2.msra.mxu0 0.0
    %3959 = vmatprep.subr.mxu0 0.0
    %3960 = vmatpush2.msra.mxu0 0.0
    %3961 = vmatprep.mubr.f32.mxu0 0.0
    %3962 = vmatmul.mubr.f32.gmra.mxu0 %v3895
    %v3963 = vpop.f32.mrf.mxu0
    %v3964 = vadd.f32 %v3649, %v3963
    %v3965 = vpop.f32.mrf.mxu0
    %3966 = vdwg.mxu0
    %3967 = vmatprep.subr.mxu0 0.0
    %3968 = vmatpush1.msra.mxu0 0.0
    %3969 = vmatprep.subr.mxu0 0.0
    %3970 = vmatpush1.msra.mxu0 0.0
    %3971 = vmatprep.subr.mxu0 0.0
    %3972 = vmatpush1.msra.mxu0 0.0
    %3973 = vmatprep.subr.mxu0 0.0
    %3974 = vmatpush1.msra.mxu0 0.0
    %3975 = vmatprep.subr.mxu0 0.0
    %3976 = vmatpush1.msra.mxu0 0.0
    %3977 = vmatprep.subr.mxu0 0.0
    %3978 = vmatpush1.msra.mxu0 0.0
    %3979 = vmatprep.subr.mxu0 0.0
    %3980 = vmatpush1.msra.mxu0 0.0
    %3981 = vmatprep.subr.mxu0 0.0
    %3982 = vmatpush1.msra.mxu0 0.0
    %3983 = vmatprep.subr.mxu0 0.0
    %3984 = vmatpush1.msra.mxu0 0.0
    %3985 = vmatprep.subr.mxu0 0.0
    %3986 = vmatpush1.msra.mxu0 0.0
    %3987 = vmatprep.subr.mxu0 0.0
    %3988 = vmatpush1.msra.mxu0 0.0
    %3989 = vmatprep.subr.mxu0 0.0
    %3990 = vmatpush1.msra.mxu0 0.0
    %3991 = vmatprep.subr.mxu0 0.0
    %3992 = vmatpush1.msra.mxu0 0.0
    %3993 = vmatprep.subr.mxu0 0.0
    %3994 = vmatpush1.msra.mxu0 0.0
    %3995 = vmatprep.subr.mxu0 0.0
    %3996 = vmatpush1.msra.mxu0 0.0
    %3997 = vmatprep.subr.mxu0 0.0
    %3998 = vmatpush1.msra.mxu0 %v3637
    %3999 = vmatprep.subr.mxu0 0.0
    %4000 = vmatpush2.msra.mxu0 0.0
    %4001 = vmatprep.subr.mxu0 0.0
    %4002 = vmatpush2.msra.mxu0 0.0
    %4003 = vmatprep.subr.mxu0 0.0
    %4004 = vmatpush2.msra.mxu0 0.0
    %4005 = vmatprep.subr.mxu0 0.0
    %4006 = vmatpush2.msra.mxu0 0.0
    %4007 = vmatprep.subr.mxu0 0.0
    %4008 = vmatpush2.msra.mxu0 0.0
    %4009 = vmatprep.subr.mxu0 0.0
    %4010 = vmatpush2.msra.mxu0 0.0
    %4011 = vmatprep.subr.mxu0 0.0
    %4012 = vmatpush2.msra.mxu0 0.0
    %4013 = vmatprep.subr.mxu0 0.0
    %4014 = vmatpush2.msra.mxu0 0.0
    %4015 = vmatprep.subr.mxu0 0.0
    %4016 = vmatpush2.msra.mxu0 0.0
    %4017 = vmatprep.subr.mxu0 0.0
    %4018 = vmatpush2.msra.mxu0 0.0
    %4019 = vmatprep.subr.mxu0 0.0
    %4020 = vmatpush2.msra.mxu0 0.0
    %4021 = vmatprep.subr.mxu0 0.0
    %4022 = vmatpush2.msra.mxu0 0.0
    %4023 = vmatprep.subr.mxu0 0.0
    %4024 = vmatpush2.msra.mxu0 0.0
    %4025 = vmatprep.subr.mxu0 0.0
    %4026 = vmatpush2.msra.mxu0 0.0
    %4027 = vmatprep.subr.mxu0 0.0
    %4028 = vmatpush2.msra.mxu0 0.0
    %4029 = vmatprep.subr.mxu0 0.0
    %4030 = vmatpush2.msra.mxu0 0.0
    %4031 = vmatprep.mubr.f32.mxu0 0.0
    %4032 = vmatmul.mubr.f32.gmra.mxu0 %v3895
    %v4033 = vpop.f32.mrf.mxu0
    %v4034 = vadd.f32 %v3725, %v4033
    %v4035 = vpop.f32.mrf.mxu0
    %4036 = vdwg.mxu0
    %4037 = vmatprep.subr.mxu0 0.0
    %4038 = vmatpush1.msra.mxu0 0.0
    %4039 = vmatprep.subr.mxu0 0.0
    %4040 = vmatpush1.msra.mxu0 0.0
    %4041 = vmatprep.subr.mxu0 0.0
    %4042 = vmatpush1.msra.mxu0 0.0
    %4043 = vmatprep.subr.mxu0 0.0
    %4044 = vmatpush1.msra.mxu0 0.0
    %4045 = vmatprep.subr.mxu0 0.0
    %4046 = vmatpush1.msra.mxu0 0.0
    %4047 = vmatprep.subr.mxu0 0.0
    %4048 = vmatpush1.msra.mxu0 0.0
    %4049 = vmatprep.subr.mxu0 0.0
    %4050 = vmatpush1.msra.mxu0 0.0
    %4051 = vmatprep.subr.mxu0 0.0
    %4052 = vmatpush1.msra.mxu0 0.0
    %4053 = vmatprep.subr.mxu0 0.0
    %4054 = vmatpush1.msra.mxu0 0.0
    %4055 = vmatprep.subr.mxu0 0.0
    %4056 = vmatpush1.msra.mxu0 0.0
    %4057 = vmatprep.subr.mxu0 0.0
    %4058 = vmatpush1.msra.mxu0 0.0
    %4059 = vmatprep.subr.mxu0 0.0
    %4060 = vmatpush1.msra.mxu0 0.0
    %4061 = vmatprep.subr.mxu0 0.0
    %4062 = vmatpush1.msra.mxu0 0.0
    %4063 = vmatprep.subr.mxu0 0.0
    %4064 = vmatpush1.msra.mxu0 0.0
    %4065 = vmatprep.subr.mxu0 0.0
    %4066 = vmatpush1.msra.mxu0 0.0
    %4067 = vmatprep.subr.mxu0 0.0
    %4068 = vmatpush1.msra.mxu0 %v3639
    %4069 = vmatprep.subr.mxu0 0.0
    %4070 = vmatpush2.msra.mxu0 0.0
    %4071 = vmatprep.subr.mxu0 0.0
    %4072 = vmatpush2.msra.mxu0 0.0
    %4073 = vmatprep.subr.mxu0 0.0
    %4074 = vmatpush2.msra.mxu0 0.0
    %4075 = vmatprep.subr.mxu0 0.0
    %4076 = vmatpush2.msra.mxu0 0.0
    %4077 = vmatprep.subr.mxu0 0.0
    %4078 = vmatpush2.msra.mxu0 0.0
    %4079 = vmatprep.subr.mxu0 0.0
    %4080 = vmatpush2.msra.mxu0 0.0
    %4081 = vmatprep.subr.mxu0 0.0
    %4082 = vmatpush2.msra.mxu0 0.0
    %4083 = vmatprep.subr.mxu0 0.0
    %4084 = vmatpush2.msra.mxu0 0.0
    %4085 = vmatprep.subr.mxu0 0.0
    %4086 = vmatpush2.msra.mxu0 0.0
    %4087 = vmatprep.subr.mxu0 0.0
    %4088 = vmatpush2.msra.mxu0 0.0
    %4089 = vmatprep.subr.mxu0 0.0
    %4090 = vmatpush2.msra.mxu0 0.0
    %4091 = vmatprep.subr.mxu0 0.0
    %4092 = vmatpush2.msra.mxu0 0.0
    %4093 = vmatprep.subr.mxu0 0.0
    %4094 = vmatpush2.msra.mxu0 0.0
    %4095 = vmatprep.subr.mxu0 0.0
    %4096 = vmatpush2.msra.mxu0 0.0
    %4097 = vmatprep.subr.mxu0 0.0
    %4098 = vmatpush2.msra.mxu0 0.0
    %4099 = vmatprep.subr.mxu0 0.0
    %4100 = vmatpush2.msra.mxu0 0.0
    %4101 = vmatprep.mubr.f32.mxu0 0.0
    %4102 = vmatmul.mubr.f32.gmra.mxu0 %v3895
    %v4103 = vpop.f32.mrf.mxu0
    %v4104 = vadd.f32 %v3801, %v4103
    %v4105 = vpop.f32.mrf.mxu0
    %4106 = vdwg.mxu0
    %v4107 = vadd.f32 %v3307, %v3964
    %v4108 = vxor.u32 %v4107, 2147483648
    %v4109 = vmul.f32 %v4108, 1.442695
    %v4110 = vpow.pop %v4109
    %v4111 = vadd.f32 %v4110, 1.0
    %v4112 = vrcp.pop %v4111
    %v4113 = vmul.f32 1.0, %v4112
    %v4114 = vadd.f32 %v3470, %v4034
    %v4115 = vxor.u32 %v4114, 2147483648
    %v4116 = vmul.f32 %v4115, 1.442695
    %v4117 = vpow.pop %v4116
    %v4118 = vadd.f32 %v4117, 1.0
    %v4119 = vrcp.pop %v4118
    %v4120 = vmul.f32 1.0, %v4119
    %v4121 = vmul.f32 %v4113, %v4104
    %v4122 = vadd.f32 %v3633, %v4121
    %v4123 = vtanh.pop %v4122
    %v4124 = vsub.f32 1.0, %v4120
    %v4125 = vmul.f32 %v4124, %v4123
    %v4126 = vmul.f32 %v4120, %v3893
    %v4127 = vadd.f32 %v4125, %v4126
    %v4128 = vld [vmem:[%s22] sm:$0xff]
    %v4129 = vld [vmem:[%s22 + $0x8] sm:$0xff]
    %v4130 = vld [vmem:[%s22 + $0x10] sm:$0xff]
    %v4131 = vld [vmem:[%s22 + $0x18] sm:$0xff]
    %v4132 = vld [vmem:[%s23] sm:$0x1]
    %v4133 = vld [vmem:[%s24] sm:$0xff]
    %v4134 = vld [vmem:[%s24 + $0x8] sm:$0xff]
    %v4135 = vld [vmem:[%s25] sm:$0x1]
    %v4136 = vsel %vm932, %v2913, -inf
    %v4137 = vrot.slane %v4136, 4
    %v4138 = vmax.f32 %v4136, %v4137
    %v4139 = vrot.slane %v4138, 2
    %v4140 = vmax.f32 %v4138, %v4139
    %v4141 = vrot.slane %v4140, 1
    %v4142 = vmax.f32 %v4140, %v4141
    %v4143 = vtanh.pop %v4142
    %v4144 = vsel %vm932, %v4127, -inf
    %v4145 = vrot.slane %v4144, 4
    %v4146 = vmax.f32 %v4144, %v4145
    %v4147 = vrot.slane %v4146, 2
    %v4148 = vmax.f32 %v4146, %v4147
    %v4149 = vrot.slane %v4148, 1
    %v4150 = vmax.f32 %v4148, %v4149
    %v4151 = vtanh.pop %v4150
    %v4152 = vtanh.pop %v371
    %v4154 = vsel %vm932, %v4152, 0
    %4156 = vmatprep.subr.mxu0 0.0
    %4157 = vmatpush1.msra.mxu0 0.0
    %4158 = vmatprep.subr.mxu0 0.0
    %4159 = vmatpush1.msra.mxu0 0.0
    %4160 = vmatprep.subr.mxu0 0.0
    %4161 = vmatpush1.msra.mxu0 0.0
    %4162 = vmatprep.subr.mxu0 0.0
    %4163 = vmatpush1.msra.mxu0 0.0
    %4164 = vmatprep.subr.mxu0 0.0
    %4165 = vmatpush1.msra.mxu0 0.0
    %4166 = vmatprep.subr.mxu0 0.0
    %4167 = vmatpush1.msra.mxu0 0.0
    %4168 = vmatprep.subr.mxu0 0.0
    %4169 = vmatpush1.msra.mxu0 0.0
    %4170 = vmatprep.subr.mxu0 0.0
    %4171 = vmatpush1.msra.mxu0 0.0
    %4172 = vmatprep.subr.mxu0 0.0
    %4173 = vmatpush1.msra.mxu0 0.0
    %4174 = vmatprep.subr.mxu0 0.0
    %4175 = vmatpush1.msra.mxu0 0.0
    %4176 = vmatprep.subr.mxu0 0.0
    %4177 = vmatpush1.msra.mxu0 0.0
    %4178 = vmatprep.subr.mxu0 0.0
    %4179 = vmatpush1.msra.mxu0 0.0
    %4180 = vmatprep.subr.mxu0 0.0
    %4181 = vmatpush1.msra.mxu0 0.0
    %4182 = vmatprep.subr.mxu0 0.0
    %4183 = vmatpush1.msra.mxu0 0.0
    %4184 = vmatprep.subr.mxu0 0.0
    %4185 = vmatpush1.msra.mxu0 0.0
    %4186 = vmatprep.subr.mxu0 0.0
    %4187 = vmatpush1.msra.mxu0 %v4128
    %4188 = vmatprep.subr.mxu0 0.0
    %4189 = vmatpush2.msra.mxu0 0.0
    %4190 = vmatprep.subr.mxu0 0.0
    %4191 = vmatpush2.msra.mxu0 0.0
    %4192 = vmatprep.subr.mxu0 0.0
    %4193 = vmatpush2.msra.mxu0 0.0
    %4194 = vmatprep.subr.mxu0 0.0
    %4195 = vmatpush2.msra.mxu0 0.0
    %4196 = vmatprep.subr.mxu0 0.0
    %4197 = vmatpush2.msra.mxu0 0.0
    %4198 = vmatprep.subr.mxu0 0.0
    %4199 = vmatpush2.msra.mxu0 0.0
    %4200 = vmatprep.subr.mxu0 0.0
    %4201 = vmatpush2.msra.mxu0 0.0
    %4202 = vmatprep.subr.mxu0 0.0
    %4203 = vmatpush2.msra.mxu0 0.0
    %4204 = vmatprep.subr.mxu0 0.0
    %4205 = vmatpush2.msra.mxu0 0.0
    %4206 = vmatprep.subr.mxu0 0.0
    %4207 = vmatpush2.msra.mxu0 0.0
    %4208 = vmatprep.subr.mxu0 0.0
    %4209 = vmatpush2.msra.mxu0 0.0
    %4210 = vmatprep.subr.mxu0 0.0
    %4211 = vmatpush2.msra.mxu0 0.0
    %4212 = vmatprep.subr.mxu0 0.0
    %4213 = vmatpush2.msra.mxu0 0.0
    %4214 = vmatprep.subr.mxu0 0.0
    %4215 = vmatpush2.msra.mxu0 0.0
    %4216 = vmatprep.subr.mxu0 0.0
    %4217 = vmatpush2.msra.mxu0 0.0
    %4218 = vmatprep.subr.mxu0 0.0
    %4219 = vmatpush2.msra.mxu0 0.0
    %4220 = vmatprep.mubr.f32.mxu0 0.0
    %4221 = vmatmul.mubr.f32.gmra.mxu0 %v4154
    %v4222 = vpop.f32.mrf.mxu0
    %v4223 = vadd.f32 0.0, %v4222
    %v4224 = vpop.f32.mrf.mxu0
    %4225 = vdwg.mxu0
    %v4226 = vadd.f32 %v4132, %v4223
    %v4227 = vtanh.pop %v642
    %v4229 = vsel %vm932, %v4227, 0
    %4231 = vmatprep.subr.mxu0 0.0
    %4232 = vmatpush1.msra.mxu0 0.0
    %4233 = vmatprep.subr.mxu0 0.0
    %4234 = vmatpush1.msra.mxu0 0.0
    %4235 = vmatprep.subr.mxu0 0.0
    %4236 = vmatpush1.msra.mxu0 0.0
    %4237 = vmatprep.subr.mxu0 0.0
    %4238 = vmatpush1.msra.mxu0 0.0
    %4239 = vmatprep.subr.mxu0 0.0
    %4240 = vmatpush1.msra.mxu0 0.0
    %4241 = vmatprep.subr.mxu0 0.0
    %4242 = vmatpush1.msra.mxu0 0.0
    %4243 = vmatprep.subr.mxu0 0.0
    %4244 = vmatpush1.msra.mxu0 0.0
    %4245 = vmatprep.subr.mxu0 0.0
    %4246 = vmatpush1.msra.mxu0 0.0
    %4247 = vmatprep.subr.mxu0 0.0
    %4248 = vmatpush1.msra.mxu0 0.0
    %4249 = vmatprep.subr.mxu0 0.0
    %4250 = vmatpush1.msra.mxu0 0.0
    %4251 = vmatprep.subr.mxu0 0.0
    %4252 = vmatpush1.msra.mxu0 0.0
    %4253 = vmatprep.subr.mxu0 0.0
    %4254 = vmatpush1.msra.mxu0 0.0
    %4255 = vmatprep.subr.mxu0 0.0
    %4256 = vmatpush1.msra.mxu0 0.0
    %4257 = vmatprep.subr.mxu0 0.0
    %4258 = vmatpush1.msra.mxu0 0.0
    %4259 = vmatprep.subr.mxu0 0.0
    %4260 = vmatpush1.msra.mxu0 0.0
    %4261 = vmatprep.subr.mxu0 0.0
    %4262 = vmatpush1.msra.mxu0 %v4129
    %4263 = vmatprep.subr.mxu0 0.0
    %4264 = vmatpush2.msra.mxu0 0.0
    %4265 = vmatprep.subr.mxu0 0.0
    %4266 = vmatpush2.msra.mxu0 0.0
    %4267 = vmatprep.subr.mxu0 0.0
    %4268 = vmatpush2.msra.mxu0 0.0
    %4269 = vmatprep.subr.mxu0 0.0
    %4270 = vmatpush2.msra.mxu0 0.0
    %4271 = vmatprep.subr.mxu0 0.0
    %4272 = vmatpush2.msra.mxu0 0.0
    %4273 = vmatprep.subr.mxu0 0.0
    %4274 = vmatpush2.msra.mxu0 0.0
    %4275 = vmatprep.subr.mxu0 0.0
    %4276 = vmatpush2.msra.mxu0 0.0
    %4277 = vmatprep.subr.mxu0 0.0
    %4278 = vmatpush2.msra.mxu0 0.0
    %4279 = vmatprep.subr.mxu0 0.0
    %4280 = vmatpush2.msra.mxu0 0.0
    %4281 = vmatprep.subr.mxu0 0.0
    %4282 = vmatpush2.msra.mxu0 0.0
    %4283 = vmatprep.subr.mxu0 0.0
    %4284 = vmatpush2.msra.mxu0 0.0
    %4285 = vmatprep.subr.mxu0 0.0
    %4286 = vmatpush2.msra.mxu0 0.0
    %4287 = vmatprep.subr.mxu0 0.0
    %4288 = vmatpush2.msra.mxu0 0.0
    %4289 = vmatprep.subr.mxu0 0.0
    %4290 = vmatpush2.msra.mxu0 0.0
    %4291 = vmatprep.subr.mxu0 0.0
    %4292 = vmatpush2.msra.mxu0 0.0
    %4293 = vmatprep.subr.mxu0 0.0
    %4294 = vmatpush2.msra.mxu0 0.0
    %4295 = vmatprep.mubr.f32.mxu0 0.0
    %4296 = vmatmul.mubr.f32.gmra.mxu0 %v4229
    %v4297 = vpop.f32.mrf.mxu0
    %v4298 = vadd.f32 0.0, %v4297
    %v4299 = vpop.f32.mrf.mxu0
    %4300 = vdwg.mxu0
    %v4301 = vadd.f32 %v4226, %v4298
    %v4302 = vtanh.pop %v4143
    %v4304 = vsel %vm932, %v4302, 0
    %4306 = vmatprep.subr.mxu0 0.0
    %4307 = vmatpush1.msra.mxu0 0.0
    %4308 = vmatprep.subr.mxu0 0.0
    %4309 = vmatpush1.msra.mxu0 0.0
    %4310 = vmatprep.subr.mxu0 0.0
    %4311 = vmatpush1.msra.mxu0 0.0
    %4312 = vmatprep.subr.mxu0 0.0
    %4313 = vmatpush1.msra.mxu0 0.0
    %4314 = vmatprep.subr.mxu0 0.0
    %4315 = vmatpush1.msra.mxu0 0.0
    %4316 = vmatprep.subr.mxu0 0.0
    %4317 = vmatpush1.msra.mxu0 0.0
    %4318 = vmatprep.subr.mxu0 0.0
    %4319 = vmatpush1.msra.mxu0 0.0
    %4320 = vmatprep.subr.mxu0 0.0
    %4321 = vmatpush1.msra.mxu0 0.0
    %4322 = vmatprep.subr.mxu0 0.0
    %4323 = vmatpush1.msra.mxu0 0.0
    %4324 = vmatprep.subr.mxu0 0.0
    %4325 = vmatpush1.msra.mxu0 0.0
    %4326 = vmatprep.subr.mxu0 0.0
    %4327 = vmatpush1.msra.mxu0 0.0
    %4328 = vmatprep.subr.mxu0 0.0
    %4329 = vmatpush1.msra.mxu0 0.0
    %4330 = vmatprep.subr.mxu0 0.0
    %4331 = vmatpush1.msra.mxu0 0.0
    %4332 = vmatprep.subr.mxu0 0.0
    %4333 = vmatpush1.msra.mxu0 0.0
    %4334 = vmatprep.subr.mxu0 0.0
    %4335 = vmatpush1.msra.mxu0 0.0
    %4336 = vmatprep.subr.mxu0 0.0
    %4337 = vmatpush1.msra.mxu0 %v4130
    %4338 = vmatprep.subr.mxu0 0.0
    %4339 = vmatpush2.msra.mxu0 0.0
    %4340 = vmatprep.subr.mxu0 0.0
    %4341 = vmatpush2.msra.mxu0 0.0
    %4342 = vmatprep.subr.mxu0 0.0
    %4343 = vmatpush2.msra.mxu0 0.0
    %4344 = vmatprep.subr.mxu0 0.0
    %4345 = vmatpush2.msra.mxu0 0.0
    %4346 = vmatprep.subr.mxu0 0.0
    %4347 = vmatpush2.msra.mxu0 0.0
    %4348 = vmatprep.subr.mxu0 0.0
    %4349 = vmatpush2.msra.mxu0 0.0
    %4350 = vmatprep.subr.mxu0 0.0
    %4351 = vmatpush2.msra.mxu0 0.0
    %4352 = vmatprep.subr.mxu0 0.0
    %4353 = vmatpush2.msra.mxu0 0.0
    %4354 = vmatprep.subr.mxu0 0.0
    %4355 = vmatpush2.msra.mxu0 0.0
    %4356 = vmatprep.subr.mxu0 0.0
    %4357 = vmatpush2.msra.mxu0 0.0
    %4358 = vmatprep.subr.mxu0 0.0
    %4359 = vmatpush2.msra.mxu0 0.0
    %4360 = vmatprep.subr.mxu0 0.0
    %4361 = vmatpush2.msra.mxu0 0.0
    %4362 = vmatprep.subr.mxu0 0.0
    %4363 = vmatpush2.msra.mxu0 0.0
    %4364 = vmatprep.subr.mxu0 0.0
    %4365 = vmatpush2.msra.mxu0 0.0
    %4366 = vmatprep.subr.mxu0 0.0
    %4367 = vmatpush2.msra.mxu0 0.0
    %4368 = vmatprep.subr.mxu0 0.0
    %4369 = vmatpush2.msra.mxu0 0.0
    %4370 = vmatprep.mubr.f32.mxu0 0.0
    %4371 = vmatmul.mubr.f32.gmra.mxu0 %v4304
    %v4372 = vpop.f32.mrf.mxu0
    %v4373 = vadd.f32 0.0, %v4372
    %v4374 = vpop.f32.mrf.mxu0
    %4375 = vdwg.mxu0
    %v4376 = vadd.f32 %v4301, %v4373
    %v4377 = vtanh.pop %v4151
    %v4379 = vsel %vm932, %v4377, 0
    %4381 = vmatprep.subr.mxu0 0.0
    %4382 = vmatpush1.msra.mxu0 0.0
    %4383 = vmatprep.subr.mxu0 0.0
    %4384 = vmatpush1.msra.mxu0 0.0
    %4385 = vmatprep.subr.mxu0 0.0
    %4386 = vmatpush1.msra.mxu0 0.0
    %4387 = vmatprep.subr.mxu0 0.0
    %4388 = vmatpush1.msra.mxu0 0.0
    %4389 = vmatprep.subr.mxu0 0.0
    %4390 = vmatpush1.msra.mxu0 0.0
    %4391 = vmatprep.subr.mxu0 0.0
    %4392 = vmatpush1.msra.mxu0 0.0
    %4393 = vmatprep.subr.mxu0 0.0
    %4394 = vmatpush1.msra.mxu0 0.0
    %4395 = vmatprep.subr.mxu0 0.0
    %4396 = vmatpush1.msra.mxu0 0.0
    %4397 = vmatprep.subr.mxu0 0.0
    %4398 = vmatpush1.msra.mxu0 0.0
    %4399 = vmatprep.subr.mxu0 0.0
    %4400 = vmatpush1.msra.mxu0 0.0
    %4401 = vmatprep.subr.mxu0 0.0
    %4402 = vmatpush1.msra.mxu0 0.0
    %4403 = vmatprep.subr.mxu0 0.0
    %4404 = vmatpush1.msra.mxu0 0.0
    %4405 = vmatprep.subr.mxu0 0.0
    %4406 = vmatpush1.msra.mxu0 0.0
    %4407 = vmatprep.subr.mxu0 0.0
    %4408 = vmatpush1.msra.mxu0 0.0
    %4409 = vmatprep.subr.mxu0 0.0
    %4410 = vmatpush1.msra.mxu0 0.0
    %4411 = vmatprep.subr.mxu0 0.0
    %4412 = vmatpush1.msra.mxu0 %v4131
    %4413 = vmatprep.subr.mxu0 0.0
    %4414 = vmatpush2.msra.mxu0 0.0
    %4415 = vmatprep.subr.mxu0 0.0
    %4416 = vmatpush2.msra.mxu0 0.0
    %4417 = vmatprep.subr.mxu0 0.0
    %4418 = vmatpush2.msra.mxu0 0.0
    %4419 = vmatprep.subr.mxu0 0.0
    %4420 = vmatpush2.msra.mxu0 0.0
    %4421 = vmatprep.subr.mxu0 0.0
    %4422 = vmatpush2.msra.mxu0 0.0
    %4423 = vmatprep.subr.mxu0 0.0
    %4424 = vmatpush2.msra.mxu0 0.0
    %4425 = vmatprep.subr.mxu0 0.0
    %4426 = vmatpush2.msra.mxu0 0.0
    %4427 = vmatprep.subr.mxu0 0.0
    %4428 = vmatpush2.msra.mxu0 0.0
    %4429 = vmatprep.subr.mxu0 0.0
    %4430 = vmatpush2.msra.mxu0 0.0
    %4431 = vmatprep.subr.mxu0 0.0
    %4432 = vmatpush2.msra.mxu0 0.0
    %4433 = vmatprep.subr.mxu0 0.0
    %4434 = vmatpush2.msra.mxu0 0.0
    %4435 = vmatprep.subr.mxu0 0.0
    %4436 = vmatpush2.msra.mxu0 0.0
    %4437 = vmatprep.subr.mxu0 0.0
    %4438 = vmatpush2.msra.mxu0 0.0
    %4439 = vmatprep.subr.mxu0 0.0
    %4440 = vmatpush2.msra.mxu0 0.0
    %4441 = vmatprep.subr.mxu0 0.0
    %4442 = vmatpush2.msra.mxu0 0.0
    %4443 = vmatprep.subr.mxu0 0.0
    %4444 = vmatpush2.msra.mxu0 0.0
    %4445 = vmatprep.mubr.f32.mxu0 0.0
    %4446 = vmatmul.mubr.f32.gmra.mxu0 %v4379
    %v4447 = vpop.f32.mrf.mxu0
    %v4448 = vadd.f32 0.0, %v4447
    %v4449 = vpop.f32.mrf.mxu0
    %4450 = vdwg.mxu0
    %v4451 = vadd.f32 %v4376, %v4448
    %v4452 = vtanh.pop %v4451
    %v4454 = vsel %vm191, %v4452, 0
    %4456 = vmatprep.subr.mxu0 0.0
    %4457 = vmatpush1.msra.mxu0 0.0
    %4458 = vmatprep.subr.mxu0 0.0
    %4459 = vmatpush1.msra.mxu0 0.0
    %4460 = vmatprep.subr.mxu0 0.0
    %4461 = vmatpush1.msra.mxu0 0.0
    %4462 = vmatprep.subr.mxu0 0.0
    %4463 = vmatpush1.msra.mxu0 0.0
    %4464 = vmatprep.subr.mxu0 0.0
    %4465 = vmatpush1.msra.mxu0 0.0
    %4466 = vmatprep.subr.mxu0 0.0
    %4467 = vmatpush1.msra.mxu0 0.0
    %4468 = vmatprep.subr.mxu0 0.0
    %4469 = vmatpush1.msra.mxu0 0.0
    %4470 = vmatprep.subr.mxu0 0.0
    %4471 = vmatpush1.msra.mxu0 0.0
    %4472 = vmatprep.subr.mxu0 0.0
    %4473 = vmatpush1.msra.mxu0 0.0
    %4474 = vmatprep.subr.mxu0 0.0
    %4475 = vmatpush1.msra.mxu0 0.0
    %4476 = vmatprep.subr.mxu0 0.0
    %4477 = vmatpush1.msra.mxu0 0.0
    %4478 = vmatprep.subr.mxu0 0.0
    %4479 = vmatpush1.msra.mxu0 0.0
    %4480 = vmatprep.subr.mxu0 0.0
    %4481 = vmatpush1.msra.mxu0 0.0
    %4482 = vmatprep.subr.mxu0 0.0
    %4483 = vmatpush1.msra.mxu0 0.0
    %4484 = vmatprep.subr.mxu0 0.0
    %4485 = vmatpush1.msra.mxu0 %v4134
    %4486 = vmatprep.subr.mxu0 0.0
    %4487 = vmatpush1.msra.mxu0 %v4133
    %4488 = vmatprep.subr.mxu0 0.0
    %4489 = vmatpush2.msra.mxu0 0.0
    %4490 = vmatprep.subr.mxu0 0.0
    %4491 = vmatpush2.msra.mxu0 0.0
    %4492 = vmatprep.subr.mxu0 0.0
    %4493 = vmatpush2.msra.mxu0 0.0
    %4494 = vmatprep.subr.mxu0 0.0
    %4495 = vmatpush2.msra.mxu0 0.0
    %4496 = vmatprep.subr.mxu0 0.0
    %4497 = vmatpush2.msra.mxu0 0.0
    %4498 = vmatprep.subr.mxu0 0.0
    %4499 = vmatpush2.msra.mxu0 0.0
    %4500 = vmatprep.subr.mxu0 0.0
    %4501 = vmatpush2.msra.mxu0 0.0
    %4502 = vmatprep.subr.mxu0 0.0
    %4503 = vmatpush2.msra.mxu0 0.0
    %4504 = vmatprep.subr.mxu0 0.0
    %4505 = vmatpush2.msra.mxu0 0.0
    %4506 = vmatprep.subr.mxu0 0.0
    %4507 = vmatpush2.msra.mxu0 0.0
    %4508 = vmatprep.subr.mxu0 0.0
    %4509 = vmatpush2.msra.mxu0 0.0
    %4510 = vmatprep.subr.mxu0 0.0
    %4511 = vmatpush2.msra.mxu0 0.0
    %4512 = vmatprep.subr.mxu0 0.0
    %4513 = vmatpush2.msra.mxu0 0.0
    %4514 = vmatprep.subr.mxu0 0.0
    %4515 = vmatpush2.msra.mxu0 0.0
    %4516 = vmatprep.subr.mxu0 0.0
    %4517 = vmatpush2.msra.mxu0 0.0
    %4518 = vmatprep.subr.mxu0 0.0
    %4519 = vmatpush2.msra.mxu0 0.0
    %4520 = vmatprep.mubr.f32.mxu0 0.0
    %4521 = vmatmul.mubr.f32.gmra.mxu0 %v4454
    %v4522 = vpop.f32.mrf.mxu0
    %v4523 = vadd.f32 %v4135, %v4522
    %v4524 = vpop.f32.mrf.mxu0
    %4525 = vdwg.mxu0
    %v4526 = vsel %vm932, %v3147, -inf
    %v4527 = vrot.slane %v4526, 4
    %v4528 = vmax.f32 %v4526, %v4527
    %v4529 = vrot.slane %v4528, 2
    %v4530 = vmax.f32 %v4528, %v4529
    %v4531 = vrot.slane %v4530, 1
    %v4532 = vmax.f32 %v4530, %v4531
    %v4533 = vtanh.pop %v4532
    %v4534 = vsel %vm932, %v3893, -inf
    %v4535 = vrot.slane %v4534, 4
    %v4536 = vmax.f32 %v4534, %v4535
    %v4537 = vrot.slane %v4536, 2
    %v4538 = vmax.f32 %v4536, %v4537
    %v4539 = vrot.slane %v4538, 1
    %v4540 = vmax.f32 %v4538, %v4539
    %v4541 = vtanh.pop %v4540
    %v4542 = vtanh.pop %v384
    %v4544 = vsel %vm932, %v4542, 0
    %4546 = vmatprep.subr.mxu0 0.0
    %4547 = vmatpush1.msra.mxu0 0.0
    %4548 = vmatprep.subr.mxu0 0.0
    %4549 = vmatpush1.msra.mxu0 0.0
    %4550 = vmatprep.subr.mxu0 0.0
    %4551 = vmatpush1.msra.mxu0 0.0
    %4552 = vmatprep.subr.mxu0 0.0
    %4553 = vmatpush1.msra.mxu0 0.0
    %4554 = vmatprep.subr.mxu0 0.0
    %4555 = vmatpush1.msra.mxu0 0.0
    %4556 = vmatprep.subr.mxu0 0.0
    %4557 = vmatpush1.msra.mxu0 0.0
    %4558 = vmatprep.subr.mxu0 0.0
    %4559 = vmatpush1.msra.mxu0 0.0
    %4560 = vmatprep.subr.mxu0 0.0
    %4561 = vmatpush1.msra.mxu0 0.0
    %4562 = vmatprep.subr.mxu0 0.0
    %4563 = vmatpush1.msra.mxu0 0.0
    %4564 = vmatprep.subr.mxu0 0.0
    %4565 = vmatpush1.msra.mxu0 0.0
    %4566 = vmatprep.subr.mxu0 0.0
    %4567 = vmatpush1.msra.mxu0 0.0
    %4568 = vmatprep.subr.mxu0 0.0
    %4569 = vmatpush1.msra.mxu0 0.0
    %4570 = vmatprep.subr.mxu0 0.0
    %4571 = vmatpush1.msra.mxu0 0.0
    %4572 = vmatprep.subr.mxu0 0.0
    %4573 = vmatpush1.msra.mxu0 0.0
    %4574 = vmatprep.subr.mxu0 0.0
    %4575 = vmatpush1.msra.mxu0 0.0
    %4576 = vmatprep.subr.mxu0 0.0
    %4577 = vmatpush1.msra.mxu0 %v4128
    %4578 = vmatprep.subr.mxu0 0.0
    %4579 = vmatpush2.msra.mxu0 0.0
    %4580 = vmatprep.subr.mxu0 0.0
    %4581 = vmatpush2.msra.mxu0 0.0
    %4582 = vmatprep.subr.mxu0 0.0
    %4583 = vmatpush2.msra.mxu0 0.0
    %4584 = vmatprep.subr.mxu0 0.0
    %4585 = vmatpush2.msra.mxu0 0.0
    %4586 = vmatprep.subr.mxu0 0.0
    %4587 = vmatpush2.msra.mxu0 0.0
    %4588 = vmatprep.subr.mxu0 0.0
    %4589 = vmatpush2.msra.mxu0 0.0
    %4590 = vmatprep.subr.mxu0 0.0
    %4591 = vmatpush2.msra.mxu0 0.0
    %4592 = vmatprep.subr.mxu0 0.0
    %4593 = vmatpush2.msra.mxu0 0.0
    %4594 = vmatprep.subr.mxu0 0.0
    %4595 = vmatpush2.msra.mxu0 0.0
    %4596 = vmatprep.subr.mxu0 0.0
    %4597 = vmatpush2.msra.mxu0 0.0
    %4598 = vmatprep.subr.mxu0 0.0
    %4599 = vmatpush2.msra.mxu0 0.0
    %4600 = vmatprep.subr.mxu0 0.0
    %4601 = vmatpush2.msra.mxu0 0.0
    %4602 = vmatprep.subr.mxu0 0.0
    %4603 = vmatpush2.msra.mxu0 0.0
    %4604 = vmatprep.subr.mxu0 0.0
    %4605 = vmatpush2.msra.mxu0 0.0
    %4606 = vmatprep.subr.mxu0 0.0
    %4607 = vmatpush2.msra.mxu0 0.0
    %4608 = vmatprep.subr.mxu0 0.0
    %4609 = vmatpush2.msra.mxu0 0.0
    %4610 = vmatprep.mubr.f32.mxu0 0.0
    %4611 = vmatmul.mubr.f32.gmra.mxu0 %v4544
    %v4612 = vpop.f32.mrf.mxu0
    %v4613 = vadd.f32 0.0, %v4612
    %v4614 = vpop.f32.mrf.mxu0
    %4615 = vdwg.mxu0
    %v4616 = vadd.f32 %v4132, %v4613
    %v4617 = vtanh.pop %v659
    %v4619 = vsel %vm932, %v4617, 0
    %4621 = vmatprep.subr.mxu0 0.0
    %4622 = vmatpush1.msra.mxu0 0.0
    %4623 = vmatprep.subr.mxu0 0.0
    %4624 = vmatpush1.msra.mxu0 0.0
    %4625 = vmatprep.subr.mxu0 0.0
    %4626 = vmatpush1.msra.mxu0 0.0
    %4627 = vmatprep.subr.mxu0 0.0
    %4628 = vmatpush1.msra.mxu0 0.0
    %4629 = vmatprep.subr.mxu0 0.0
    %4630 = vmatpush1.msra.mxu0 0.0
    %4631 = vmatprep.subr.mxu0 0.0
    %4632 = vmatpush1.msra.mxu0 0.0
    %4633 = vmatprep.subr.mxu0 0.0
    %4634 = vmatpush1.msra.mxu0 0.0
    %4635 = vmatprep.subr.mxu0 0.0
    %4636 = vmatpush1.msra.mxu0 0.0
    %4637 = vmatprep.subr.mxu0 0.0
    %4638 = vmatpush1.msra.mxu0 0.0
    %4639 = vmatprep.subr.mxu0 0.0
    %4640 = vmatpush1.msra.mxu0 0.0
    %4641 = vmatprep.subr.mxu0 0.0
    %4642 = vmatpush1.msra.mxu0 0.0
    %4643 = vmatprep.subr.mxu0 0.0
    %4644 = vmatpush1.msra.mxu0 0.0
    %4645 = vmatprep.subr.mxu0 0.0
    %4646 = vmatpush1.msra.mxu0 0.0
    %4647 = vmatprep.subr.mxu0 0.0
    %4648 = vmatpush1.msra.mxu0 0.0
    %4649 = vmatprep.subr.mxu0 0.0
    %4650 = vmatpush1.msra.mxu0 0.0
    %4651 = vmatprep.subr.mxu0 0.0
    %4652 = vmatpush1.msra.mxu0 %v4129
    %4653 = vmatprep.subr.mxu0 0.0
    %4654 = vmatpush2.msra.mxu0 0.0
    %4655 = vmatprep.subr.mxu0 0.0
    %4656 = vmatpush2.msra.mxu0 0.0
    %4657 = vmatprep.subr.mxu0 0.0
    %4658 = vmatpush2.msra.mxu0 0.0
    %4659 = vmatprep.subr.mxu0 0.0
    %4660 = vmatpush2.msra.mxu0 0.0
    %4661 = vmatprep.subr.mxu0 0.0
    %4662 = vmatpush2.msra.mxu0 0.0
    %4663 = vmatprep.subr.mxu0 0.0
    %4664 = vmatpush2.msra.mxu0 0.0
    %4665 = vmatprep.subr.mxu0 0.0
    %4666 = vmatpush2.msra.mxu0 0.0
    %4667 = vmatprep.subr.mxu0 0.0
    %4668 = vmatpush2.msra.mxu0 0.0
    %4669 = vmatprep.subr.mxu0 0.0
    %4670 = vmatpush2.msra.mxu0 0.0
    %4671 = vmatprep.subr.mxu0 0.0
    %4672 = vmatpush2.msra.mxu0 0.0
    %4673 = vmatprep.subr.mxu0 0.0
    %4674 = vmatpush2.msra.mxu0 0.0
    %4675 = vmatprep.subr.mxu0 0.0
    %4676 = vmatpush2.msra.mxu0 0.0
    %4677 = vmatprep.subr.mxu0 0.0
    %4678 = vmatpush2.msra.mxu0 0.0
    %4679 = vmatprep.subr.mxu0 0.0
    %4680 = vmatpush2.msra.mxu0 0.0
    %4681 = vmatprep.subr.mxu0 0.0
    %4682 = vmatpush2.msra.mxu0 0.0
    %4683 = vmatprep.subr.mxu0 0.0
    %4684 = vmatpush2.msra.mxu0 0.0
    %4685 = vmatprep.mubr.f32.mxu0 0.0
    %4686 = vmatmul.mubr.f32.gmra.mxu0 %v4619
    %v4687 = vpop.f32.mrf.mxu0
    %v4688 = vadd.f32 0.0, %v4687
    %v4689 = vpop.f32.mrf.mxu0
    %4690 = vdwg.mxu0
    %v4691 = vadd.f32 %v4616, %v4688
    %v4692 = vtanh.pop %v4533
    %v4694 = vsel %vm932, %v4692, 0
    %4696 = vmatprep.subr.mxu0 0.0
    %4697 = vmatpush1.msra.mxu0 0.0
    %4698 = vmatprep.subr.mxu0 0.0
    %4699 = vmatpush1.msra.mxu0 0.0
    %4700 = vmatprep.subr.mxu0 0.0
    %4701 = vmatpush1.msra.mxu0 0.0
    %4702 = vmatprep.subr.mxu0 0.0
    %4703 = vmatpush1.msra.mxu0 0.0
    %4704 = vmatprep.subr.mxu0 0.0
    %4705 = vmatpush1.msra.mxu0 0.0
    %4706 = vmatprep.subr.mxu0 0.0
    %4707 = vmatpush1.msra.mxu0 0.0
    %4708 = vmatprep.subr.mxu0 0.0
    %4709 = vmatpush1.msra.mxu0 0.0
    %4710 = vmatprep.subr.mxu0 0.0
    %4711 = vmatpush1.msra.mxu0 0.0
    %4712 = vmatprep.subr.mxu0 0.0
    %4713 = vmatpush1.msra.mxu0 0.0
    %4714 = vmatprep.subr.mxu0 0.0
    %4715 = vmatpush1.msra.mxu0 0.0
    %4716 = vmatprep.subr.mxu0 0.0
    %4717 = vmatpush1.msra.mxu0 0.0
    %4718 = vmatprep.subr.mxu0 0.0
    %4719 = vmatpush1.msra.mxu0 0.0
    %4720 = vmatprep.subr.mxu0 0.0
    %4721 = vmatpush1.msra.mxu0 0.0
    %4722 = vmatprep.subr.mxu0 0.0
    %4723 = vmatpush1.msra.mxu0 0.0
    %4724 = vmatprep.subr.mxu0 0.0
    %4725 = vmatpush1.msra.mxu0 0.0
    %4726 = vmatprep.subr.mxu0 0.0
    %4727 = vmatpush1.msra.mxu0 %v4130
    %4728 = vmatprep.subr.mxu0 0.0
    %4729 = vmatpush2.msra.mxu0 0.0
    %4730 = vmatprep.subr.mxu0 0.0
    %4731 = vmatpush2.msra.mxu0 0.0
    %4732 = vmatprep.subr.mxu0 0.0
    %4733 = vmatpush2.msra.mxu0 0.0
    %4734 = vmatprep.subr.mxu0 0.0
    %4735 = vmatpush2.msra.mxu0 0.0
    %4736 = vmatprep.subr.mxu0 0.0
    %4737 = vmatpush2.msra.mxu0 0.0
    %4738 = vmatprep.subr.mxu0 0.0
    %4739 = vmatpush2.msra.mxu0 0.0
    %4740 = vmatprep.subr.mxu0 0.0
    %4741 = vmatpush2.msra.mxu0 0.0
    %4742 = vmatprep.subr.mxu0 0.0
    %4743 = vmatpush2.msra.mxu0 0.0
    %4744 = vmatprep.subr.mxu0 0.0
    %4745 = vmatpush2.msra.mxu0 0.0
    %4746 = vmatprep.subr.mxu0 0.0
    %4747 = vmatpush2.msra.mxu0 0.0
    %4748 = vmatprep.subr.mxu0 0.0
    %4749 = vmatpush2.msra.mxu0 0.0
    %4750 = vmatprep.subr.mxu0 0.0
    %4751 = vmatpush2.msra.mxu0 0.0
    %4752 = vmatprep.subr.mxu0 0.0
    %4753 = vmatpush2.msra.mxu0 0.0
    %4754 = vmatprep.subr.mxu0 0.0
    %4755 = vmatpush2.msra.mxu0 0.0
    %4756 = vmatprep.subr.mxu0 0.0
    %4757 = vmatpush2.msra.mxu0 0.0
    %4758 = vmatprep.subr.mxu0 0.0
    %4759 = vmatpush2.msra.mxu0 0.0
    %4760 = vmatprep.mubr.f32.mxu0 0.0
    %4761 = vmatmul.mubr.f32.gmra.mxu0 %v4694
    %v4762 = vpop.f32.mrf.mxu0
    %v4763 = vadd.f32 0.0, %v4762
    %v4764 = vpop.f32.mrf.mxu0
    %4765 = vdwg.mxu0
    %v4766 = vadd.f32 %v4691, %v4763
    %v4767 = vtanh.pop %v4541
    %v4769 = vsel %vm932, %v4767, 0
    %4771 = vmatprep.subr.mxu0 0.0
    %4772 = vmatpush1.msra.mxu0 0.0
    %4773 = vmatprep.subr.mxu0 0.0
    %4774 = vmatpush1.msra.mxu0 0.0
    %4775 = vmatprep.subr.mxu0 0.0
    %4776 = vmatpush1.msra.mxu0 0.0
    %4777 = vmatprep.subr.mxu0 0.0
    %4778 = vmatpush1.msra.mxu0 0.0
    %4779 = vmatprep.subr.mxu0 0.0
    %4780 = vmatpush1.msra.mxu0 0.0
    %4781 = vmatprep.subr.mxu0 0.0
    %4782 = vmatpush1.msra.mxu0 0.0
    %4783 = vmatprep.subr.mxu0 0.0
    %4784 = vmatpush1.msra.mxu0 0.0
    %4785 = vmatprep.subr.mxu0 0.0
    %4786 = vmatpush1.msra.mxu0 0.0
    %4787 = vmatprep.subr.mxu0 0.0
    %4788 = vmatpush1.msra.mxu0 0.0
    %4789 = vmatprep.subr.mxu0 0.0
    %4790 = vmatpush1.msra.mxu0 0.0
    %4791 = vmatprep.subr.mxu0 0.0
    %4792 = vmatpush1.msra.mxu0 0.0
    %4793 = vmatprep.subr.mxu0 0.0
    %4794 = vmatpush1.msra.mxu0 0.0
    %4795 = vmatprep.subr.mxu0 0.0
    %4796 = vmatpush1.msra.mxu0 0.0
    %4797 = vmatprep.subr.mxu0 0.0
    %4798 = vmatpush1.msra.mxu0 0.0
    %4799 = vmatprep.subr.mxu0 0.0
    %4800 = vmatpush1.msra.mxu0 0.0
    %4801 = vmatprep.subr.mxu0 0.0
    %4802 = vmatpush1.msra.mxu0 %v4131
    %4803 = vmatprep.subr.mxu0 0.0
    %4804 = vmatpush2.msra.mxu0 0.0
    %4805 = vmatprep.subr.mxu0 0.0
    %4806 = vmatpush2.msra.mxu0 0.0
    %4807 = vmatprep.subr.mxu0 0.0
    %4808 = vmatpush2.msra.mxu0 0.0
    %4809 = vmatprep.subr.mxu0 0.0
    %4810 = vmatpush2.msra.mxu0 0.0
    %4811 = vmatprep.subr.mxu0 0.0
    %4812 = vmatpush2.msra.mxu0 0.0
    %4813 = vmatprep.subr.mxu0 0.0
    %4814 = vmatpush2.msra.mxu0 0.0
    %4815 = vmatprep.subr.mxu0 0.0
    %4816 = vmatpush2.msra.mxu0 0.0
    %4817 = vmatprep.subr.mxu0 0.0
    %4818 = vmatpush2.msra.mxu0 0.0
    %4819 = vmatprep.subr.mxu0 0.0
    %4820 = vmatpush2.msra.mxu0 0.0
    %4821 = vmatprep.subr.mxu0 0.0
    %4822 = vmatpush2.msra.mxu0 0.0
    %4823 = vmatprep.subr.mxu0 0.0
    %4824 = vmatpush2.msra.mxu0 0.0
    %4825 = vmatprep.subr.mxu0 0.0
    %4826 = vmatpush2.msra.mxu0 0.0
    %4827 = vmatprep.subr.mxu0 0.0
    %4828 = vmatpush2.msra.mxu0 0.0
    %4829 = vmatprep.subr.mxu0 0.0
    %4830 = vmatpush2.msra.mxu0 0.0
    %4831 = vmatprep.subr.mxu0 0.0
    %4832 = vmatpush2.msra.mxu0 0.0
    %4833 = vmatprep.subr.mxu0 0.0
    %4834 = vmatpush2.msra.mxu0 0.0
    %4835 = vmatprep.mubr.f32.mxu0 0.0
    %4836 = vmatmul.mubr.f32.gmra.mxu0 %v4769
    %v4837 = vpop.f32.mrf.mxu0
    %v4838 = vadd.f32 0.0, %v4837
    %v4839 = vpop.f32.mrf.mxu0
    %4840 = vdwg.mxu0
    %v4841 = vadd.f32 %v4766, %v4838
    %v4842 = vtanh.pop %v4841
    %v4844 = vsel %vm191, %v4842, 0
    %4846 = vmatprep.subr.mxu0 0.0
    %4847 = vmatpush1.msra.mxu0 0.0
    %4848 = vmatprep.subr.mxu0 0.0
    %4849 = vmatpush1.msra.mxu0 0.0
    %4850 = vmatprep.subr.mxu0 0.0
    %4851 = vmatpush1.msra.mxu0 0.0
    %4852 = vmatprep.subr.mxu0 0.0
    %4853 = vmatpush1.msra.mxu0 0.0
    %4854 = vmatprep.subr.mxu0 0.0
    %4855 = vmatpush1.msra.mxu0 0.0
    %4856 = vmatprep.subr.mxu0 0.0
    %4857 = vmatpush1.msra.mxu0 0.0
    %4858 = vmatprep.subr.mxu0 0.0
    %4859 = vmatpush1.msra.mxu0 0.0
    %4860 = vmatprep.subr.mxu0 0.0
    %4861 = vmatpush1.msra.mxu0 0.0
    %4862 = vmatprep.subr.mxu0 0.0
    %4863 = vmatpush1.msra.mxu0 0.0
    %4864 = vmatprep.subr.mxu0 0.0
    %4865 = vmatpush1.msra.mxu0 0.0
    %4866 = vmatprep.subr.mxu0 0.0
    %4867 = vmatpush1.msra.mxu0 0.0
    %4868 = vmatprep.subr.mxu0 0.0
    %4869 = vmatpush1.msra.mxu0 0.0
    %4870 = vmatprep.subr.mxu0 0.0
    %4871 = vmatpush1.msra.mxu0 0.0
    %4872 = vmatprep.subr.mxu0 0.0
    %4873 = vmatpush1.msra.mxu0 0.0
    %4874 = vmatprep.subr.mxu0 0.0
    %4875 = vmatpush1.msra.mxu0 %v4134
    %4876 = vmatprep.subr.mxu0 0.0
    %4877 = vmatpush1.msra.mxu0 %v4133
    %4878 = vmatprep.subr.mxu0 0.0
    %4879 = vmatpush2.msra.mxu0 0.0
    %4880 = vmatprep.subr.mxu0 0.0
    %4881 = vmatpush2.msra.mxu0 0.0
    %4882 = vmatprep.subr.mxu0 0.0
    %4883 = vmatpush2.msra.mxu0 0.0
    %4884 = vmatprep.subr.mxu0 0.0
    %4885 = vmatpush2.msra.mxu0 0.0
    %4886 = vmatprep.subr.mxu0 0.0
    %4887 = vmatpush2.msra.mxu0 0.0
    %4888 = vmatprep.subr.mxu0 0.0
    %4889 = vmatpush2.msra.mxu0 0.0
    %4890 = vmatprep.subr.mxu0 0.0
    %4891 = vmatpush2.msra.mxu0 0.0
    %4892 = vmatprep.subr.mxu0 0.0
    %4893 = vmatpush2.msra.mxu0 0.0
    %4894 = vmatprep.subr.mxu0 0.0
    %4895 = vmatpush2.msra.mxu0 0.0
    %4896 = vmatprep.subr.mxu0 0.0
    %4897 = vmatpush2.msra.mxu0 0.0
    %4898 = vmatprep.subr.mxu0 0.0
    %4899 = vmatpush2.msra.mxu0 0.0
    %4900 = vmatprep.subr.mxu0 0.0
    %4901 = vmatpush2.msra.mxu0 0.0
    %4902 = vmatprep.subr.mxu0 0.0
    %4903 = vmatpush2.msra.mxu0 0.0
    %4904 = vmatprep.subr.mxu0 0.0
    %4905 = vmatpush2.msra.mxu0 0.0
    %4906 = vmatprep.subr.mxu0 0.0
    %4907 = vmatpush2.msra.mxu0 0.0
    %4908 = vmatprep.subr.mxu0 0.0
    %4909 = vmatpush2.msra.mxu0 0.0
    %4910 = vmatprep.mubr.f32.mxu0 0.0
    %4911 = vmatmul.mubr.f32.gmra.mxu0 %v4844
    %v4912 = vpop.f32.mrf.mxu0
    %v4913 = vadd.f32 %v4135, %v4912
    %v4914 = vpop.f32.mrf.mxu0
    %4915 = vdwg.mxu0
    %v4917 = vrot.slane %v4913, 7
    %vm4919 = vcmask 1040384
    %v4920 = vsel %vm4919, %v4523, %v4917
    %vm4921 = vcmask 17408
    %4922 = vst.msk [vmem:[#allocation2] sm:$0x3] %vm4921, %v4920
    // Predicated region
    $region106: #{forward.1} parent=1 // pred_check
      _
    $region107: #{forward.1} parent=1 // pred_check_branch
      %4924 = sbr.rel (0) target = $region109
    $region108: #{forward.1} parent=1 // pred_region
      %s4926 = ssub.s32 32, 32
      %4927 = vsyncadd [#allocation3], %s4926
      %s4929 = sshll.u32 [#allocation2], 4
      %s4930 = int_to_ptr.vmem [resolvable:$true] %s4929
      %4932 = dma.vmem_to_hbm [thread:$0]  %s4930, 32, %s26, [#allocation3]
    $region109: #{forward.1} parent=1 // pred_fallthru
      _
    // Predicated region
    $region110: #{forward.1} parent=1 // pred_check
      _
    $region111: #{forward.1} parent=1 // pred_check_branch
      %4934 = sbr.rel (0) target = $region113
    $region112: #{forward.1} parent=1 // pred_region
      %4935 = dma.done [#allocation3], 32
    $region113: #{forward.1} parent=1 // pred_fallthru
      _
    %4936 = vsyncpa [#allocation3], 1

</llo_original>
